<compile_context>
chip_gen: v6e
topology: v6e:2x2x1
jax: 0.10.0
libtpu: 0.0.40
codegen_flags: <defaults>
</compile_context>

<pallas_src>
import jax
import jax.numpy as jnp
from jax.experimental import pallas as pl
from jax.experimental.pallas import tpu as pltpu

IN_FEATURES = 80                 # fc1 = nn.Linear(80, 1)
PACK = 8                         # original rows packed per lane-dense row
LANE_F = PACK * IN_FEATURES      # 640 = 5 * 128  -> lane-dense last dim
MAX_TILE_ROWS = 1024             # packed rows / grid step == 8192 original rows


def _attention_net_kernel(b_ref, wbd_ref, sel_ref, x1_ref, x2_ref, o_ref):
    """Fused attention head on a lane-dense (tile_rows, 640) block.

    b_ref   : (1, 1)        f32 SMEM   fc1 bias (scalar)
    wbd_ref : (640, 8)      f32 VMEM   block-diagonal fc1 weight
    sel_ref : (8, 640)      f32 VMEM   0/1 selector (broadcast coeffs to lanes)
    x1_ref  : (T, 640)      f32 VMEM   8 original rows packed per row
    x2_ref  : (T, 640)      f32 VMEM
    o_ref   : (T, 640)      f32 VMEM
    """
    x1 = x1_ref[...]
    x2 = x2_ref[...]
    b = b_ref[0, 0]
    wbd = wbd_ref[...]

    # Per-sub-row dot products on the MXU (K = 640, mostly zeros; MXU is idle
    # in this HBM-bound kernel so the wasted flops are free).  HIGHEST keeps
    # f32-level accuracy.
    hi = jax.lax.Precision.HIGHEST
    d1 = jnp.dot(x1, wbd, preferred_element_type=jnp.float32, precision=hi)  # (T, 8)
    d2 = jnp.dot(x2, wbd, preferred_element_type=jnp.float32, precision=hi)  # (T, 8)

    a1 = jax.nn.sigmoid(d1 + b)                      # (T, 8)
    a2 = jax.nn.sigmoid(d2 + b)                      # (T, 8)

    # c1 = a1 / (a1 + a2); denominator is a sum of two sigmoids, always > 0.
    c1 = a1 * pl.reciprocal(a1 + a2, approx=False)   # (T, 8)

    # Broadcast c1[:, j] across its 80-lane segment with a 0/1 selector matmul
    # (keeps everything lane-dense; no reshapes / XLU traffic).
    c1b = jnp.dot(c1, sel_ref[...], preferred_element_type=jnp.float32,
                  precision=hi)                      # (T, 640)

    # (a1*x1 + a2*x2)/(a1+a2)  ==  x2 + c1*(x1 - x2)   (exact algebra)
    o_ref[...] = x2 + c1b * (x1 - x2)


def attention_net_forward(x1, x2, weight, bias, *, max_tile_rows=MAX_TILE_ROWS):
    """x1, x2: (B, C, H, W) with C*H*W == 80; weight: (1, 80); bias: (1,).

    Returns (B, C, H, W) float32, matching AttentionNet.forward.
    """
    B, C, H, W = x1.shape
    F = C * H * W
    assert F == IN_FEATURES, f"C*H*W must be {IN_FEATURES}, got {F}"
    assert x2.shape == x1.shape

    x1f = x1.reshape(B, F).astype(jnp.float32)
    x2f = x2.reshape(B, F).astype(jnp.float32)

    # --- lane-dense packing: (B, 80) -> (B/8, 640). Pad B to a multiple of 8
    # (a no-op copy-free path for the common case B % 8 == 0).
    Bp = pl.cdiv(B, PACK) * PACK
    if Bp != B:
        x1f = jnp.pad(x1f, ((0, Bp - B), (0, 0)))
        x2f = jnp.pad(x2f, ((0, Bp - B), (0, 0)))
    R = Bp // PACK
    x1p = x1f.reshape(R, LANE_F)
    x2p = x2f.reshape(R, LANE_F)

    # --- pick the batch tile (in packed rows).  Clamp to a multiple of 8
    # (sublane rule) and pad the row count so every grid block is FULL — this
    # is what fixes the previous partial-tail-block mismatch.
    max_tile_rows = max(PACK, (int(max_tile_rows) // PACK) * PACK)
    if R <= max_tile_rows:
        tile_rows = R                     # single block == full array: legal
    else:
        tile_rows = max_tile_rows
        Rp = pl.cdiv(R, tile_rows) * tile_rows
        if Rp != R:
            x1p = jnp.pad(x1p, ((0, Rp - R), (0, 0)))
            x2p = jnp.pad(x2p, ((0, Rp - R), (0, 0)))
            R = Rp
    grid = (R // tile_rows,)

    # --- small constant operands (built once, VMEM-resident across steps).
    w = weight.reshape(IN_FEATURES).astype(jnp.float32)          # (80,)
    b = bias.reshape(1, 1).astype(jnp.float32)                   # (1, 1) SMEM
    eye = jnp.eye(PACK, dtype=jnp.float32)                       # (8, 8)
    # W_bd[j'*80 + f, j] = w[f] * (j' == j)        -> (640, 8)
    w_bd = (eye[:, None, :] * w[None, :, None]).reshape(LANE_F, PACK)
    # S[j, j'*80 + f] = (j == j')                  -> (8, 640)
    sel = jnp.broadcast_to(eye[:, :, None],
                           (PACK, PACK, IN_FEATURES)).reshape(PACK, LANE_F)

    out = pl.pallas_call(
        _attention_net_kernel,
        out_shape=jax.ShapeDtypeStruct((R, LANE_F), jnp.float32),
        grid=grid,
        in_specs=[
            # Bias: scalar in SMEM (no padded VMEM tile).
            pl.BlockSpec(memory_space=pltpu.MemorySpace.SMEM),
            # Constant weights: same block every step -> fetched once.
            pl.BlockSpec((LANE_F, PACK), lambda i: (0, 0)),
            pl.BlockSpec((PACK, LANE_F), lambda i: (0, 0)),
            # Activations: lane-dense, tiled over packed batch rows,
            # auto double-buffered by the Pallas pipeline.
            pl.BlockSpec((tile_rows, LANE_F), lambda i: (i, 0)),
            pl.BlockSpec((tile_rows, LANE_F), lambda i: (i, 0)),
        ],
        out_specs=pl.BlockSpec((tile_rows, LANE_F), lambda i: (i, 0)),
        compiler_params=pltpu.CompilerParams(
            dimension_semantics=("parallel",),
            # ~20-22 MiB of double-buffered blocks + temporaries at
            # tile_rows=1024; raise above v5e's 16 MiB default, stay well
            # under v7x's 64 MiB physical VMEM.
            vmem_limit_bytes=40 * 1024 * 1024,
        ),
    )(b, w_bd, sel, x1p, x2p)

    # Unpack lanes back to rows and drop batch padding.
    out = out.reshape(-1, IN_FEATURES)[:B]
    return out.reshape(B, C, H, W)


def _reference(x1, x2, weight, bias):
    """Pure-JAX reference mirroring the PyTorch forward (f32-accurate dot)."""
    B = x1.shape[0]

    def att(x):
        xf = x.reshape(B, -1)
        logits = jnp.dot(xf, weight.T, precision=jax.lax.Precision.HIGHEST) + bias
        return jax.nn.sigmoid(logits)[:, :, None, None]      # (B, 1, 1, 1)

    a1 = att(x1)
    a2 = att(x2)
    return (a1 * x1 + a2 * x2) / (a1 + a2)


if __name__ == "__main__":
    key = jax.random.PRNGKey(0)
    k_x1, k_x2, k_w, k_b, k_a, k_c = jax.random.split(key, 6)

    # (B, C, H, W) with C*H*W = 80 to match nn.Linear(80, 1)
    B, C, H, W = 2, 5, 4, 4
    x1 = jax.random.normal(k_x1, (B, C, H, W), dtype=jnp.float32)
    x2 = jax.random.normal(k_x2, (B, C, H, W), dtype=jnp.float32)

    # Deterministic Linear(80, 1) params (PyTorch-style uniform init bounds).
    bound = 1.0 / (IN_FEATURES ** 0.5)
    weight = jax.random.uniform(k_w, (1, IN_FEATURES), jnp.float32,
                                minval=-bound, maxval=bound)
    bias = jax.random.uniform(k_b, (1,), jnp.float32,
                              minval=-bound, maxval=bound)

    out = jax.block_until_ready(attention_net_forward(x1, x2, weight, bias))
    ref = _reference(x1, x2, weight, bias)
    assert out.shape == (B, C, H, W)
    assert jnp.allclose(out, ref, atol=1e-4, rtol=1e-4), "mismatch vs reference"

    # Second check: multi-block grid path + row padding (B=72 -> 9 packed rows
    # -> tile of 8 packed rows -> padded to 16 -> 2 full blocks).
    B2 = 72
    xa = jax.random.normal(k_a, (B2, C, H, W), dtype=jnp.float32)
    xb = jax.random.normal(k_c, (B2, C, H, W), dtype=jnp.float32)
    out2 = jax.block_until_ready(
        attention_net_forward(xa, xb, weight, bias, max_tile_rows=8))
    ref2 = _reference(xa, xb, weight, bias)
    assert out2.shape == (B2, C, H, W)
    assert jnp.allclose(out2, ref2, atol=1e-4, rtol=1e-4), "grid-path mismatch"

    print("KERNEL_OK")
</pallas_src>

<mosaic_0001>
module attributes {stable_mosaic.version = 11 : i64} {
  func.func @_attention_net_kernel(%arg0: i32, %arg1: memref<1x1xf32, #tpu.memory_space<smem>>, %arg2: memref<640x8xf32, #tpu.memory_space<vmem>>, %arg3: memref<8x640xf32, #tpu.memory_space<vmem>>, %arg4: memref<1x640xf32, #tpu.memory_space<vmem>>, %arg5: memref<1x640xf32, #tpu.memory_space<vmem>>, %arg6: memref<1x640xf32, #tpu.memory_space<vmem>>) attributes {dimension_semantics = [#tpu.dimension_semantics<parallel>], iteration_bounds = array<i64: 1>, scalar_prefetch = 0 : i64, scratch_operands = 0 : i64, tpu.core_type = #tpu.core_type<tc>, window_params = [{transform_indices = @transform_0, window_bounds = array<i64: 1, 1>}, {pipeline_mode = #tpu.pipeline_mode<synchronous>, transform_indices = @transform_1, window_bounds = array<i64: 640, 8>}, {pipeline_mode = #tpu.pipeline_mode<synchronous>, transform_indices = @transform_2, window_bounds = array<i64: 8, 640>}, {transform_indices = @transform_3, window_bounds = array<i64: 1, 640>}, {transform_indices = @transform_4, window_bounds = array<i64: 1, 640>}, {transform_indices = @transform_5, window_bounds = array<i64: 1, 640>}]} {
    %c0 = arith.constant 0 : index
    %c0_0 = arith.constant 0 : index
    %0 = vector.load %arg4[%c0, %c0_0] : memref<1x640xf32, #tpu.memory_space<vmem>>, vector<1x640xf32>
    %c0_1 = arith.constant 0 : index
    %c0_2 = arith.constant 0 : index
    %1 = vector.load %arg5[%c0_1, %c0_2] : memref<1x640xf32, #tpu.memory_space<vmem>>, vector<1x640xf32>
    %c0_3 = arith.constant 0 : index
    %c0_4 = arith.constant 0 : index
    %2 = memref.load %arg1[%c0_3, %c0_4] : memref<1x1xf32, #tpu.memory_space<smem>>
    %c0_5 = arith.constant 0 : index
    %c0_6 = arith.constant 0 : index
    %3 = vector.load %arg2[%c0_5, %c0_6] : memref<640x8xf32, #tpu.memory_space<vmem>>, vector<640x8xf32>
    %cst = arith.constant dense<0.000000e+00> : vector<1x8xf32>
    %4 = tpu.matmul %0, %3, %cst {dimension_numbers = #tpu.dot_dimension_numbers<[1], [0], [0], [1], [0, 0, 1, 1], [], []>, precision = #tpu.contract_precision<fp32>} : vector<1x640xf32>, vector<640x8xf32>, vector<1x8xf32> -> vector<1x8xf32>
    %cst_7 = arith.constant dense<0.000000e+00> : vector<1x8xf32>
    %5 = tpu.matmul %1, %3, %cst_7 {dimension_numbers = #tpu.dot_dimension_numbers<[1], [0], [0], [1], [0, 0, 1, 1], [], []>, precision = #tpu.contract_precision<fp32>} : vector<1x640xf32>, vector<640x8xf32>, vector<1x8xf32> -> vector<1x8xf32>
    %6 = vector.broadcast %2 : f32 to vector<1x8xf32>
    %7 = arith.addf %4, %6 : vector<1x8xf32>
    %8 = arith.negf %7 : vector<1x8xf32>
    %9 = math.exp %8 : vector<1x8xf32>
    %cst_8 = arith.constant 1.000000e+00 : f32
    %10 = vector.broadcast %cst_8 : f32 to vector<1x8xf32>
    %11 = arith.addf %10, %9 : vector<1x8xf32>
    %12 = arith.divf %10, %11 : vector<1x8xf32>
    %13 = vector.broadcast %2 : f32 to vector<1x8xf32>
    %14 = arith.addf %5, %13 : vector<1x8xf32>
    %15 = arith.negf %14 : vector<1x8xf32>
    %16 = math.exp %15 : vector<1x8xf32>
    %cst_9 = arith.constant 1.000000e+00 : f32
    %17 = vector.broadcast %cst_9 : f32 to vector<1x8xf32>
    %18 = arith.addf %17, %16 : vector<1x8xf32>
    %19 = arith.divf %17, %18 : vector<1x8xf32>
    %20 = arith.addf %12, %19 : vector<1x8xf32>
    %21 = tpu.reciprocal %20 : vector<1x8xf32> -> vector<1x8xf32>
    %22 = arith.mulf %12, %21 : vector<1x8xf32>
    %c0_10 = arith.constant 0 : index
    %c0_11 = arith.constant 0 : index
    %23 = vector.load %arg3[%c0_10, %c0_11] : memref<8x640xf32, #tpu.memory_space<vmem>>, vector<8x640xf32>
    %cst_12 = arith.constant dense<0.000000e+00> : vector<1x640xf32>
    %24 = tpu.matmul %22, %23, %cst_12 {dimension_numbers = #tpu.dot_dimension_numbers<[1], [0], [0], [1], [0, 0, 1, 1], [], []>, precision = #tpu.contract_precision<fp32>} : vector<1x8xf32>, vector<8x640xf32>, vector<1x640xf32> -> vector<1x640xf32>
    %25 = arith.subf %0, %1 : vector<1x640xf32>
    %26 = arith.mulf %24, %25 : vector<1x640xf32>
    %27 = arith.addf %1, %26 : vector<1x640xf32>
    %c0_13 = arith.constant 0 : index
    %c0_14 = arith.constant 0 : index
    %28 = vector.load %arg6[%c0_13, %c0_14] : memref<1x640xf32, #tpu.memory_space<vmem>>, vector<1x640xf32>
    tpu.vector_store %arg6[%c0_13, %c0_14], %27 {strides = array<i32>} : memref<1x640xf32, #tpu.memory_space<vmem>>, vector<1x640xf32>,
    return
  }
  func.func @transform_0(%arg0: i32) -> (i32, i32) {
    %c0_i32 = arith.constant 0 : i32
    %c0_i32_0 = arith.constant 0 : i32
    %c0_i32_1 = arith.constant 0 : i32
    return %c0_i32, %c0_i32_0 : i32, i32
  }
  func.func @transform_1(%arg0: i32) -> (i32, i32) {
    %c0_i32 = arith.constant 0 : i32
    %c0_i32_0 = arith.constant 0 : i32
    %c0_i32_1 = arith.constant 0 : i32
    return %c0_i32, %c0_i32_0 : i32, i32
  }
  func.func @transform_2(%arg0: i32) -> (i32, i32) {
    %c0_i32 = arith.constant 0 : i32
    %c0_i32_0 = arith.constant 0 : i32
    %c0_i32_1 = arith.constant 0 : i32
    return %c0_i32, %c0_i32_0 : i32, i32
  }
  func.func @transform_3(%arg0: i32) -> (i32, i32) {
    %c0_i32 = arith.constant 0 : i32
    %c0_i32_0 = arith.constant 0 : i32
    return %arg0, %c0_i32 : i32, i32
  }
  func.func @transform_4(%arg0: i32) -> (i32, i32) {
    %c0_i32 = arith.constant 0 : i32
    %c0_i32_0 = arith.constant 0 : i32
    return %arg0, %c0_i32 : i32, i32
  }
  func.func @transform_5(%arg0: i32) -> (i32, i32) {
    %c0_i32 = arith.constant 0 : i32
    %c0_i32_0 = arith.constant 0 : i32
    return %arg0, %c0_i32 : i32, i32
  }
}

</mosaic_0001>

<llo_original>
// kernel: tpu_custom_call.1
$region0: #{tpu_custom_call.1}
  #allocation0 [shape = 'u32[]', space=smem, size = 0x4, offset = 0x4, fixed_abs, tag = 'smem constant byte address 0x4 - core index']
  #allocation1 [shape = 'u32[144,128]{1,0:T(1,128)}', space=vmem, size = 0x12000, scoped, tag = 'internal scratch']
  #allocation2 [shape = 'f32[1,1]{1,0:T(1,128)S(6)}', space=smem, size = 0x200, scoped, tag = 'scoped memory for tpu_custom_call.1']
  %s0 = inlined_call_operand.<no memory space> [shape: f32[1,1], index: 0, kind: input, shape index: {}]
  %s1 = inlined_call_operand.vmem [shape: f32[640,8], index: 1, kind: input, shape index: {}]
  %s2 = inlined_call_operand.vmem [shape: f32[8,640], index: 2, kind: input, shape index: {}]
  %s3 = inlined_call_operand.vmem [shape: f32[1,640], index: 3, kind: input, shape index: {}]
  %s4 = inlined_call_operand.vmem [shape: f32[1,640], index: 4, kind: input, shape index: {}]
  %s5 = inlined_call_operand.hbm [shape: f32[1,640], index: 5, kind: output, shape index: {}]
  %s6 = sld [smem:[#allocation0]]
  $region30: #{tpu_custom_call.1} parent=0
    _
  %s8 = ssub.s32 1, %s6
  %s9 = scalar_select 0, %s8, %s6
  %10 = sst [smem:[#allocation2]] %s0
  $region1: #{tpu_custom_call.1} parent=0
    #allocation3 [shape = 'u8[2560]{0}', space=vmem, size = 0xc00, scoped, tag = 'output window, operand 0, single buffered']
    #allocation4 [shape = 's32[1]{0}', space=sflag, size = 0x4, scoped, tag = 'scoped memory for tpu_custom_call.1']
    %11 = vsyncpa [#allocation4], 0
    // Predicated region
    $region2: #{tpu_custom_call.1} parent=1 // pred_check
      _
    $region3: #{tpu_custom_call.1} parent=1 // pred_check_branch
      %13 = sbr.rel (0) target = $region5
    $region4: #{tpu_custom_call.1} parent=1 // pred_region
      _
    $region5: #{tpu_custom_call.1} parent=1 // pred_fallthru
      _
    // Predicated region
    $region6: #{tpu_custom_call.1} parent=1 // pred_check
      _
    $region7: #{tpu_custom_call.1} parent=1 // pred_check_branch
      %15 = sbr.rel (0) target = $region9
    $region8: #{tpu_custom_call.1} parent=1 // pred_region
      _
    $region9: #{tpu_custom_call.1} parent=1 // pred_fallthru
      _
    // Predicated region
    $region10: #{tpu_custom_call.1} parent=1 // pred_check
      _
    $region11: #{tpu_custom_call.1} parent=1 // pred_check_branch
      %17 = sbr.rel (0) target = $region13
    $region12: #{tpu_custom_call.1} parent=1 // pred_region
      _
    $region13: #{tpu_custom_call.1} parent=1 // pred_fallthru
      _
    // Predicated region
    $region14: #{tpu_custom_call.1} parent=1 // pred_check
      _
    $region15: #{tpu_custom_call.1} parent=1 // pred_check_branch
      %19 = sbr.rel (0) target = $region17
    $region16: #{tpu_custom_call.1} parent=1 // pred_region
      _
    $region17: #{tpu_custom_call.1} parent=1 // pred_fallthru
      _
    // Predicated region
    $region18: #{tpu_custom_call.1} parent=1 // pred_check
      _
    $region19: #{tpu_custom_call.1} parent=1 // pred_check_branch
      %21 = sbr.rel (0) target = $region21
    $region20: #{tpu_custom_call.1} parent=1 // pred_region
      _
    $region21: #{tpu_custom_call.1} parent=1 // pred_fallthru
      _
    %v22 = vld [vmem:[%s3] sm:$0x1f]
    %v23 = vld [vmem:[%s4] sm:$0x1f]
    %s24 = sld [smem:[#allocation2]]
    %v25 = vld [vmem:[%s1] sm:$0xff]
    %v26 = vld [vmem:[%s1 + $0x8] sm:$0xff]
    %v27 = vld [vmem:[%s1 + $0x10] sm:$0xff]
    %v28 = vld [vmem:[%s1 + $0x18] sm:$0xff]
    %v29 = vld [vmem:[%s1 + $0x20] sm:$0xff]
    %v30 = vld [vmem:[%s1 + $0x28] sm:$0xff]
    %v31 = vld [vmem:[%s1 + $0x30] sm:$0xff]
    %v32 = vld [vmem:[%s1 + $0x38] sm:$0xff]
    %v33 = vld [vmem:[%s1 + $0x40] sm:$0xff]
    %v34 = vld [vmem:[%s1 + $0x48] sm:$0xff]
    %v35 = vld [vmem:[%s1 + $0x50] sm:$0xff]
    %v36 = vld [vmem:[%s1 + $0x58] sm:$0xff]
    %v37 = vld [vmem:[%s1 + $0x60] sm:$0xff]
    %v38 = vld [vmem:[%s1 + $0x68] sm:$0xff]
    %v39 = vld [vmem:[%s1 + $0x70] sm:$0xff]
    %v40 = vld [vmem:[%s1 + $0x78] sm:$0xff]
    %v41 = vld [vmem:[%s1 + $0x80] sm:$0xff]
    %v42 = vld [vmem:[%s1 + $0x88] sm:$0xff]
    %v43 = vld [vmem:[%s1 + $0x90] sm:$0xff]
    %v44 = vld [vmem:[%s1 + $0x98] sm:$0xff]
    %v45 = vld [vmem:[%s1 + $0xa0] sm:$0xff]
    %v46 = vld [vmem:[%s1 + $0xa8] sm:$0xff]
    %v47 = vld [vmem:[%s1 + $0xb0] sm:$0xff]
    %v48 = vld [vmem:[%s1 + $0xb8] sm:$0xff]
    %v49 = vld [vmem:[%s1 + $0xc0] sm:$0xff]
    %v50 = vld [vmem:[%s1 + $0xc8] sm:$0xff]
    %v51 = vld [vmem:[%s1 + $0xd0] sm:$0xff]
    %v52 = vld [vmem:[%s1 + $0xd8] sm:$0xff]
    %v53 = vld [vmem:[%s1 + $0xe0] sm:$0xff]
    %v54 = vld [vmem:[%s1 + $0xe8] sm:$0xff]
    %v55 = vld [vmem:[%s1 + $0xf0] sm:$0xff]
    %v56 = vld [vmem:[%s1 + $0xf8] sm:$0xff]
    %v57 = vld [vmem:[%s1 + $0x100] sm:$0xff]
    %v58 = vld [vmem:[%s1 + $0x108] sm:$0xff]
    %v59 = vld [vmem:[%s1 + $0x110] sm:$0xff]
    %v60 = vld [vmem:[%s1 + $0x118] sm:$0xff]
    %v61 = vld [vmem:[%s1 + $0x120] sm:$0xff]
    %v62 = vld [vmem:[%s1 + $0x128] sm:$0xff]
    %v63 = vld [vmem:[%s1 + $0x130] sm:$0xff]
    %v64 = vld [vmem:[%s1 + $0x138] sm:$0xff]
    %v65 = vld [vmem:[%s1 + $0x140] sm:$0xff]
    %v66 = vld [vmem:[%s1 + $0x148] sm:$0xff]
    %v67 = vld [vmem:[%s1 + $0x150] sm:$0xff]
    %v68 = vld [vmem:[%s1 + $0x158] sm:$0xff]
    %v69 = vld [vmem:[%s1 + $0x160] sm:$0xff]
    %v70 = vld [vmem:[%s1 + $0x168] sm:$0xff]
    %v71 = vld [vmem:[%s1 + $0x170] sm:$0xff]
    %v72 = vld [vmem:[%s1 + $0x178] sm:$0xff]
    %v73 = vld [vmem:[%s1 + $0x180] sm:$0xff]
    %v74 = vld [vmem:[%s1 + $0x188] sm:$0xff]
    %v75 = vld [vmem:[%s1 + $0x190] sm:$0xff]
    %v76 = vld [vmem:[%s1 + $0x198] sm:$0xff]
    %v77 = vld [vmem:[%s1 + $0x1a0] sm:$0xff]
    %v78 = vld [vmem:[%s1 + $0x1a8] sm:$0xff]
    %v79 = vld [vmem:[%s1 + $0x1b0] sm:$0xff]
    %v80 = vld [vmem:[%s1 + $0x1b8] sm:$0xff]
    %v81 = vld [vmem:[%s1 + $0x1c0] sm:$0xff]
    %v82 = vld [vmem:[%s1 + $0x1c8] sm:$0xff]
    %v83 = vld [vmem:[%s1 + $0x1d0] sm:$0xff]
    %v84 = vld [vmem:[%s1 + $0x1d8] sm:$0xff]
    %v85 = vld [vmem:[%s1 + $0x1e0] sm:$0xff]
    %v86 = vld [vmem:[%s1 + $0x1e8] sm:$0xff]
    %v87 = vld [vmem:[%s1 + $0x1f0] sm:$0xff]
    %v88 = vld [vmem:[%s1 + $0x1f8] sm:$0xff]
    %v89 = vld [vmem:[%s1 + $0x200] sm:$0xff]
    %v90 = vld [vmem:[%s1 + $0x208] sm:$0xff]
    %v91 = vld [vmem:[%s1 + $0x210] sm:$0xff]
    %v92 = vld [vmem:[%s1 + $0x218] sm:$0xff]
    %v93 = vld [vmem:[%s1 + $0x220] sm:$0xff]
    %v94 = vld [vmem:[%s1 + $0x228] sm:$0xff]
    %v95 = vld [vmem:[%s1 + $0x230] sm:$0xff]
    %v96 = vld [vmem:[%s1 + $0x238] sm:$0xff]
    %v97 = vld [vmem:[%s1 + $0x240] sm:$0xff]
    %v98 = vld [vmem:[%s1 + $0x248] sm:$0xff]
    %v99 = vld [vmem:[%s1 + $0x250] sm:$0xff]
    %v100 = vld [vmem:[%s1 + $0x258] sm:$0xff]
    %v101 = vld [vmem:[%s1 + $0x260] sm:$0xff]
    %v102 = vld [vmem:[%s1 + $0x268] sm:$0xff]
    %v103 = vld [vmem:[%s1 + $0x270] sm:$0xff]
    %v104 = vld [vmem:[%s1 + $0x278] sm:$0xff]
    %v105 = vstv %s24
    %v107 = vlaneseq
    %v108 = vshrl.u32 %v107, 7
    %v109 = vsub.s32 0, %v108
    %v110 = vrot.slane %v22, %v109
    %v111 = vlaneseq
    %v112 = vshrl.u32 %v111, 7
    %v113 = vsub.s32 1, %v112
    %v114 = vrot.slane %v22, %v113
    %v115 = vlaneseq
    %v116 = vshrl.u32 %v115, 7
    %v117 = vsub.s32 2, %v116
    %v118 = vrot.slane %v22, %v117
    %v119 = vlaneseq
    %v120 = vshrl.u32 %v119, 7
    %v121 = vsub.s32 3, %v120
    %v122 = vrot.slane %v22, %v121
    %v123 = vlaneseq
    %v124 = vshrl.u32 %v123, 7
    %v125 = vsub.s32 4, %v124
    %v126 = vrot.slane %v22, %v125
    %132 = vmatprep.subr.mxu0 0.0
    %v133 = vand.u32 %v40, 4294901760
    %134 = vmatpush1.msra.mxu0 %v133
    %135 = vmatprep.subr.mxu0 0.0
    %v136 = vand.u32 %v39, 4294901760
    %137 = vmatpush1.msra.mxu0 %v136
    %138 = vmatprep.subr.mxu0 0.0
    %v139 = vand.u32 %v38, 4294901760
    %140 = vmatpush1.msra.mxu0 %v139
    %141 = vmatprep.subr.mxu0 0.0
    %v142 = vand.u32 %v37, 4294901760
    %143 = vmatpush1.msra.mxu0 %v142
    %144 = vmatprep.subr.mxu0 0.0
    %v145 = vand.u32 %v36, 4294901760
    %146 = vmatpush1.msra.mxu0 %v145
    %147 = vmatprep.subr.mxu0 0.0
    %v148 = vand.u32 %v35, 4294901760
    %149 = vmatpush1.msra.mxu0 %v148
    %150 = vmatprep.subr.mxu0 0.0
    %v151 = vand.u32 %v34, 4294901760
    %152 = vmatpush1.msra.mxu0 %v151
    %153 = vmatprep.subr.mxu0 0.0
    %v154 = vand.u32 %v33, 4294901760
    %155 = vmatpush1.msra.mxu0 %v154
    %156 = vmatprep.subr.mxu0 0.0
    %v157 = vand.u32 %v32, 4294901760
    %158 = vmatpush1.msra.mxu0 %v157
    %159 = vmatprep.subr.mxu0 0.0
    %v160 = vand.u32 %v31, 4294901760
    %161 = vmatpush1.msra.mxu0 %v160
    %162 = vmatprep.subr.mxu0 0.0
    %v163 = vand.u32 %v30, 4294901760
    %164 = vmatpush1.msra.mxu0 %v163
    %165 = vmatprep.subr.mxu0 0.0
    %v166 = vand.u32 %v29, 4294901760
    %167 = vmatpush1.msra.mxu0 %v166
    %168 = vmatprep.subr.mxu0 0.0
    %v169 = vand.u32 %v28, 4294901760
    %170 = vmatpush1.msra.mxu0 %v169
    %171 = vmatprep.subr.mxu0 0.0
    %v172 = vand.u32 %v27, 4294901760
    %173 = vmatpush1.msra.mxu0 %v172
    %174 = vmatprep.subr.mxu0 0.0
    %v175 = vand.u32 %v26, 4294901760
    %176 = vmatpush1.msra.mxu0 %v175
    %177 = vmatprep.subr.mxu0 0.0
    %v178 = vand.u32 %v25, 4294901760
    %179 = vmatpush1.msra.mxu0 %v178
    %180 = vmatprep.subr.mxu0 0.0
    %v181 = vand.u32 %v56, 4294901760
    %182 = vmatpush2.msra.mxu0 %v181
    %183 = vmatprep.subr.mxu0 0.0
    %v184 = vand.u32 %v55, 4294901760
    %185 = vmatpush2.msra.mxu0 %v184
    %186 = vmatprep.subr.mxu0 0.0
    %v187 = vand.u32 %v54, 4294901760
    %188 = vmatpush2.msra.mxu0 %v187
    %189 = vmatprep.subr.mxu0 0.0
    %v190 = vand.u32 %v53, 4294901760
    %191 = vmatpush2.msra.mxu0 %v190
    %192 = vmatprep.subr.mxu0 0.0
    %v193 = vand.u32 %v52, 4294901760
    %194 = vmatpush2.msra.mxu0 %v193
    %195 = vmatprep.subr.mxu0 0.0
    %v196 = vand.u32 %v51, 4294901760
    %197 = vmatpush2.msra.mxu0 %v196
    %198 = vmatprep.subr.mxu0 0.0
    %v199 = vand.u32 %v50, 4294901760
    %200 = vmatpush2.msra.mxu0 %v199
    %201 = vmatprep.subr.mxu0 0.0
    %v202 = vand.u32 %v49, 4294901760
    %203 = vmatpush2.msra.mxu0 %v202
    %204 = vmatprep.subr.mxu0 0.0
    %v205 = vand.u32 %v48, 4294901760
    %206 = vmatpush2.msra.mxu0 %v205
    %207 = vmatprep.subr.mxu0 0.0
    %v208 = vand.u32 %v47, 4294901760
    %209 = vmatpush2.msra.mxu0 %v208
    %210 = vmatprep.subr.mxu0 0.0
    %v211 = vand.u32 %v46, 4294901760
    %212 = vmatpush2.msra.mxu0 %v211
    %213 = vmatprep.subr.mxu0 0.0
    %v214 = vand.u32 %v45, 4294901760
    %215 = vmatpush2.msra.mxu0 %v214
    %216 = vmatprep.subr.mxu0 0.0
    %v217 = vand.u32 %v44, 4294901760
    %218 = vmatpush2.msra.mxu0 %v217
    %219 = vmatprep.subr.mxu0 0.0
    %v220 = vand.u32 %v43, 4294901760
    %221 = vmatpush2.msra.mxu0 %v220
    %222 = vmatprep.subr.mxu0 0.0
    %v223 = vand.u32 %v42, 4294901760
    %224 = vmatpush2.msra.mxu0 %v223
    %225 = vmatprep.subr.mxu0 0.0
    %v226 = vand.u32 %v41, 4294901760
    %227 = vmatpush2.msra.mxu0 %v226
    %v228 = vand.u32 %v114, 4294901760
    %v229 = vsub.f32 %v114, %v228
    %v230 = vand.u32 %v229, 4294901760
    %v231 = vsub.f32 %v229, %v230
    %v232 = vand.u32 %v231, 4294901760
    %233 = vmatprep.mubr.f32.mxu0 %v232
    %v234 = vand.u32 %v110, 4294901760
    %v235 = vsub.f32 %v110, %v234
    %v236 = vand.u32 %v235, 4294901760
    %v237 = vsub.f32 %v235, %v236
    %v238 = vand.u32 %v237, 4294901760
    %239 = vmatmul.mubr.f32.gmra.mxu0 %v238
    %v240 = vpop.f32.mrf.mxu0
    %v241 = vadd.f32 %v105, %v240
    %v242 = vpop.f32.mrf.mxu0
    %243 = vdwg.mxu0
    %244 = vmatprep.subr.mxu0 0.0
    %v245 = vand.u32 %v40, 4294901760
    %v246 = vsub.f32 %v40, %v245
    %v247 = vand.u32 %v246, 4294901760
    %v248 = vsub.f32 %v246, %v247
    %v249 = vand.u32 %v248, 4294901760
    %250 = vmatpush1.msra.mxu0 %v249
    %251 = vmatprep.subr.mxu0 0.0
    %v252 = vand.u32 %v39, 4294901760
    %v253 = vsub.f32 %v39, %v252
    %v254 = vand.u32 %v253, 4294901760
    %v255 = vsub.f32 %v253, %v254
    %v256 = vand.u32 %v255, 4294901760
    %257 = vmatpush1.msra.mxu0 %v256
    %258 = vmatprep.subr.mxu0 0.0
    %v259 = vand.u32 %v38, 4294901760
    %v260 = vsub.f32 %v38, %v259
    %v261 = vand.u32 %v260, 4294901760
    %v262 = vsub.f32 %v260, %v261
    %v263 = vand.u32 %v262, 4294901760
    %264 = vmatpush1.msra.mxu0 %v263
    %265 = vmatprep.subr.mxu0 0.0
    %v266 = vand.u32 %v37, 4294901760
    %v267 = vsub.f32 %v37, %v266
    %v268 = vand.u32 %v267, 4294901760
    %v269 = vsub.f32 %v267, %v268
    %v270 = vand.u32 %v269, 4294901760
    %271 = vmatpush1.msra.mxu0 %v270
    %272 = vmatprep.subr.mxu0 0.0
    %v273 = vand.u32 %v36, 4294901760
    %v274 = vsub.f32 %v36, %v273
    %v275 = vand.u32 %v274, 4294901760
    %v276 = vsub.f32 %v274, %v275
    %v277 = vand.u32 %v276, 4294901760
    %278 = vmatpush1.msra.mxu0 %v277
    %279 = vmatprep.subr.mxu0 0.0
    %v280 = vand.u32 %v35, 4294901760
    %v281 = vsub.f32 %v35, %v280
    %v282 = vand.u32 %v281, 4294901760
    %v283 = vsub.f32 %v281, %v282
    %v284 = vand.u32 %v283, 4294901760
    %285 = vmatpush1.msra.mxu0 %v284
    %286 = vmatprep.subr.mxu0 0.0
    %v287 = vand.u32 %v34, 4294901760
    %v288 = vsub.f32 %v34, %v287
    %v289 = vand.u32 %v288, 4294901760
    %v290 = vsub.f32 %v288, %v289
    %v291 = vand.u32 %v290, 4294901760
    %292 = vmatpush1.msra.mxu0 %v291
    %293 = vmatprep.subr.mxu0 0.0
    %v294 = vand.u32 %v33, 4294901760
    %v295 = vsub.f32 %v33, %v294
    %v296 = vand.u32 %v295, 4294901760
    %v297 = vsub.f32 %v295, %v296
    %v298 = vand.u32 %v297, 4294901760
    %299 = vmatpush1.msra.mxu0 %v298
    %300 = vmatprep.subr.mxu0 0.0
    %v301 = vand.u32 %v32, 4294901760
    %v302 = vsub.f32 %v32, %v301
    %v303 = vand.u32 %v302, 4294901760
    %v304 = vsub.f32 %v302, %v303
    %v305 = vand.u32 %v304, 4294901760
    %306 = vmatpush1.msra.mxu0 %v305
    %307 = vmatprep.subr.mxu0 0.0
    %v308 = vand.u32 %v31, 4294901760
    %v309 = vsub.f32 %v31, %v308
    %v310 = vand.u32 %v309, 4294901760
    %v311 = vsub.f32 %v309, %v310
    %v312 = vand.u32 %v311, 4294901760
    %313 = vmatpush1.msra.mxu0 %v312
    %314 = vmatprep.subr.mxu0 0.0
    %v315 = vand.u32 %v30, 4294901760
    %v316 = vsub.f32 %v30, %v315
    %v317 = vand.u32 %v316, 4294901760
    %v318 = vsub.f32 %v316, %v317
    %v319 = vand.u32 %v318, 4294901760
    %320 = vmatpush1.msra.mxu0 %v319
    %321 = vmatprep.subr.mxu0 0.0
    %v322 = vand.u32 %v29, 4294901760
    %v323 = vsub.f32 %v29, %v322
    %v324 = vand.u32 %v323, 4294901760
    %v325 = vsub.f32 %v323, %v324
    %v326 = vand.u32 %v325, 4294901760
    %327 = vmatpush1.msra.mxu0 %v326
    %328 = vmatprep.subr.mxu0 0.0
    %v329 = vand.u32 %v28, 4294901760
    %v330 = vsub.f32 %v28, %v329
    %v331 = vand.u32 %v330, 4294901760
    %v332 = vsub.f32 %v330, %v331
    %v333 = vand.u32 %v332, 4294901760
    %334 = vmatpush1.msra.mxu0 %v333
    %335 = vmatprep.subr.mxu0 0.0
    %v336 = vand.u32 %v27, 4294901760
    %v337 = vsub.f32 %v27, %v336
    %v338 = vand.u32 %v337, 4294901760
    %v339 = vsub.f32 %v337, %v338
    %v340 = vand.u32 %v339, 4294901760
    %341 = vmatpush1.msra.mxu0 %v340
    %342 = vmatprep.subr.mxu0 0.0
    %v343 = vand.u32 %v26, 4294901760
    %v344 = vsub.f32 %v26, %v343
    %v345 = vand.u32 %v344, 4294901760
    %v346 = vsub.f32 %v344, %v345
    %v347 = vand.u32 %v346, 4294901760
    %348 = vmatpush1.msra.mxu0 %v347
    %349 = vmatprep.subr.mxu0 0.0
    %v350 = vand.u32 %v25, 4294901760
    %v351 = vsub.f32 %v25, %v350
    %v352 = vand.u32 %v351, 4294901760
    %v353 = vsub.f32 %v351, %v352
    %v354 = vand.u32 %v353, 4294901760
    %355 = vmatpush1.msra.mxu0 %v354
    %356 = vmatprep.subr.mxu0 0.0
    %v357 = vand.u32 %v56, 4294901760
    %v358 = vsub.f32 %v56, %v357
    %v359 = vand.u32 %v358, 4294901760
    %v360 = vsub.f32 %v358, %v359
    %v361 = vand.u32 %v360, 4294901760
    %362 = vmatpush2.msra.mxu0 %v361
    %363 = vmatprep.subr.mxu0 0.0
    %v364 = vand.u32 %v55, 4294901760
    %v365 = vsub.f32 %v55, %v364
    %v366 = vand.u32 %v365, 4294901760
    %v367 = vsub.f32 %v365, %v366
    %v368 = vand.u32 %v367, 4294901760
    %369 = vmatpush2.msra.mxu0 %v368
    %370 = vmatprep.subr.mxu0 0.0
    %v371 = vand.u32 %v54, 4294901760
    %v372 = vsub.f32 %v54, %v371
    %v373 = vand.u32 %v372, 4294901760
    %v374 = vsub.f32 %v372, %v373
    %v375 = vand.u32 %v374, 4294901760
    %376 = vmatpush2.msra.mxu0 %v375
    %377 = vmatprep.subr.mxu0 0.0
    %v378 = vand.u32 %v53, 4294901760
    %v379 = vsub.f32 %v53, %v378
    %v380 = vand.u32 %v379, 4294901760
    %v381 = vsub.f32 %v379, %v380
    %v382 = vand.u32 %v381, 4294901760
    %383 = vmatpush2.msra.mxu0 %v382
    %384 = vmatprep.subr.mxu0 0.0
    %v385 = vand.u32 %v52, 4294901760
    %v386 = vsub.f32 %v52, %v385
    %v387 = vand.u32 %v386, 4294901760
    %v388 = vsub.f32 %v386, %v387
    %v389 = vand.u32 %v388, 4294901760
    %390 = vmatpush2.msra.mxu0 %v389
    %391 = vmatprep.subr.mxu0 0.0
    %v392 = vand.u32 %v51, 4294901760
    %v393 = vsub.f32 %v51, %v392
    %v394 = vand.u32 %v393, 4294901760
    %v395 = vsub.f32 %v393, %v394
    %v396 = vand.u32 %v395, 4294901760
    %397 = vmatpush2.msra.mxu0 %v396
    %398 = vmatprep.subr.mxu0 0.0
    %v399 = vand.u32 %v50, 4294901760
    %v400 = vsub.f32 %v50, %v399
    %v401 = vand.u32 %v400, 4294901760
    %v402 = vsub.f32 %v400, %v401
    %v403 = vand.u32 %v402, 4294901760
    %404 = vmatpush2.msra.mxu0 %v403
    %405 = vmatprep.subr.mxu0 0.0
    %v406 = vand.u32 %v49, 4294901760
    %v407 = vsub.f32 %v49, %v406
    %v408 = vand.u32 %v407, 4294901760
    %v409 = vsub.f32 %v407, %v408
    %v410 = vand.u32 %v409, 4294901760
    %411 = vmatpush2.msra.mxu0 %v410
    %412 = vmatprep.subr.mxu0 0.0
    %v413 = vand.u32 %v48, 4294901760
    %v414 = vsub.f32 %v48, %v413
    %v415 = vand.u32 %v414, 4294901760
    %v416 = vsub.f32 %v414, %v415
    %v417 = vand.u32 %v416, 4294901760
    %418 = vmatpush2.msra.mxu0 %v417
    %419 = vmatprep.subr.mxu0 0.0
    %v420 = vand.u32 %v47, 4294901760
    %v421 = vsub.f32 %v47, %v420
    %v422 = vand.u32 %v421, 4294901760
    %v423 = vsub.f32 %v421, %v422
    %v424 = vand.u32 %v423, 4294901760
    %425 = vmatpush2.msra.mxu0 %v424
    %426 = vmatprep.subr.mxu0 0.0
    %v427 = vand.u32 %v46, 4294901760
    %v428 = vsub.f32 %v46, %v427
    %v429 = vand.u32 %v428, 4294901760
    %v430 = vsub.f32 %v428, %v429
    %v431 = vand.u32 %v430, 4294901760
    %432 = vmatpush2.msra.mxu0 %v431
    %433 = vmatprep.subr.mxu0 0.0
    %v434 = vand.u32 %v45, 4294901760
    %v435 = vsub.f32 %v45, %v434
    %v436 = vand.u32 %v435, 4294901760
    %v437 = vsub.f32 %v435, %v436
    %v438 = vand.u32 %v437, 4294901760
    %439 = vmatpush2.msra.mxu0 %v438
    %440 = vmatprep.subr.mxu0 0.0
    %v441 = vand.u32 %v44, 4294901760
    %v442 = vsub.f32 %v44, %v441
    %v443 = vand.u32 %v442, 4294901760
    %v444 = vsub.f32 %v442, %v443
    %v445 = vand.u32 %v444, 4294901760
    %446 = vmatpush2.msra.mxu0 %v445
    %447 = vmatprep.subr.mxu0 0.0
    %v448 = vand.u32 %v43, 4294901760
    %v449 = vsub.f32 %v43, %v448
    %v450 = vand.u32 %v449, 4294901760
    %v451 = vsub.f32 %v449, %v450
    %v452 = vand.u32 %v451, 4294901760
    %453 = vmatpush2.msra.mxu0 %v452
    %454 = vmatprep.subr.mxu0 0.0
    %v455 = vand.u32 %v42, 4294901760
    %v456 = vsub.f32 %v42, %v455
    %v457 = vand.u32 %v456, 4294901760
    %v458 = vsub.f32 %v456, %v457
    %v459 = vand.u32 %v458, 4294901760
    %460 = vmatpush2.msra.mxu0 %v459
    %461 = vmatprep.subr.mxu0 0.0
    %v462 = vand.u32 %v41, 4294901760
    %v463 = vsub.f32 %v41, %v462
    %v464 = vand.u32 %v463, 4294901760
    %v465 = vsub.f32 %v463, %v464
    %v466 = vand.u32 %v465, 4294901760
    %467 = vmatpush2.msra.mxu0 %v466
    %v468 = vand.u32 %v114, 4294901760
    %469 = vmatprep.mubr.f32.mxu0 %v468
    %v470 = vand.u32 %v110, 4294901760
    %471 = vmatmul.mubr.f32.gmra.mxu0 %v470
    %v472 = vpop.f32.mrf.mxu0
    %v473 = vadd.f32 %v241, %v472
    %v474 = vpop.f32.mrf.mxu0
    %475 = vdwg.mxu0
    %476 = vmatprep.subr.mxu0 0.0
    %v477 = vand.u32 %v40, 4294901760
    %v478 = vsub.f32 %v40, %v477
    %479 = vmatpush1.msra.mxu0 %v478
    %480 = vmatprep.subr.mxu0 0.0
    %v481 = vand.u32 %v39, 4294901760
    %v482 = vsub.f32 %v39, %v481
    %483 = vmatpush1.msra.mxu0 %v482
    %484 = vmatprep.subr.mxu0 0.0
    %v485 = vand.u32 %v38, 4294901760
    %v486 = vsub.f32 %v38, %v485
    %487 = vmatpush1.msra.mxu0 %v486
    %488 = vmatprep.subr.mxu0 0.0
    %v489 = vand.u32 %v37, 4294901760
    %v490 = vsub.f32 %v37, %v489
    %491 = vmatpush1.msra.mxu0 %v490
    %492 = vmatprep.subr.mxu0 0.0
    %v493 = vand.u32 %v36, 4294901760
    %v494 = vsub.f32 %v36, %v493
    %495 = vmatpush1.msra.mxu0 %v494
    %496 = vmatprep.subr.mxu0 0.0
    %v497 = vand.u32 %v35, 4294901760
    %v498 = vsub.f32 %v35, %v497
    %499 = vmatpush1.msra.mxu0 %v498
    %500 = vmatprep.subr.mxu0 0.0
    %v501 = vand.u32 %v34, 4294901760
    %v502 = vsub.f32 %v34, %v501
    %503 = vmatpush1.msra.mxu0 %v502
    %504 = vmatprep.subr.mxu0 0.0
    %v505 = vand.u32 %v33, 4294901760
    %v506 = vsub.f32 %v33, %v505
    %507 = vmatpush1.msra.mxu0 %v506
    %508 = vmatprep.subr.mxu0 0.0
    %v509 = vand.u32 %v32, 4294901760
    %v510 = vsub.f32 %v32, %v509
    %511 = vmatpush1.msra.mxu0 %v510
    %512 = vmatprep.subr.mxu0 0.0
    %v513 = vand.u32 %v31, 4294901760
    %v514 = vsub.f32 %v31, %v513
    %515 = vmatpush1.msra.mxu0 %v514
    %516 = vmatprep.subr.mxu0 0.0
    %v517 = vand.u32 %v30, 4294901760
    %v518 = vsub.f32 %v30, %v517
    %519 = vmatpush1.msra.mxu0 %v518
    %520 = vmatprep.subr.mxu0 0.0
    %v521 = vand.u32 %v29, 4294901760
    %v522 = vsub.f32 %v29, %v521
    %523 = vmatpush1.msra.mxu0 %v522
    %524 = vmatprep.subr.mxu0 0.0
    %v525 = vand.u32 %v28, 4294901760
    %v526 = vsub.f32 %v28, %v525
    %527 = vmatpush1.msra.mxu0 %v526
    %528 = vmatprep.subr.mxu0 0.0
    %v529 = vand.u32 %v27, 4294901760
    %v530 = vsub.f32 %v27, %v529
    %531 = vmatpush1.msra.mxu0 %v530
    %532 = vmatprep.subr.mxu0 0.0
    %v533 = vand.u32 %v26, 4294901760
    %v534 = vsub.f32 %v26, %v533
    %535 = vmatpush1.msra.mxu0 %v534
    %536 = vmatprep.subr.mxu0 0.0
    %v537 = vand.u32 %v25, 4294901760
    %v538 = vsub.f32 %v25, %v537
    %539 = vmatpush1.msra.mxu0 %v538
    %540 = vmatprep.subr.mxu0 0.0
    %v541 = vand.u32 %v56, 4294901760
    %v542 = vsub.f32 %v56, %v541
    %543 = vmatpush2.msra.mxu0 %v542
    %544 = vmatprep.subr.mxu0 0.0
    %v545 = vand.u32 %v55, 4294901760
    %v546 = vsub.f32 %v55, %v545
    %547 = vmatpush2.msra.mxu0 %v546
    %548 = vmatprep.subr.mxu0 0.0
    %v549 = vand.u32 %v54, 4294901760
    %v550 = vsub.f32 %v54, %v549
    %551 = vmatpush2.msra.mxu0 %v550
    %552 = vmatprep.subr.mxu0 0.0
    %v553 = vand.u32 %v53, 4294901760
    %v554 = vsub.f32 %v53, %v553
    %555 = vmatpush2.msra.mxu0 %v554
    %556 = vmatprep.subr.mxu0 0.0
    %v557 = vand.u32 %v52, 4294901760
    %v558 = vsub.f32 %v52, %v557
    %559 = vmatpush2.msra.mxu0 %v558
    %560 = vmatprep.subr.mxu0 0.0
    %v561 = vand.u32 %v51, 4294901760
    %v562 = vsub.f32 %v51, %v561
    %563 = vmatpush2.msra.mxu0 %v562
    %564 = vmatprep.subr.mxu0 0.0
    %v565 = vand.u32 %v50, 4294901760
    %v566 = vsub.f32 %v50, %v565
    %567 = vmatpush2.msra.mxu0 %v566
    %568 = vmatprep.subr.mxu0 0.0
    %v569 = vand.u32 %v49, 4294901760
    %v570 = vsub.f32 %v49, %v569
    %571 = vmatpush2.msra.mxu0 %v570
    %572 = vmatprep.subr.mxu0 0.0
    %v573 = vand.u32 %v48, 4294901760
    %v574 = vsub.f32 %v48, %v573
    %575 = vmatpush2.msra.mxu0 %v574
    %576 = vmatprep.subr.mxu0 0.0
    %v577 = vand.u32 %v47, 4294901760
    %v578 = vsub.f32 %v47, %v577
    %579 = vmatpush2.msra.mxu0 %v578
    %580 = vmatprep.subr.mxu0 0.0
    %v581 = vand.u32 %v46, 4294901760
    %v582 = vsub.f32 %v46, %v581
    %583 = vmatpush2.msra.mxu0 %v582
    %584 = vmatprep.subr.mxu0 0.0
    %v585 = vand.u32 %v45, 4294901760
    %v586 = vsub.f32 %v45, %v585
    %587 = vmatpush2.msra.mxu0 %v586
    %588 = vmatprep.subr.mxu0 0.0
    %v589 = vand.u32 %v44, 4294901760
    %v590 = vsub.f32 %v44, %v589
    %591 = vmatpush2.msra.mxu0 %v590
    %592 = vmatprep.subr.mxu0 0.0
    %v593 = vand.u32 %v43, 4294901760
    %v594 = vsub.f32 %v43, %v593
    %595 = vmatpush2.msra.mxu0 %v594
    %596 = vmatprep.subr.mxu0 0.0
    %v597 = vand.u32 %v42, 4294901760
    %v598 = vsub.f32 %v42, %v597
    %599 = vmatpush2.msra.mxu0 %v598
    %600 = vmatprep.subr.mxu0 0.0
    %v601 = vand.u32 %v41, 4294901760
    %v602 = vsub.f32 %v41, %v601
    %603 = vmatpush2.msra.mxu0 %v602
    %v604 = vand.u32 %v114, 4294901760
    %v605 = vsub.f32 %v114, %v604
    %606 = vmatprep.mubr.f32.mxu0 %v605
    %v607 = vand.u32 %v110, 4294901760
    %v608 = vsub.f32 %v110, %v607
    %609 = vmatmul.mubr.f32.gmra.mxu0 %v608
    %v610 = vpop.f32.mrf.mxu0
    %v611 = vadd.f32 %v473, %v610
    %v612 = vpop.f32.mrf.mxu0
    %613 = vdwg.mxu0
    %614 = vmatprep.subr.mxu0 0.0
    %v615 = vand.u32 %v40, 4294901760
    %616 = vmatpush1.msra.mxu0 %v615
    %617 = vmatprep.subr.mxu0 0.0
    %v618 = vand.u32 %v39, 4294901760
    %619 = vmatpush1.msra.mxu0 %v618
    %620 = vmatprep.subr.mxu0 0.0
    %v621 = vand.u32 %v38, 4294901760
    %622 = vmatpush1.msra.mxu0 %v621
    %623 = vmatprep.subr.mxu0 0.0
    %v624 = vand.u32 %v37, 4294901760
    %625 = vmatpush1.msra.mxu0 %v624
    %626 = vmatprep.subr.mxu0 0.0
    %v627 = vand.u32 %v36, 4294901760
    %628 = vmatpush1.msra.mxu0 %v627
    %629 = vmatprep.subr.mxu0 0.0
    %v630 = vand.u32 %v35, 4294901760
    %631 = vmatpush1.msra.mxu0 %v630
    %632 = vmatprep.subr.mxu0 0.0
    %v633 = vand.u32 %v34, 4294901760
    %634 = vmatpush1.msra.mxu0 %v633
    %635 = vmatprep.subr.mxu0 0.0
    %v636 = vand.u32 %v33, 4294901760
    %637 = vmatpush1.msra.mxu0 %v636
    %638 = vmatprep.subr.mxu0 0.0
    %v639 = vand.u32 %v32, 4294901760
    %640 = vmatpush1.msra.mxu0 %v639
    %641 = vmatprep.subr.mxu0 0.0
    %v642 = vand.u32 %v31, 4294901760
    %643 = vmatpush1.msra.mxu0 %v642
    %644 = vmatprep.subr.mxu0 0.0
    %v645 = vand.u32 %v30, 4294901760
    %646 = vmatpush1.msra.mxu0 %v645
    %647 = vmatprep.subr.mxu0 0.0
    %v648 = vand.u32 %v29, 4294901760
    %649 = vmatpush1.msra.mxu0 %v648
    %650 = vmatprep.subr.mxu0 0.0
    %v651 = vand.u32 %v28, 4294901760
    %652 = vmatpush1.msra.mxu0 %v651
    %653 = vmatprep.subr.mxu0 0.0
    %v654 = vand.u32 %v27, 4294901760
    %655 = vmatpush1.msra.mxu0 %v654
    %656 = vmatprep.subr.mxu0 0.0
    %v657 = vand.u32 %v26, 4294901760
    %658 = vmatpush1.msra.mxu0 %v657
    %659 = vmatprep.subr.mxu0 0.0
    %v660 = vand.u32 %v25, 4294901760
    %661 = vmatpush1.msra.mxu0 %v660
    %662 = vmatprep.subr.mxu0 0.0
    %v663 = vand.u32 %v56, 4294901760
    %664 = vmatpush2.msra.mxu0 %v663
    %665 = vmatprep.subr.mxu0 0.0
    %v666 = vand.u32 %v55, 4294901760
    %667 = vmatpush2.msra.mxu0 %v666
    %668 = vmatprep.subr.mxu0 0.0
    %v669 = vand.u32 %v54, 4294901760
    %670 = vmatpush2.msra.mxu0 %v669
    %671 = vmatprep.subr.mxu0 0.0
    %v672 = vand.u32 %v53, 4294901760
    %673 = vmatpush2.msra.mxu0 %v672
    %674 = vmatprep.subr.mxu0 0.0
    %v675 = vand.u32 %v52, 4294901760
    %676 = vmatpush2.msra.mxu0 %v675
    %677 = vmatprep.subr.mxu0 0.0
    %v678 = vand.u32 %v51, 4294901760
    %679 = vmatpush2.msra.mxu0 %v678
    %680 = vmatprep.subr.mxu0 0.0
    %v681 = vand.u32 %v50, 4294901760
    %682 = vmatpush2.msra.mxu0 %v681
    %683 = vmatprep.subr.mxu0 0.0
    %v684 = vand.u32 %v49, 4294901760
    %685 = vmatpush2.msra.mxu0 %v684
    %686 = vmatprep.subr.mxu0 0.0
    %v687 = vand.u32 %v48, 4294901760
    %688 = vmatpush2.msra.mxu0 %v687
    %689 = vmatprep.subr.mxu0 0.0
    %v690 = vand.u32 %v47, 4294901760
    %691 = vmatpush2.msra.mxu0 %v690
    %692 = vmatprep.subr.mxu0 0.0
    %v693 = vand.u32 %v46, 4294901760
    %694 = vmatpush2.msra.mxu0 %v693
    %695 = vmatprep.subr.mxu0 0.0
    %v696 = vand.u32 %v45, 4294901760
    %697 = vmatpush2.msra.mxu0 %v696
    %698 = vmatprep.subr.mxu0 0.0
    %v699 = vand.u32 %v44, 4294901760
    %700 = vmatpush2.msra.mxu0 %v699
    %701 = vmatprep.subr.mxu0 0.0
    %v702 = vand.u32 %v43, 4294901760
    %703 = vmatpush2.msra.mxu0 %v702
    %704 = vmatprep.subr.mxu0 0.0
    %v705 = vand.u32 %v42, 4294901760
    %706 = vmatpush2.msra.mxu0 %v705
    %707 = vmatprep.subr.mxu0 0.0
    %v708 = vand.u32 %v41, 4294901760
    %709 = vmatpush2.msra.mxu0 %v708
    %v710 = vand.u32 %v114, 4294901760
    %v711 = vsub.f32 %v114, %v710
    %v712 = vand.u32 %v711, 4294901760
    %713 = vmatprep.mubr.f32.mxu0 %v712
    %v714 = vand.u32 %v110, 4294901760
    %v715 = vsub.f32 %v110, %v714
    %v716 = vand.u32 %v715, 4294901760
    %717 = vmatmul.mubr.f32.gmra.mxu0 %v716
    %v718 = vpop.f32.mrf.mxu0
    %v719 = vadd.f32 %v611, %v718
    %v720 = vpop.f32.mrf.mxu0
    %721 = vdwg.mxu0
    %722 = vmatprep.subr.mxu0 0.0
    %v723 = vand.u32 %v40, 4294901760
    %v724 = vsub.f32 %v40, %v723
    %v725 = vand.u32 %v724, 4294901760
    %726 = vmatpush1.msra.mxu0 %v725
    %727 = vmatprep.subr.mxu0 0.0
    %v728 = vand.u32 %v39, 4294901760
    %v729 = vsub.f32 %v39, %v728
    %v730 = vand.u32 %v729, 4294901760
    %731 = vmatpush1.msra.mxu0 %v730
    %732 = vmatprep.subr.mxu0 0.0
    %v733 = vand.u32 %v38, 4294901760
    %v734 = vsub.f32 %v38, %v733
    %v735 = vand.u32 %v734, 4294901760
    %736 = vmatpush1.msra.mxu0 %v735
    %737 = vmatprep.subr.mxu0 0.0
    %v738 = vand.u32 %v37, 4294901760
    %v739 = vsub.f32 %v37, %v738
    %v740 = vand.u32 %v739, 4294901760
    %741 = vmatpush1.msra.mxu0 %v740
    %742 = vmatprep.subr.mxu0 0.0
    %v743 = vand.u32 %v36, 4294901760
    %v744 = vsub.f32 %v36, %v743
    %v745 = vand.u32 %v744, 4294901760
    %746 = vmatpush1.msra.mxu0 %v745
    %747 = vmatprep.subr.mxu0 0.0
    %v748 = vand.u32 %v35, 4294901760
    %v749 = vsub.f32 %v35, %v748
    %v750 = vand.u32 %v749, 4294901760
    %751 = vmatpush1.msra.mxu0 %v750
    %752 = vmatprep.subr.mxu0 0.0
    %v753 = vand.u32 %v34, 4294901760
    %v754 = vsub.f32 %v34, %v753
    %v755 = vand.u32 %v754, 4294901760
    %756 = vmatpush1.msra.mxu0 %v755
    %757 = vmatprep.subr.mxu0 0.0
    %v758 = vand.u32 %v33, 4294901760
    %v759 = vsub.f32 %v33, %v758
    %v760 = vand.u32 %v759, 4294901760
    %761 = vmatpush1.msra.mxu0 %v760
    %762 = vmatprep.subr.mxu0 0.0
    %v763 = vand.u32 %v32, 4294901760
    %v764 = vsub.f32 %v32, %v763
    %v765 = vand.u32 %v764, 4294901760
    %766 = vmatpush1.msra.mxu0 %v765
    %767 = vmatprep.subr.mxu0 0.0
    %v768 = vand.u32 %v31, 4294901760
    %v769 = vsub.f32 %v31, %v768
    %v770 = vand.u32 %v769, 4294901760
    %771 = vmatpush1.msra.mxu0 %v770
    %772 = vmatprep.subr.mxu0 0.0
    %v773 = vand.u32 %v30, 4294901760
    %v774 = vsub.f32 %v30, %v773
    %v775 = vand.u32 %v774, 4294901760
    %776 = vmatpush1.msra.mxu0 %v775
    %777 = vmatprep.subr.mxu0 0.0
    %v778 = vand.u32 %v29, 4294901760
    %v779 = vsub.f32 %v29, %v778
    %v780 = vand.u32 %v779, 4294901760
    %781 = vmatpush1.msra.mxu0 %v780
    %782 = vmatprep.subr.mxu0 0.0
    %v783 = vand.u32 %v28, 4294901760
    %v784 = vsub.f32 %v28, %v783
    %v785 = vand.u32 %v784, 4294901760
    %786 = vmatpush1.msra.mxu0 %v785
    %787 = vmatprep.subr.mxu0 0.0
    %v788 = vand.u32 %v27, 4294901760
    %v789 = vsub.f32 %v27, %v788
    %v790 = vand.u32 %v789, 4294901760
    %791 = vmatpush1.msra.mxu0 %v790
    %792 = vmatprep.subr.mxu0 0.0
    %v793 = vand.u32 %v26, 4294901760
    %v794 = vsub.f32 %v26, %v793
    %v795 = vand.u32 %v794, 4294901760
    %796 = vmatpush1.msra.mxu0 %v795
    %797 = vmatprep.subr.mxu0 0.0
    %v798 = vand.u32 %v25, 4294901760
    %v799 = vsub.f32 %v25, %v798
    %v800 = vand.u32 %v799, 4294901760
    %801 = vmatpush1.msra.mxu0 %v800
    %802 = vmatprep.subr.mxu0 0.0
    %v803 = vand.u32 %v56, 4294901760
    %v804 = vsub.f32 %v56, %v803
    %v805 = vand.u32 %v804, 4294901760
    %806 = vmatpush2.msra.mxu0 %v805
    %807 = vmatprep.subr.mxu0 0.0
    %v808 = vand.u32 %v55, 4294901760
    %v809 = vsub.f32 %v55, %v808
    %v810 = vand.u32 %v809, 4294901760
    %811 = vmatpush2.msra.mxu0 %v810
    %812 = vmatprep.subr.mxu0 0.0
    %v813 = vand.u32 %v54, 4294901760
    %v814 = vsub.f32 %v54, %v813
    %v815 = vand.u32 %v814, 4294901760
    %816 = vmatpush2.msra.mxu0 %v815
    %817 = vmatprep.subr.mxu0 0.0
    %v818 = vand.u32 %v53, 4294901760
    %v819 = vsub.f32 %v53, %v818
    %v820 = vand.u32 %v819, 4294901760
    %821 = vmatpush2.msra.mxu0 %v820
    %822 = vmatprep.subr.mxu0 0.0
    %v823 = vand.u32 %v52, 4294901760
    %v824 = vsub.f32 %v52, %v823
    %v825 = vand.u32 %v824, 4294901760
    %826 = vmatpush2.msra.mxu0 %v825
    %827 = vmatprep.subr.mxu0 0.0
    %v828 = vand.u32 %v51, 4294901760
    %v829 = vsub.f32 %v51, %v828
    %v830 = vand.u32 %v829, 4294901760
    %831 = vmatpush2.msra.mxu0 %v830
    %832 = vmatprep.subr.mxu0 0.0
    %v833 = vand.u32 %v50, 4294901760
    %v834 = vsub.f32 %v50, %v833
    %v835 = vand.u32 %v834, 4294901760
    %836 = vmatpush2.msra.mxu0 %v835
    %837 = vmatprep.subr.mxu0 0.0
    %v838 = vand.u32 %v49, 4294901760
    %v839 = vsub.f32 %v49, %v838
    %v840 = vand.u32 %v839, 4294901760
    %841 = vmatpush2.msra.mxu0 %v840
    %842 = vmatprep.subr.mxu0 0.0
    %v843 = vand.u32 %v48, 4294901760
    %v844 = vsub.f32 %v48, %v843
    %v845 = vand.u32 %v844, 4294901760
    %846 = vmatpush2.msra.mxu0 %v845
    %847 = vmatprep.subr.mxu0 0.0
    %v848 = vand.u32 %v47, 4294901760
    %v849 = vsub.f32 %v47, %v848
    %v850 = vand.u32 %v849, 4294901760
    %851 = vmatpush2.msra.mxu0 %v850
    %852 = vmatprep.subr.mxu0 0.0
    %v853 = vand.u32 %v46, 4294901760
    %v854 = vsub.f32 %v46, %v853
    %v855 = vand.u32 %v854, 4294901760
    %856 = vmatpush2.msra.mxu0 %v855
    %857 = vmatprep.subr.mxu0 0.0
    %v858 = vand.u32 %v45, 4294901760
    %v859 = vsub.f32 %v45, %v858
    %v860 = vand.u32 %v859, 4294901760
    %861 = vmatpush2.msra.mxu0 %v860
    %862 = vmatprep.subr.mxu0 0.0
    %v863 = vand.u32 %v44, 4294901760
    %v864 = vsub.f32 %v44, %v863
    %v865 = vand.u32 %v864, 4294901760
    %866 = vmatpush2.msra.mxu0 %v865
    %867 = vmatprep.subr.mxu0 0.0
    %v868 = vand.u32 %v43, 4294901760
    %v869 = vsub.f32 %v43, %v868
    %v870 = vand.u32 %v869, 4294901760
    %871 = vmatpush2.msra.mxu0 %v870
    %872 = vmatprep.subr.mxu0 0.0
    %v873 = vand.u32 %v42, 4294901760
    %v874 = vsub.f32 %v42, %v873
    %v875 = vand.u32 %v874, 4294901760
    %876 = vmatpush2.msra.mxu0 %v875
    %877 = vmatprep.subr.mxu0 0.0
    %v878 = vand.u32 %v41, 4294901760
    %v879 = vsub.f32 %v41, %v878
    %v880 = vand.u32 %v879, 4294901760
    %881 = vmatpush2.msra.mxu0 %v880
    %v882 = vand.u32 %v114, 4294901760
    %883 = vmatprep.mubr.f32.mxu0 %v882
    %v884 = vand.u32 %v110, 4294901760
    %885 = vmatmul.mubr.f32.gmra.mxu0 %v884
    %v886 = vpop.f32.mrf.mxu0
    %v887 = vadd.f32 %v719, %v886
    %v888 = vpop.f32.mrf.mxu0
    %889 = vdwg.mxu0
    %890 = vmatprep.subr.mxu0 0.0
    %v891 = vand.u32 %v40, 4294901760
    %892 = vmatpush1.msra.mxu0 %v891
    %893 = vmatprep.subr.mxu0 0.0
    %v894 = vand.u32 %v39, 4294901760
    %895 = vmatpush1.msra.mxu0 %v894
    %896 = vmatprep.subr.mxu0 0.0
    %v897 = vand.u32 %v38, 4294901760
    %898 = vmatpush1.msra.mxu0 %v897
    %899 = vmatprep.subr.mxu0 0.0
    %v900 = vand.u32 %v37, 4294901760
    %901 = vmatpush1.msra.mxu0 %v900
    %902 = vmatprep.subr.mxu0 0.0
    %v903 = vand.u32 %v36, 4294901760
    %904 = vmatpush1.msra.mxu0 %v903
    %905 = vmatprep.subr.mxu0 0.0
    %v906 = vand.u32 %v35, 4294901760
    %907 = vmatpush1.msra.mxu0 %v906
    %908 = vmatprep.subr.mxu0 0.0
    %v909 = vand.u32 %v34, 4294901760
    %910 = vmatpush1.msra.mxu0 %v909
    %911 = vmatprep.subr.mxu0 0.0
    %v912 = vand.u32 %v33, 4294901760
    %913 = vmatpush1.msra.mxu0 %v912
    %914 = vmatprep.subr.mxu0 0.0
    %v915 = vand.u32 %v32, 4294901760
    %916 = vmatpush1.msra.mxu0 %v915
    %917 = vmatprep.subr.mxu0 0.0
    %v918 = vand.u32 %v31, 4294901760
    %919 = vmatpush1.msra.mxu0 %v918
    %920 = vmatprep.subr.mxu0 0.0
    %v921 = vand.u32 %v30, 4294901760
    %922 = vmatpush1.msra.mxu0 %v921
    %923 = vmatprep.subr.mxu0 0.0
    %v924 = vand.u32 %v29, 4294901760
    %925 = vmatpush1.msra.mxu0 %v924
    %926 = vmatprep.subr.mxu0 0.0
    %v927 = vand.u32 %v28, 4294901760
    %928 = vmatpush1.msra.mxu0 %v927
    %929 = vmatprep.subr.mxu0 0.0
    %v930 = vand.u32 %v27, 4294901760
    %931 = vmatpush1.msra.mxu0 %v930
    %932 = vmatprep.subr.mxu0 0.0
    %v933 = vand.u32 %v26, 4294901760
    %934 = vmatpush1.msra.mxu0 %v933
    %935 = vmatprep.subr.mxu0 0.0
    %v936 = vand.u32 %v25, 4294901760
    %937 = vmatpush1.msra.mxu0 %v936
    %938 = vmatprep.subr.mxu0 0.0
    %v939 = vand.u32 %v56, 4294901760
    %940 = vmatpush2.msra.mxu0 %v939
    %941 = vmatprep.subr.mxu0 0.0
    %v942 = vand.u32 %v55, 4294901760
    %943 = vmatpush2.msra.mxu0 %v942
    %944 = vmatprep.subr.mxu0 0.0
    %v945 = vand.u32 %v54, 4294901760
    %946 = vmatpush2.msra.mxu0 %v945
    %947 = vmatprep.subr.mxu0 0.0
    %v948 = vand.u32 %v53, 4294901760
    %949 = vmatpush2.msra.mxu0 %v948
    %950 = vmatprep.subr.mxu0 0.0
    %v951 = vand.u32 %v52, 4294901760
    %952 = vmatpush2.msra.mxu0 %v951
    %953 = vmatprep.subr.mxu0 0.0
    %v954 = vand.u32 %v51, 4294901760
    %955 = vmatpush2.msra.mxu0 %v954
    %956 = vmatprep.subr.mxu0 0.0
    %v957 = vand.u32 %v50, 4294901760
    %958 = vmatpush2.msra.mxu0 %v957
    %959 = vmatprep.subr.mxu0 0.0
    %v960 = vand.u32 %v49, 4294901760
    %961 = vmatpush2.msra.mxu0 %v960
    %962 = vmatprep.subr.mxu0 0.0
    %v963 = vand.u32 %v48, 4294901760
    %964 = vmatpush2.msra.mxu0 %v963
    %965 = vmatprep.subr.mxu0 0.0
    %v966 = vand.u32 %v47, 4294901760
    %967 = vmatpush2.msra.mxu0 %v966
    %968 = vmatprep.subr.mxu0 0.0
    %v969 = vand.u32 %v46, 4294901760
    %970 = vmatpush2.msra.mxu0 %v969
    %971 = vmatprep.subr.mxu0 0.0
    %v972 = vand.u32 %v45, 4294901760
    %973 = vmatpush2.msra.mxu0 %v972
    %974 = vmatprep.subr.mxu0 0.0
    %v975 = vand.u32 %v44, 4294901760
    %976 = vmatpush2.msra.mxu0 %v975
    %977 = vmatprep.subr.mxu0 0.0
    %v978 = vand.u32 %v43, 4294901760
    %979 = vmatpush2.msra.mxu0 %v978
    %980 = vmatprep.subr.mxu0 0.0
    %v981 = vand.u32 %v42, 4294901760
    %982 = vmatpush2.msra.mxu0 %v981
    %983 = vmatprep.subr.mxu0 0.0
    %v984 = vand.u32 %v41, 4294901760
    %985 = vmatpush2.msra.mxu0 %v984
    %v986 = vand.u32 %v114, 4294901760
    %987 = vmatprep.mubr.f32.mxu0 %v986
    %v988 = vand.u32 %v110, 4294901760
    %989 = vmatmul.mubr.f32.gmra.mxu0 %v988
    %v990 = vpop.f32.mrf.mxu0
    %v991 = vadd.f32 %v887, %v990
    %v992 = vpop.f32.mrf.mxu0
    %993 = vdwg.mxu0
    %994 = vmatprep.subr.mxu0 0.0
    %v995 = vand.u32 %v72, 4294901760
    %996 = vmatpush1.msra.mxu0 %v995
    %997 = vmatprep.subr.mxu0 0.0
    %v998 = vand.u32 %v71, 4294901760
    %999 = vmatpush1.msra.mxu0 %v998
    %1000 = vmatprep.subr.mxu0 0.0
    %v1001 = vand.u32 %v70, 4294901760
    %1002 = vmatpush1.msra.mxu0 %v1001
    %1003 = vmatprep.subr.mxu0 0.0
    %v1004 = vand.u32 %v69, 4294901760
    %1005 = vmatpush1.msra.mxu0 %v1004
    %1006 = vmatprep.subr.mxu0 0.0
    %v1007 = vand.u32 %v68, 4294901760
    %1008 = vmatpush1.msra.mxu0 %v1007
    %1009 = vmatprep.subr.mxu0 0.0
    %v1010 = vand.u32 %v67, 4294901760
    %1011 = vmatpush1.msra.mxu0 %v1010
    %1012 = vmatprep.subr.mxu0 0.0
    %v1013 = vand.u32 %v66, 4294901760
    %1014 = vmatpush1.msra.mxu0 %v1013
    %1015 = vmatprep.subr.mxu0 0.0
    %v1016 = vand.u32 %v65, 4294901760
    %1017 = vmatpush1.msra.mxu0 %v1016
    %1018 = vmatprep.subr.mxu0 0.0
    %v1019 = vand.u32 %v64, 4294901760
    %1020 = vmatpush1.msra.mxu0 %v1019
    %1021 = vmatprep.subr.mxu0 0.0
    %v1022 = vand.u32 %v63, 4294901760
    %1023 = vmatpush1.msra.mxu0 %v1022
    %1024 = vmatprep.subr.mxu0 0.0
    %v1025 = vand.u32 %v62, 4294901760
    %1026 = vmatpush1.msra.mxu0 %v1025
    %1027 = vmatprep.subr.mxu0 0.0
    %v1028 = vand.u32 %v61, 4294901760
    %1029 = vmatpush1.msra.mxu0 %v1028
    %1030 = vmatprep.subr.mxu0 0.0
    %v1031 = vand.u32 %v60, 4294901760
    %1032 = vmatpush1.msra.mxu0 %v1031
    %1033 = vmatprep.subr.mxu0 0.0
    %v1034 = vand.u32 %v59, 4294901760
    %1035 = vmatpush1.msra.mxu0 %v1034
    %1036 = vmatprep.subr.mxu0 0.0
    %v1037 = vand.u32 %v58, 4294901760
    %1038 = vmatpush1.msra.mxu0 %v1037
    %1039 = vmatprep.subr.mxu0 0.0
    %v1040 = vand.u32 %v57, 4294901760
    %1041 = vmatpush1.msra.mxu0 %v1040
    %1042 = vmatprep.subr.mxu0 0.0
    %v1043 = vand.u32 %v88, 4294901760
    %1044 = vmatpush2.msra.mxu0 %v1043
    %1045 = vmatprep.subr.mxu0 0.0
    %v1046 = vand.u32 %v87, 4294901760
    %1047 = vmatpush2.msra.mxu0 %v1046
    %1048 = vmatprep.subr.mxu0 0.0
    %v1049 = vand.u32 %v86, 4294901760
    %1050 = vmatpush2.msra.mxu0 %v1049
    %1051 = vmatprep.subr.mxu0 0.0
    %v1052 = vand.u32 %v85, 4294901760
    %1053 = vmatpush2.msra.mxu0 %v1052
    %1054 = vmatprep.subr.mxu0 0.0
    %v1055 = vand.u32 %v84, 4294901760
    %1056 = vmatpush2.msra.mxu0 %v1055
    %1057 = vmatprep.subr.mxu0 0.0
    %v1058 = vand.u32 %v83, 4294901760
    %1059 = vmatpush2.msra.mxu0 %v1058
    %1060 = vmatprep.subr.mxu0 0.0
    %v1061 = vand.u32 %v82, 4294901760
    %1062 = vmatpush2.msra.mxu0 %v1061
    %1063 = vmatprep.subr.mxu0 0.0
    %v1064 = vand.u32 %v81, 4294901760
    %1065 = vmatpush2.msra.mxu0 %v1064
    %1066 = vmatprep.subr.mxu0 0.0
    %v1067 = vand.u32 %v80, 4294901760
    %1068 = vmatpush2.msra.mxu0 %v1067
    %1069 = vmatprep.subr.mxu0 0.0
    %v1070 = vand.u32 %v79, 4294901760
    %1071 = vmatpush2.msra.mxu0 %v1070
    %1072 = vmatprep.subr.mxu0 0.0
    %v1073 = vand.u32 %v78, 4294901760
    %1074 = vmatpush2.msra.mxu0 %v1073
    %1075 = vmatprep.subr.mxu0 0.0
    %v1076 = vand.u32 %v77, 4294901760
    %1077 = vmatpush2.msra.mxu0 %v1076
    %1078 = vmatprep.subr.mxu0 0.0
    %v1079 = vand.u32 %v76, 4294901760
    %1080 = vmatpush2.msra.mxu0 %v1079
    %1081 = vmatprep.subr.mxu0 0.0
    %v1082 = vand.u32 %v75, 4294901760
    %1083 = vmatpush2.msra.mxu0 %v1082
    %1084 = vmatprep.subr.mxu0 0.0
    %v1085 = vand.u32 %v74, 4294901760
    %1086 = vmatpush2.msra.mxu0 %v1085
    %1087 = vmatprep.subr.mxu0 0.0
    %v1088 = vand.u32 %v73, 4294901760
    %1089 = vmatpush2.msra.mxu0 %v1088
    %v1090 = vand.u32 %v122, 4294901760
    %v1091 = vsub.f32 %v122, %v1090
    %v1092 = vand.u32 %v1091, 4294901760
    %v1093 = vsub.f32 %v1091, %v1092
    %v1094 = vand.u32 %v1093, 4294901760
    %1095 = vmatprep.mubr.f32.mxu0 %v1094
    %v1096 = vand.u32 %v118, 4294901760
    %v1097 = vsub.f32 %v118, %v1096
    %v1098 = vand.u32 %v1097, 4294901760
    %v1099 = vsub.f32 %v1097, %v1098
    %v1100 = vand.u32 %v1099, 4294901760
    %1101 = vmatmul.mubr.f32.gmra.mxu0 %v1100
    %v1102 = vpop.f32.mrf.mxu0
    %v1103 = vadd.f32 %v991, %v1102
    %v1104 = vpop.f32.mrf.mxu0
    %1105 = vdwg.mxu0
    %1106 = vmatprep.subr.mxu0 0.0
    %v1107 = vand.u32 %v72, 4294901760
    %v1108 = vsub.f32 %v72, %v1107
    %v1109 = vand.u32 %v1108, 4294901760
    %v1110 = vsub.f32 %v1108, %v1109
    %v1111 = vand.u32 %v1110, 4294901760
    %1112 = vmatpush1.msra.mxu0 %v1111
    %1113 = vmatprep.subr.mxu0 0.0
    %v1114 = vand.u32 %v71, 4294901760
    %v1115 = vsub.f32 %v71, %v1114
    %v1116 = vand.u32 %v1115, 4294901760
    %v1117 = vsub.f32 %v1115, %v1116
    %v1118 = vand.u32 %v1117, 4294901760
    %1119 = vmatpush1.msra.mxu0 %v1118
    %1120 = vmatprep.subr.mxu0 0.0
    %v1121 = vand.u32 %v70, 4294901760
    %v1122 = vsub.f32 %v70, %v1121
    %v1123 = vand.u32 %v1122, 4294901760
    %v1124 = vsub.f32 %v1122, %v1123
    %v1125 = vand.u32 %v1124, 4294901760
    %1126 = vmatpush1.msra.mxu0 %v1125
    %1127 = vmatprep.subr.mxu0 0.0
    %v1128 = vand.u32 %v69, 4294901760
    %v1129 = vsub.f32 %v69, %v1128
    %v1130 = vand.u32 %v1129, 4294901760
    %v1131 = vsub.f32 %v1129, %v1130
    %v1132 = vand.u32 %v1131, 4294901760
    %1133 = vmatpush1.msra.mxu0 %v1132
    %1134 = vmatprep.subr.mxu0 0.0
    %v1135 = vand.u32 %v68, 4294901760
    %v1136 = vsub.f32 %v68, %v1135
    %v1137 = vand.u32 %v1136, 4294901760
    %v1138 = vsub.f32 %v1136, %v1137
    %v1139 = vand.u32 %v1138, 4294901760
    %1140 = vmatpush1.msra.mxu0 %v1139
    %1141 = vmatprep.subr.mxu0 0.0
    %v1142 = vand.u32 %v67, 4294901760
    %v1143 = vsub.f32 %v67, %v1142
    %v1144 = vand.u32 %v1143, 4294901760
    %v1145 = vsub.f32 %v1143, %v1144
    %v1146 = vand.u32 %v1145, 4294901760
    %1147 = vmatpush1.msra.mxu0 %v1146
    %1148 = vmatprep.subr.mxu0 0.0
    %v1149 = vand.u32 %v66, 4294901760
    %v1150 = vsub.f32 %v66, %v1149
    %v1151 = vand.u32 %v1150, 4294901760
    %v1152 = vsub.f32 %v1150, %v1151
    %v1153 = vand.u32 %v1152, 4294901760
    %1154 = vmatpush1.msra.mxu0 %v1153
    %1155 = vmatprep.subr.mxu0 0.0
    %v1156 = vand.u32 %v65, 4294901760
    %v1157 = vsub.f32 %v65, %v1156
    %v1158 = vand.u32 %v1157, 4294901760
    %v1159 = vsub.f32 %v1157, %v1158
    %v1160 = vand.u32 %v1159, 4294901760
    %1161 = vmatpush1.msra.mxu0 %v1160
    %1162 = vmatprep.subr.mxu0 0.0
    %v1163 = vand.u32 %v64, 4294901760
    %v1164 = vsub.f32 %v64, %v1163
    %v1165 = vand.u32 %v1164, 4294901760
    %v1166 = vsub.f32 %v1164, %v1165
    %v1167 = vand.u32 %v1166, 4294901760
    %1168 = vmatpush1.msra.mxu0 %v1167
    %1169 = vmatprep.subr.mxu0 0.0
    %v1170 = vand.u32 %v63, 4294901760
    %v1171 = vsub.f32 %v63, %v1170
    %v1172 = vand.u32 %v1171, 4294901760
    %v1173 = vsub.f32 %v1171, %v1172
    %v1174 = vand.u32 %v1173, 4294901760
    %1175 = vmatpush1.msra.mxu0 %v1174
    %1176 = vmatprep.subr.mxu0 0.0
    %v1177 = vand.u32 %v62, 4294901760
    %v1178 = vsub.f32 %v62, %v1177
    %v1179 = vand.u32 %v1178, 4294901760
    %v1180 = vsub.f32 %v1178, %v1179
    %v1181 = vand.u32 %v1180, 4294901760
    %1182 = vmatpush1.msra.mxu0 %v1181
    %1183 = vmatprep.subr.mxu0 0.0
    %v1184 = vand.u32 %v61, 4294901760
    %v1185 = vsub.f32 %v61, %v1184
    %v1186 = vand.u32 %v1185, 4294901760
    %v1187 = vsub.f32 %v1185, %v1186
    %v1188 = vand.u32 %v1187, 4294901760
    %1189 = vmatpush1.msra.mxu0 %v1188
    %1190 = vmatprep.subr.mxu0 0.0
    %v1191 = vand.u32 %v60, 4294901760
    %v1192 = vsub.f32 %v60, %v1191
    %v1193 = vand.u32 %v1192, 4294901760
    %v1194 = vsub.f32 %v1192, %v1193
    %v1195 = vand.u32 %v1194, 4294901760
    %1196 = vmatpush1.msra.mxu0 %v1195
    %1197 = vmatprep.subr.mxu0 0.0
    %v1198 = vand.u32 %v59, 4294901760
    %v1199 = vsub.f32 %v59, %v1198
    %v1200 = vand.u32 %v1199, 4294901760
    %v1201 = vsub.f32 %v1199, %v1200
    %v1202 = vand.u32 %v1201, 4294901760
    %1203 = vmatpush1.msra.mxu0 %v1202
    %1204 = vmatprep.subr.mxu0 0.0
    %v1205 = vand.u32 %v58, 4294901760
    %v1206 = vsub.f32 %v58, %v1205
    %v1207 = vand.u32 %v1206, 4294901760
    %v1208 = vsub.f32 %v1206, %v1207
    %v1209 = vand.u32 %v1208, 4294901760
    %1210 = vmatpush1.msra.mxu0 %v1209
    %1211 = vmatprep.subr.mxu0 0.0
    %v1212 = vand.u32 %v57, 4294901760
    %v1213 = vsub.f32 %v57, %v1212
    %v1214 = vand.u32 %v1213, 4294901760
    %v1215 = vsub.f32 %v1213, %v1214
    %v1216 = vand.u32 %v1215, 4294901760
    %1217 = vmatpush1.msra.mxu0 %v1216
    %1218 = vmatprep.subr.mxu0 0.0
    %v1219 = vand.u32 %v88, 4294901760
    %v1220 = vsub.f32 %v88, %v1219
    %v1221 = vand.u32 %v1220, 4294901760
    %v1222 = vsub.f32 %v1220, %v1221
    %v1223 = vand.u32 %v1222, 4294901760
    %1224 = vmatpush2.msra.mxu0 %v1223
    %1225 = vmatprep.subr.mxu0 0.0
    %v1226 = vand.u32 %v87, 4294901760
    %v1227 = vsub.f32 %v87, %v1226
    %v1228 = vand.u32 %v1227, 4294901760
    %v1229 = vsub.f32 %v1227, %v1228
    %v1230 = vand.u32 %v1229, 4294901760
    %1231 = vmatpush2.msra.mxu0 %v1230
    %1232 = vmatprep.subr.mxu0 0.0
    %v1233 = vand.u32 %v86, 4294901760
    %v1234 = vsub.f32 %v86, %v1233
    %v1235 = vand.u32 %v1234, 4294901760
    %v1236 = vsub.f32 %v1234, %v1235
    %v1237 = vand.u32 %v1236, 4294901760
    %1238 = vmatpush2.msra.mxu0 %v1237
    %1239 = vmatprep.subr.mxu0 0.0
    %v1240 = vand.u32 %v85, 4294901760
    %v1241 = vsub.f32 %v85, %v1240
    %v1242 = vand.u32 %v1241, 4294901760
    %v1243 = vsub.f32 %v1241, %v1242
    %v1244 = vand.u32 %v1243, 4294901760
    %1245 = vmatpush2.msra.mxu0 %v1244
    %1246 = vmatprep.subr.mxu0 0.0
    %v1247 = vand.u32 %v84, 4294901760
    %v1248 = vsub.f32 %v84, %v1247
    %v1249 = vand.u32 %v1248, 4294901760
    %v1250 = vsub.f32 %v1248, %v1249
    %v1251 = vand.u32 %v1250, 4294901760
    %1252 = vmatpush2.msra.mxu0 %v1251
    %1253 = vmatprep.subr.mxu0 0.0
    %v1254 = vand.u32 %v83, 4294901760
    %v1255 = vsub.f32 %v83, %v1254
    %v1256 = vand.u32 %v1255, 4294901760
    %v1257 = vsub.f32 %v1255, %v1256
    %v1258 = vand.u32 %v1257, 4294901760
    %1259 = vmatpush2.msra.mxu0 %v1258
    %1260 = vmatprep.subr.mxu0 0.0
    %v1261 = vand.u32 %v82, 4294901760
    %v1262 = vsub.f32 %v82, %v1261
    %v1263 = vand.u32 %v1262, 4294901760
    %v1264 = vsub.f32 %v1262, %v1263
    %v1265 = vand.u32 %v1264, 4294901760
    %1266 = vmatpush2.msra.mxu0 %v1265
    %1267 = vmatprep.subr.mxu0 0.0
    %v1268 = vand.u32 %v81, 4294901760
    %v1269 = vsub.f32 %v81, %v1268
    %v1270 = vand.u32 %v1269, 4294901760
    %v1271 = vsub.f32 %v1269, %v1270
    %v1272 = vand.u32 %v1271, 4294901760
    %1273 = vmatpush2.msra.mxu0 %v1272
    %1274 = vmatprep.subr.mxu0 0.0
    %v1275 = vand.u32 %v80, 4294901760
    %v1276 = vsub.f32 %v80, %v1275
    %v1277 = vand.u32 %v1276, 4294901760
    %v1278 = vsub.f32 %v1276, %v1277
    %v1279 = vand.u32 %v1278, 4294901760
    %1280 = vmatpush2.msra.mxu0 %v1279
    %1281 = vmatprep.subr.mxu0 0.0
    %v1282 = vand.u32 %v79, 4294901760
    %v1283 = vsub.f32 %v79, %v1282
    %v1284 = vand.u32 %v1283, 4294901760
    %v1285 = vsub.f32 %v1283, %v1284
    %v1286 = vand.u32 %v1285, 4294901760
    %1287 = vmatpush2.msra.mxu0 %v1286
    %1288 = vmatprep.subr.mxu0 0.0
    %v1289 = vand.u32 %v78, 4294901760
    %v1290 = vsub.f32 %v78, %v1289
    %v1291 = vand.u32 %v1290, 4294901760
    %v1292 = vsub.f32 %v1290, %v1291
    %v1293 = vand.u32 %v1292, 4294901760
    %1294 = vmatpush2.msra.mxu0 %v1293
    %1295 = vmatprep.subr.mxu0 0.0
    %v1296 = vand.u32 %v77, 4294901760
    %v1297 = vsub.f32 %v77, %v1296
    %v1298 = vand.u32 %v1297, 4294901760
    %v1299 = vsub.f32 %v1297, %v1298
    %v1300 = vand.u32 %v1299, 4294901760
    %1301 = vmatpush2.msra.mxu0 %v1300
    %1302 = vmatprep.subr.mxu0 0.0
    %v1303 = vand.u32 %v76, 4294901760
    %v1304 = vsub.f32 %v76, %v1303
    %v1305 = vand.u32 %v1304, 4294901760
    %v1306 = vsub.f32 %v1304, %v1305
    %v1307 = vand.u32 %v1306, 4294901760
    %1308 = vmatpush2.msra.mxu0 %v1307
    %1309 = vmatprep.subr.mxu0 0.0
    %v1310 = vand.u32 %v75, 4294901760
    %v1311 = vsub.f32 %v75, %v1310
    %v1312 = vand.u32 %v1311, 4294901760
    %v1313 = vsub.f32 %v1311, %v1312
    %v1314 = vand.u32 %v1313, 4294901760
    %1315 = vmatpush2.msra.mxu0 %v1314
    %1316 = vmatprep.subr.mxu0 0.0
    %v1317 = vand.u32 %v74, 4294901760
    %v1318 = vsub.f32 %v74, %v1317
    %v1319 = vand.u32 %v1318, 4294901760
    %v1320 = vsub.f32 %v1318, %v1319
    %v1321 = vand.u32 %v1320, 4294901760
    %1322 = vmatpush2.msra.mxu0 %v1321
    %1323 = vmatprep.subr.mxu0 0.0
    %v1324 = vand.u32 %v73, 4294901760
    %v1325 = vsub.f32 %v73, %v1324
    %v1326 = vand.u32 %v1325, 4294901760
    %v1327 = vsub.f32 %v1325, %v1326
    %v1328 = vand.u32 %v1327, 4294901760
    %1329 = vmatpush2.msra.mxu0 %v1328
    %v1330 = vand.u32 %v122, 4294901760
    %1331 = vmatprep.mubr.f32.mxu0 %v1330
    %v1332 = vand.u32 %v118, 4294901760
    %1333 = vmatmul.mubr.f32.gmra.mxu0 %v1332
    %v1334 = vpop.f32.mrf.mxu0
    %v1335 = vadd.f32 %v1103, %v1334
    %v1336 = vpop.f32.mrf.mxu0
    %1337 = vdwg.mxu0
    %1338 = vmatprep.subr.mxu0 0.0
    %v1339 = vand.u32 %v72, 4294901760
    %v1340 = vsub.f32 %v72, %v1339
    %1341 = vmatpush1.msra.mxu0 %v1340
    %1342 = vmatprep.subr.mxu0 0.0
    %v1343 = vand.u32 %v71, 4294901760
    %v1344 = vsub.f32 %v71, %v1343
    %1345 = vmatpush1.msra.mxu0 %v1344
    %1346 = vmatprep.subr.mxu0 0.0
    %v1347 = vand.u32 %v70, 4294901760
    %v1348 = vsub.f32 %v70, %v1347
    %1349 = vmatpush1.msra.mxu0 %v1348
    %1350 = vmatprep.subr.mxu0 0.0
    %v1351 = vand.u32 %v69, 4294901760
    %v1352 = vsub.f32 %v69, %v1351
    %1353 = vmatpush1.msra.mxu0 %v1352
    %1354 = vmatprep.subr.mxu0 0.0
    %v1355 = vand.u32 %v68, 4294901760
    %v1356 = vsub.f32 %v68, %v1355
    %1357 = vmatpush1.msra.mxu0 %v1356
    %1358 = vmatprep.subr.mxu0 0.0
    %v1359 = vand.u32 %v67, 4294901760
    %v1360 = vsub.f32 %v67, %v1359
    %1361 = vmatpush1.msra.mxu0 %v1360
    %1362 = vmatprep.subr.mxu0 0.0
    %v1363 = vand.u32 %v66, 4294901760
    %v1364 = vsub.f32 %v66, %v1363
    %1365 = vmatpush1.msra.mxu0 %v1364
    %1366 = vmatprep.subr.mxu0 0.0
    %v1367 = vand.u32 %v65, 4294901760
    %v1368 = vsub.f32 %v65, %v1367
    %1369 = vmatpush1.msra.mxu0 %v1368
    %1370 = vmatprep.subr.mxu0 0.0
    %v1371 = vand.u32 %v64, 4294901760
    %v1372 = vsub.f32 %v64, %v1371
    %1373 = vmatpush1.msra.mxu0 %v1372
    %1374 = vmatprep.subr.mxu0 0.0
    %v1375 = vand.u32 %v63, 4294901760
    %v1376 = vsub.f32 %v63, %v1375
    %1377 = vmatpush1.msra.mxu0 %v1376
    %1378 = vmatprep.subr.mxu0 0.0
    %v1379 = vand.u32 %v62, 4294901760
    %v1380 = vsub.f32 %v62, %v1379
    %1381 = vmatpush1.msra.mxu0 %v1380
    %1382 = vmatprep.subr.mxu0 0.0
    %v1383 = vand.u32 %v61, 4294901760
    %v1384 = vsub.f32 %v61, %v1383
    %1385 = vmatpush1.msra.mxu0 %v1384
    %1386 = vmatprep.subr.mxu0 0.0
    %v1387 = vand.u32 %v60, 4294901760
    %v1388 = vsub.f32 %v60, %v1387
    %1389 = vmatpush1.msra.mxu0 %v1388
    %1390 = vmatprep.subr.mxu0 0.0
    %v1391 = vand.u32 %v59, 4294901760
    %v1392 = vsub.f32 %v59, %v1391
    %1393 = vmatpush1.msra.mxu0 %v1392
    %1394 = vmatprep.subr.mxu0 0.0
    %v1395 = vand.u32 %v58, 4294901760
    %v1396 = vsub.f32 %v58, %v1395
    %1397 = vmatpush1.msra.mxu0 %v1396
    %1398 = vmatprep.subr.mxu0 0.0
    %v1399 = vand.u32 %v57, 4294901760
    %v1400 = vsub.f32 %v57, %v1399
    %1401 = vmatpush1.msra.mxu0 %v1400
    %1402 = vmatprep.subr.mxu0 0.0
    %v1403 = vand.u32 %v88, 4294901760
    %v1404 = vsub.f32 %v88, %v1403
    %1405 = vmatpush2.msra.mxu0 %v1404
    %1406 = vmatprep.subr.mxu0 0.0
    %v1407 = vand.u32 %v87, 4294901760
    %v1408 = vsub.f32 %v87, %v1407
    %1409 = vmatpush2.msra.mxu0 %v1408
    %1410 = vmatprep.subr.mxu0 0.0
    %v1411 = vand.u32 %v86, 4294901760
    %v1412 = vsub.f32 %v86, %v1411
    %1413 = vmatpush2.msra.mxu0 %v1412
    %1414 = vmatprep.subr.mxu0 0.0
    %v1415 = vand.u32 %v85, 4294901760
    %v1416 = vsub.f32 %v85, %v1415
    %1417 = vmatpush2.msra.mxu0 %v1416
    %1418 = vmatprep.subr.mxu0 0.0
    %v1419 = vand.u32 %v84, 4294901760
    %v1420 = vsub.f32 %v84, %v1419
    %1421 = vmatpush2.msra.mxu0 %v1420
    %1422 = vmatprep.subr.mxu0 0.0
    %v1423 = vand.u32 %v83, 4294901760
    %v1424 = vsub.f32 %v83, %v1423
    %1425 = vmatpush2.msra.mxu0 %v1424
    %1426 = vmatprep.subr.mxu0 0.0
    %v1427 = vand.u32 %v82, 4294901760
    %v1428 = vsub.f32 %v82, %v1427
    %1429 = vmatpush2.msra.mxu0 %v1428
    %1430 = vmatprep.subr.mxu0 0.0
    %v1431 = vand.u32 %v81, 4294901760
    %v1432 = vsub.f32 %v81, %v1431
    %1433 = vmatpush2.msra.mxu0 %v1432
    %1434 = vmatprep.subr.mxu0 0.0
    %v1435 = vand.u32 %v80, 4294901760
    %v1436 = vsub.f32 %v80, %v1435
    %1437 = vmatpush2.msra.mxu0 %v1436
    %1438 = vmatprep.subr.mxu0 0.0
    %v1439 = vand.u32 %v79, 4294901760
    %v1440 = vsub.f32 %v79, %v1439
    %1441 = vmatpush2.msra.mxu0 %v1440
    %1442 = vmatprep.subr.mxu0 0.0
    %v1443 = vand.u32 %v78, 4294901760
    %v1444 = vsub.f32 %v78, %v1443
    %1445 = vmatpush2.msra.mxu0 %v1444
    %1446 = vmatprep.subr.mxu0 0.0
    %v1447 = vand.u32 %v77, 4294901760
    %v1448 = vsub.f32 %v77, %v1447
    %1449 = vmatpush2.msra.mxu0 %v1448
    %1450 = vmatprep.subr.mxu0 0.0
    %v1451 = vand.u32 %v76, 4294901760
    %v1452 = vsub.f32 %v76, %v1451
    %1453 = vmatpush2.msra.mxu0 %v1452
    %1454 = vmatprep.subr.mxu0 0.0
    %v1455 = vand.u32 %v75, 4294901760
    %v1456 = vsub.f32 %v75, %v1455
    %1457 = vmatpush2.msra.mxu0 %v1456
    %1458 = vmatprep.subr.mxu0 0.0
    %v1459 = vand.u32 %v74, 4294901760
    %v1460 = vsub.f32 %v74, %v1459
    %1461 = vmatpush2.msra.mxu0 %v1460
    %1462 = vmatprep.subr.mxu0 0.0
    %v1463 = vand.u32 %v73, 4294901760
    %v1464 = vsub.f32 %v73, %v1463
    %1465 = vmatpush2.msra.mxu0 %v1464
    %v1466 = vand.u32 %v122, 4294901760
    %v1467 = vsub.f32 %v122, %v1466
    %1468 = vmatprep.mubr.f32.mxu0 %v1467
    %v1469 = vand.u32 %v118, 4294901760
    %v1470 = vsub.f32 %v118, %v1469
    %1471 = vmatmul.mubr.f32.gmra.mxu0 %v1470
    %v1472 = vpop.f32.mrf.mxu0
    %v1473 = vadd.f32 %v1335, %v1472
    %v1474 = vpop.f32.mrf.mxu0
    %1475 = vdwg.mxu0
    %1476 = vmatprep.subr.mxu0 0.0
    %v1477 = vand.u32 %v72, 4294901760
    %1478 = vmatpush1.msra.mxu0 %v1477
    %1479 = vmatprep.subr.mxu0 0.0
    %v1480 = vand.u32 %v71, 4294901760
    %1481 = vmatpush1.msra.mxu0 %v1480
    %1482 = vmatprep.subr.mxu0 0.0
    %v1483 = vand.u32 %v70, 4294901760
    %1484 = vmatpush1.msra.mxu0 %v1483
    %1485 = vmatprep.subr.mxu0 0.0
    %v1486 = vand.u32 %v69, 4294901760
    %1487 = vmatpush1.msra.mxu0 %v1486
    %1488 = vmatprep.subr.mxu0 0.0
    %v1489 = vand.u32 %v68, 4294901760
    %1490 = vmatpush1.msra.mxu0 %v1489
    %1491 = vmatprep.subr.mxu0 0.0
    %v1492 = vand.u32 %v67, 4294901760
    %1493 = vmatpush1.msra.mxu0 %v1492
    %1494 = vmatprep.subr.mxu0 0.0
    %v1495 = vand.u32 %v66, 4294901760
    %1496 = vmatpush1.msra.mxu0 %v1495
    %1497 = vmatprep.subr.mxu0 0.0
    %v1498 = vand.u32 %v65, 4294901760
    %1499 = vmatpush1.msra.mxu0 %v1498
    %1500 = vmatprep.subr.mxu0 0.0
    %v1501 = vand.u32 %v64, 4294901760
    %1502 = vmatpush1.msra.mxu0 %v1501
    %1503 = vmatprep.subr.mxu0 0.0
    %v1504 = vand.u32 %v63, 4294901760
    %1505 = vmatpush1.msra.mxu0 %v1504
    %1506 = vmatprep.subr.mxu0 0.0
    %v1507 = vand.u32 %v62, 4294901760
    %1508 = vmatpush1.msra.mxu0 %v1507
    %1509 = vmatprep.subr.mxu0 0.0
    %v1510 = vand.u32 %v61, 4294901760
    %1511 = vmatpush1.msra.mxu0 %v1510
    %1512 = vmatprep.subr.mxu0 0.0
    %v1513 = vand.u32 %v60, 4294901760
    %1514 = vmatpush1.msra.mxu0 %v1513
    %1515 = vmatprep.subr.mxu0 0.0
    %v1516 = vand.u32 %v59, 4294901760
    %1517 = vmatpush1.msra.mxu0 %v1516
    %1518 = vmatprep.subr.mxu0 0.0
    %v1519 = vand.u32 %v58, 4294901760
    %1520 = vmatpush1.msra.mxu0 %v1519
    %1521 = vmatprep.subr.mxu0 0.0
    %v1522 = vand.u32 %v57, 4294901760
    %1523 = vmatpush1.msra.mxu0 %v1522
    %1524 = vmatprep.subr.mxu0 0.0
    %v1525 = vand.u32 %v88, 4294901760
    %1526 = vmatpush2.msra.mxu0 %v1525
    %1527 = vmatprep.subr.mxu0 0.0
    %v1528 = vand.u32 %v87, 4294901760
    %1529 = vmatpush2.msra.mxu0 %v1528
    %1530 = vmatprep.subr.mxu0 0.0
    %v1531 = vand.u32 %v86, 4294901760
    %1532 = vmatpush2.msra.mxu0 %v1531
    %1533 = vmatprep.subr.mxu0 0.0
    %v1534 = vand.u32 %v85, 4294901760
    %1535 = vmatpush2.msra.mxu0 %v1534
    %1536 = vmatprep.subr.mxu0 0.0
    %v1537 = vand.u32 %v84, 4294901760
    %1538 = vmatpush2.msra.mxu0 %v1537
    %1539 = vmatprep.subr.mxu0 0.0
    %v1540 = vand.u32 %v83, 4294901760
    %1541 = vmatpush2.msra.mxu0 %v1540
    %1542 = vmatprep.subr.mxu0 0.0
    %v1543 = vand.u32 %v82, 4294901760
    %1544 = vmatpush2.msra.mxu0 %v1543
    %1545 = vmatprep.subr.mxu0 0.0
    %v1546 = vand.u32 %v81, 4294901760
    %1547 = vmatpush2.msra.mxu0 %v1546
    %1548 = vmatprep.subr.mxu0 0.0
    %v1549 = vand.u32 %v80, 4294901760
    %1550 = vmatpush2.msra.mxu0 %v1549
    %1551 = vmatprep.subr.mxu0 0.0
    %v1552 = vand.u32 %v79, 4294901760
    %1553 = vmatpush2.msra.mxu0 %v1552
    %1554 = vmatprep.subr.mxu0 0.0
    %v1555 = vand.u32 %v78, 4294901760
    %1556 = vmatpush2.msra.mxu0 %v1555
    %1557 = vmatprep.subr.mxu0 0.0
    %v1558 = vand.u32 %v77, 4294901760
    %1559 = vmatpush2.msra.mxu0 %v1558
    %1560 = vmatprep.subr.mxu0 0.0
    %v1561 = vand.u32 %v76, 4294901760
    %1562 = vmatpush2.msra.mxu0 %v1561
    %1563 = vmatprep.subr.mxu0 0.0
    %v1564 = vand.u32 %v75, 4294901760
    %1565 = vmatpush2.msra.mxu0 %v1564
    %1566 = vmatprep.subr.mxu0 0.0
    %v1567 = vand.u32 %v74, 4294901760
    %1568 = vmatpush2.msra.mxu0 %v1567
    %1569 = vmatprep.subr.mxu0 0.0
    %v1570 = vand.u32 %v73, 4294901760
    %1571 = vmatpush2.msra.mxu0 %v1570
    %v1572 = vand.u32 %v122, 4294901760
    %v1573 = vsub.f32 %v122, %v1572
    %v1574 = vand.u32 %v1573, 4294901760
    %1575 = vmatprep.mubr.f32.mxu0 %v1574
    %v1576 = vand.u32 %v118, 4294901760
    %v1577 = vsub.f32 %v118, %v1576
    %v1578 = vand.u32 %v1577, 4294901760
    %1579 = vmatmul.mubr.f32.gmra.mxu0 %v1578
    %v1580 = vpop.f32.mrf.mxu0
    %v1581 = vadd.f32 %v1473, %v1580
    %v1582 = vpop.f32.mrf.mxu0
    %1583 = vdwg.mxu0
    %1584 = vmatprep.subr.mxu0 0.0
    %v1585 = vand.u32 %v72, 4294901760
    %v1586 = vsub.f32 %v72, %v1585
    %v1587 = vand.u32 %v1586, 4294901760
    %1588 = vmatpush1.msra.mxu0 %v1587
    %1589 = vmatprep.subr.mxu0 0.0
    %v1590 = vand.u32 %v71, 4294901760
    %v1591 = vsub.f32 %v71, %v1590
    %v1592 = vand.u32 %v1591, 4294901760
    %1593 = vmatpush1.msra.mxu0 %v1592
    %1594 = vmatprep.subr.mxu0 0.0
    %v1595 = vand.u32 %v70, 4294901760
    %v1596 = vsub.f32 %v70, %v1595
    %v1597 = vand.u32 %v1596, 4294901760
    %1598 = vmatpush1.msra.mxu0 %v1597
    %1599 = vmatprep.subr.mxu0 0.0
    %v1600 = vand.u32 %v69, 4294901760
    %v1601 = vsub.f32 %v69, %v1600
    %v1602 = vand.u32 %v1601, 4294901760
    %1603 = vmatpush1.msra.mxu0 %v1602
    %1604 = vmatprep.subr.mxu0 0.0
    %v1605 = vand.u32 %v68, 4294901760
    %v1606 = vsub.f32 %v68, %v1605
    %v1607 = vand.u32 %v1606, 4294901760
    %1608 = vmatpush1.msra.mxu0 %v1607
    %1609 = vmatprep.subr.mxu0 0.0
    %v1610 = vand.u32 %v67, 4294901760
    %v1611 = vsub.f32 %v67, %v1610
    %v1612 = vand.u32 %v1611, 4294901760
    %1613 = vmatpush1.msra.mxu0 %v1612
    %1614 = vmatprep.subr.mxu0 0.0
    %v1615 = vand.u32 %v66, 4294901760
    %v1616 = vsub.f32 %v66, %v1615
    %v1617 = vand.u32 %v1616, 4294901760
    %1618 = vmatpush1.msra.mxu0 %v1617
    %1619 = vmatprep.subr.mxu0 0.0
    %v1620 = vand.u32 %v65, 4294901760
    %v1621 = vsub.f32 %v65, %v1620
    %v1622 = vand.u32 %v1621, 4294901760
    %1623 = vmatpush1.msra.mxu0 %v1622
    %1624 = vmatprep.subr.mxu0 0.0
    %v1625 = vand.u32 %v64, 4294901760
    %v1626 = vsub.f32 %v64, %v1625
    %v1627 = vand.u32 %v1626, 4294901760
    %1628 = vmatpush1.msra.mxu0 %v1627
    %1629 = vmatprep.subr.mxu0 0.0
    %v1630 = vand.u32 %v63, 4294901760
    %v1631 = vsub.f32 %v63, %v1630
    %v1632 = vand.u32 %v1631, 4294901760
    %1633 = vmatpush1.msra.mxu0 %v1632
    %1634 = vmatprep.subr.mxu0 0.0
    %v1635 = vand.u32 %v62, 4294901760
    %v1636 = vsub.f32 %v62, %v1635
    %v1637 = vand.u32 %v1636, 4294901760
    %1638 = vmatpush1.msra.mxu0 %v1637
    %1639 = vmatprep.subr.mxu0 0.0
    %v1640 = vand.u32 %v61, 4294901760
    %v1641 = vsub.f32 %v61, %v1640
    %v1642 = vand.u32 %v1641, 4294901760
    %1643 = vmatpush1.msra.mxu0 %v1642
    %1644 = vmatprep.subr.mxu0 0.0
    %v1645 = vand.u32 %v60, 4294901760
    %v1646 = vsub.f32 %v60, %v1645
    %v1647 = vand.u32 %v1646, 4294901760
    %1648 = vmatpush1.msra.mxu0 %v1647
    %1649 = vmatprep.subr.mxu0 0.0
    %v1650 = vand.u32 %v59, 4294901760
    %v1651 = vsub.f32 %v59, %v1650
    %v1652 = vand.u32 %v1651, 4294901760
    %1653 = vmatpush1.msra.mxu0 %v1652
    %1654 = vmatprep.subr.mxu0 0.0
    %v1655 = vand.u32 %v58, 4294901760
    %v1656 = vsub.f32 %v58, %v1655
    %v1657 = vand.u32 %v1656, 4294901760
    %1658 = vmatpush1.msra.mxu0 %v1657
    %1659 = vmatprep.subr.mxu0 0.0
    %v1660 = vand.u32 %v57, 4294901760
    %v1661 = vsub.f32 %v57, %v1660
    %v1662 = vand.u32 %v1661, 4294901760
    %1663 = vmatpush1.msra.mxu0 %v1662
    %1664 = vmatprep.subr.mxu0 0.0
    %v1665 = vand.u32 %v88, 4294901760
    %v1666 = vsub.f32 %v88, %v1665
    %v1667 = vand.u32 %v1666, 4294901760
    %1668 = vmatpush2.msra.mxu0 %v1667
    %1669 = vmatprep.subr.mxu0 0.0
    %v1670 = vand.u32 %v87, 4294901760
    %v1671 = vsub.f32 %v87, %v1670
    %v1672 = vand.u32 %v1671, 4294901760
    %1673 = vmatpush2.msra.mxu0 %v1672
    %1674 = vmatprep.subr.mxu0 0.0
    %v1675 = vand.u32 %v86, 4294901760
    %v1676 = vsub.f32 %v86, %v1675
    %v1677 = vand.u32 %v1676, 4294901760
    %1678 = vmatpush2.msra.mxu0 %v1677
    %1679 = vmatprep.subr.mxu0 0.0
    %v1680 = vand.u32 %v85, 4294901760
    %v1681 = vsub.f32 %v85, %v1680
    %v1682 = vand.u32 %v1681, 4294901760
    %1683 = vmatpush2.msra.mxu0 %v1682
    %1684 = vmatprep.subr.mxu0 0.0
    %v1685 = vand.u32 %v84, 4294901760
    %v1686 = vsub.f32 %v84, %v1685
    %v1687 = vand.u32 %v1686, 4294901760
    %1688 = vmatpush2.msra.mxu0 %v1687
    %1689 = vmatprep.subr.mxu0 0.0
    %v1690 = vand.u32 %v83, 4294901760
    %v1691 = vsub.f32 %v83, %v1690
    %v1692 = vand.u32 %v1691, 4294901760
    %1693 = vmatpush2.msra.mxu0 %v1692
    %1694 = vmatprep.subr.mxu0 0.0
    %v1695 = vand.u32 %v82, 4294901760
    %v1696 = vsub.f32 %v82, %v1695
    %v1697 = vand.u32 %v1696, 4294901760
    %1698 = vmatpush2.msra.mxu0 %v1697
    %1699 = vmatprep.subr.mxu0 0.0
    %v1700 = vand.u32 %v81, 4294901760
    %v1701 = vsub.f32 %v81, %v1700
    %v1702 = vand.u32 %v1701, 4294901760
    %1703 = vmatpush2.msra.mxu0 %v1702
    %1704 = vmatprep.subr.mxu0 0.0
    %v1705 = vand.u32 %v80, 4294901760
    %v1706 = vsub.f32 %v80, %v1705
    %v1707 = vand.u32 %v1706, 4294901760
    %1708 = vmatpush2.msra.mxu0 %v1707
    %1709 = vmatprep.subr.mxu0 0.0
    %v1710 = vand.u32 %v79, 4294901760
    %v1711 = vsub.f32 %v79, %v1710
    %v1712 = vand.u32 %v1711, 4294901760
    %1713 = vmatpush2.msra.mxu0 %v1712
    %1714 = vmatprep.subr.mxu0 0.0
    %v1715 = vand.u32 %v78, 4294901760
    %v1716 = vsub.f32 %v78, %v1715
    %v1717 = vand.u32 %v1716, 4294901760
    %1718 = vmatpush2.msra.mxu0 %v1717
    %1719 = vmatprep.subr.mxu0 0.0
    %v1720 = vand.u32 %v77, 4294901760
    %v1721 = vsub.f32 %v77, %v1720
    %v1722 = vand.u32 %v1721, 4294901760
    %1723 = vmatpush2.msra.mxu0 %v1722
    %1724 = vmatprep.subr.mxu0 0.0
    %v1725 = vand.u32 %v76, 4294901760
    %v1726 = vsub.f32 %v76, %v1725
    %v1727 = vand.u32 %v1726, 4294901760
    %1728 = vmatpush2.msra.mxu0 %v1727
    %1729 = vmatprep.subr.mxu0 0.0
    %v1730 = vand.u32 %v75, 4294901760
    %v1731 = vsub.f32 %v75, %v1730
    %v1732 = vand.u32 %v1731, 4294901760
    %1733 = vmatpush2.msra.mxu0 %v1732
    %1734 = vmatprep.subr.mxu0 0.0
    %v1735 = vand.u32 %v74, 4294901760
    %v1736 = vsub.f32 %v74, %v1735
    %v1737 = vand.u32 %v1736, 4294901760
    %1738 = vmatpush2.msra.mxu0 %v1737
    %1739 = vmatprep.subr.mxu0 0.0
    %v1740 = vand.u32 %v73, 4294901760
    %v1741 = vsub.f32 %v73, %v1740
    %v1742 = vand.u32 %v1741, 4294901760
    %1743 = vmatpush2.msra.mxu0 %v1742
    %v1744 = vand.u32 %v122, 4294901760
    %1745 = vmatprep.mubr.f32.mxu0 %v1744
    %v1746 = vand.u32 %v118, 4294901760
    %1747 = vmatmul.mubr.f32.gmra.mxu0 %v1746
    %v1748 = vpop.f32.mrf.mxu0
    %v1749 = vadd.f32 %v1581, %v1748
    %v1750 = vpop.f32.mrf.mxu0
    %1751 = vdwg.mxu0
    %1752 = vmatprep.subr.mxu0 0.0
    %v1753 = vand.u32 %v72, 4294901760
    %1754 = vmatpush1.msra.mxu0 %v1753
    %1755 = vmatprep.subr.mxu0 0.0
    %v1756 = vand.u32 %v71, 4294901760
    %1757 = vmatpush1.msra.mxu0 %v1756
    %1758 = vmatprep.subr.mxu0 0.0
    %v1759 = vand.u32 %v70, 4294901760
    %1760 = vmatpush1.msra.mxu0 %v1759
    %1761 = vmatprep.subr.mxu0 0.0
    %v1762 = vand.u32 %v69, 4294901760
    %1763 = vmatpush1.msra.mxu0 %v1762
    %1764 = vmatprep.subr.mxu0 0.0
    %v1765 = vand.u32 %v68, 4294901760
    %1766 = vmatpush1.msra.mxu0 %v1765
    %1767 = vmatprep.subr.mxu0 0.0
    %v1768 = vand.u32 %v67, 4294901760
    %1769 = vmatpush1.msra.mxu0 %v1768
    %1770 = vmatprep.subr.mxu0 0.0
    %v1771 = vand.u32 %v66, 4294901760
    %1772 = vmatpush1.msra.mxu0 %v1771
    %1773 = vmatprep.subr.mxu0 0.0
    %v1774 = vand.u32 %v65, 4294901760
    %1775 = vmatpush1.msra.mxu0 %v1774
    %1776 = vmatprep.subr.mxu0 0.0
    %v1777 = vand.u32 %v64, 4294901760
    %1778 = vmatpush1.msra.mxu0 %v1777
    %1779 = vmatprep.subr.mxu0 0.0
    %v1780 = vand.u32 %v63, 4294901760
    %1781 = vmatpush1.msra.mxu0 %v1780
    %1782 = vmatprep.subr.mxu0 0.0
    %v1783 = vand.u32 %v62, 4294901760
    %1784 = vmatpush1.msra.mxu0 %v1783
    %1785 = vmatprep.subr.mxu0 0.0
    %v1786 = vand.u32 %v61, 4294901760
    %1787 = vmatpush1.msra.mxu0 %v1786
    %1788 = vmatprep.subr.mxu0 0.0
    %v1789 = vand.u32 %v60, 4294901760
    %1790 = vmatpush1.msra.mxu0 %v1789
    %1791 = vmatprep.subr.mxu0 0.0
    %v1792 = vand.u32 %v59, 4294901760
    %1793 = vmatpush1.msra.mxu0 %v1792
    %1794 = vmatprep.subr.mxu0 0.0
    %v1795 = vand.u32 %v58, 4294901760
    %1796 = vmatpush1.msra.mxu0 %v1795
    %1797 = vmatprep.subr.mxu0 0.0
    %v1798 = vand.u32 %v57, 4294901760
    %1799 = vmatpush1.msra.mxu0 %v1798
    %1800 = vmatprep.subr.mxu0 0.0
    %v1801 = vand.u32 %v88, 4294901760
    %1802 = vmatpush2.msra.mxu0 %v1801
    %1803 = vmatprep.subr.mxu0 0.0
    %v1804 = vand.u32 %v87, 4294901760
    %1805 = vmatpush2.msra.mxu0 %v1804
    %1806 = vmatprep.subr.mxu0 0.0
    %v1807 = vand.u32 %v86, 4294901760
    %1808 = vmatpush2.msra.mxu0 %v1807
    %1809 = vmatprep.subr.mxu0 0.0
    %v1810 = vand.u32 %v85, 4294901760
    %1811 = vmatpush2.msra.mxu0 %v1810
    %1812 = vmatprep.subr.mxu0 0.0
    %v1813 = vand.u32 %v84, 4294901760
    %1814 = vmatpush2.msra.mxu0 %v1813
    %1815 = vmatprep.subr.mxu0 0.0
    %v1816 = vand.u32 %v83, 4294901760
    %1817 = vmatpush2.msra.mxu0 %v1816
    %1818 = vmatprep.subr.mxu0 0.0
    %v1819 = vand.u32 %v82, 4294901760
    %1820 = vmatpush2.msra.mxu0 %v1819
    %1821 = vmatprep.subr.mxu0 0.0
    %v1822 = vand.u32 %v81, 4294901760
    %1823 = vmatpush2.msra.mxu0 %v1822
    %1824 = vmatprep.subr.mxu0 0.0
    %v1825 = vand.u32 %v80, 4294901760
    %1826 = vmatpush2.msra.mxu0 %v1825
    %1827 = vmatprep.subr.mxu0 0.0
    %v1828 = vand.u32 %v79, 4294901760
    %1829 = vmatpush2.msra.mxu0 %v1828
    %1830 = vmatprep.subr.mxu0 0.0
    %v1831 = vand.u32 %v78, 4294901760
    %1832 = vmatpush2.msra.mxu0 %v1831
    %1833 = vmatprep.subr.mxu0 0.0
    %v1834 = vand.u32 %v77, 4294901760
    %1835 = vmatpush2.msra.mxu0 %v1834
    %1836 = vmatprep.subr.mxu0 0.0
    %v1837 = vand.u32 %v76, 4294901760
    %1838 = vmatpush2.msra.mxu0 %v1837
    %1839 = vmatprep.subr.mxu0 0.0
    %v1840 = vand.u32 %v75, 4294901760
    %1841 = vmatpush2.msra.mxu0 %v1840
    %1842 = vmatprep.subr.mxu0 0.0
    %v1843 = vand.u32 %v74, 4294901760
    %1844 = vmatpush2.msra.mxu0 %v1843
    %1845 = vmatprep.subr.mxu0 0.0
    %v1846 = vand.u32 %v73, 4294901760
    %1847 = vmatpush2.msra.mxu0 %v1846
    %v1848 = vand.u32 %v122, 4294901760
    %1849 = vmatprep.mubr.f32.mxu0 %v1848
    %v1850 = vand.u32 %v118, 4294901760
    %1851 = vmatmul.mubr.f32.gmra.mxu0 %v1850
    %v1852 = vpop.f32.mrf.mxu0
    %v1853 = vadd.f32 %v1749, %v1852
    %v1854 = vpop.f32.mrf.mxu0
    %1855 = vdwg.mxu0
    %1856 = vmatprep.subr.mxu0 0.0
    %v1857 = vand.u32 %v104, 4294901760
    %1858 = vmatpush1.msra.mxu0 %v1857
    %1859 = vmatprep.subr.mxu0 0.0
    %v1860 = vand.u32 %v103, 4294901760
    %1861 = vmatpush1.msra.mxu0 %v1860
    %1862 = vmatprep.subr.mxu0 0.0
    %v1863 = vand.u32 %v102, 4294901760
    %1864 = vmatpush1.msra.mxu0 %v1863
    %1865 = vmatprep.subr.mxu0 0.0
    %v1866 = vand.u32 %v101, 4294901760
    %1867 = vmatpush1.msra.mxu0 %v1866
    %1868 = vmatprep.subr.mxu0 0.0
    %v1869 = vand.u32 %v100, 4294901760
    %1870 = vmatpush1.msra.mxu0 %v1869
    %1871 = vmatprep.subr.mxu0 0.0
    %v1872 = vand.u32 %v99, 4294901760
    %1873 = vmatpush1.msra.mxu0 %v1872
    %1874 = vmatprep.subr.mxu0 0.0
    %v1875 = vand.u32 %v98, 4294901760
    %1876 = vmatpush1.msra.mxu0 %v1875
    %1877 = vmatprep.subr.mxu0 0.0
    %v1878 = vand.u32 %v97, 4294901760
    %1879 = vmatpush1.msra.mxu0 %v1878
    %1880 = vmatprep.subr.mxu0 0.0
    %v1881 = vand.u32 %v96, 4294901760
    %1882 = vmatpush1.msra.mxu0 %v1881
    %1883 = vmatprep.subr.mxu0 0.0
    %v1884 = vand.u32 %v95, 4294901760
    %1885 = vmatpush1.msra.mxu0 %v1884
    %1886 = vmatprep.subr.mxu0 0.0
    %v1887 = vand.u32 %v94, 4294901760
    %1888 = vmatpush1.msra.mxu0 %v1887
    %1889 = vmatprep.subr.mxu0 0.0
    %v1890 = vand.u32 %v93, 4294901760
    %1891 = vmatpush1.msra.mxu0 %v1890
    %1892 = vmatprep.subr.mxu0 0.0
    %v1893 = vand.u32 %v92, 4294901760
    %1894 = vmatpush1.msra.mxu0 %v1893
    %1895 = vmatprep.subr.mxu0 0.0
    %v1896 = vand.u32 %v91, 4294901760
    %1897 = vmatpush1.msra.mxu0 %v1896
    %1898 = vmatprep.subr.mxu0 0.0
    %v1899 = vand.u32 %v90, 4294901760
    %1900 = vmatpush1.msra.mxu0 %v1899
    %1901 = vmatprep.subr.mxu0 0.0
    %v1902 = vand.u32 %v89, 4294901760
    %1903 = vmatpush1.msra.mxu0 %v1902
    %1904 = vmatprep.subr.mxu0 0.0
    %1905 = vmatpush2.msra.mxu0 0.0
    %1906 = vmatprep.subr.mxu0 0.0
    %1907 = vmatpush2.msra.mxu0 0.0
    %1908 = vmatprep.subr.mxu0 0.0
    %1909 = vmatpush2.msra.mxu0 0.0
    %1910 = vmatprep.subr.mxu0 0.0
    %1911 = vmatpush2.msra.mxu0 0.0
    %1912 = vmatprep.subr.mxu0 0.0
    %1913 = vmatpush2.msra.mxu0 0.0
    %1914 = vmatprep.subr.mxu0 0.0
    %1915 = vmatpush2.msra.mxu0 0.0
    %1916 = vmatprep.subr.mxu0 0.0
    %1917 = vmatpush2.msra.mxu0 0.0
    %1918 = vmatprep.subr.mxu0 0.0
    %1919 = vmatpush2.msra.mxu0 0.0
    %1920 = vmatprep.subr.mxu0 0.0
    %1921 = vmatpush2.msra.mxu0 0.0
    %1922 = vmatprep.subr.mxu0 0.0
    %1923 = vmatpush2.msra.mxu0 0.0
    %1924 = vmatprep.subr.mxu0 0.0
    %1925 = vmatpush2.msra.mxu0 0.0
    %1926 = vmatprep.subr.mxu0 0.0
    %1927 = vmatpush2.msra.mxu0 0.0
    %1928 = vmatprep.subr.mxu0 0.0
    %1929 = vmatpush2.msra.mxu0 0.0
    %1930 = vmatprep.subr.mxu0 0.0
    %1931 = vmatpush2.msra.mxu0 0.0
    %1932 = vmatprep.subr.mxu0 0.0
    %1933 = vmatpush2.msra.mxu0 0.0
    %1934 = vmatprep.subr.mxu0 0.0
    %1935 = vmatpush2.msra.mxu0 0.0
    %1936 = vmatprep.mubr.f32.mxu0 0.0
    %v1937 = vand.u32 %v126, 4294901760
    %v1938 = vsub.f32 %v126, %v1937
    %v1939 = vand.u32 %v1938, 4294901760
    %v1940 = vsub.f32 %v1938, %v1939
    %v1941 = vand.u32 %v1940, 4294901760
    %1942 = vmatmul.mubr.f32.gmra.mxu0 %v1941
    %v1943 = vpop.f32.mrf.mxu0
    %v1944 = vadd.f32 %v1853, %v1943
    %v1945 = vpop.f32.mrf.mxu0
    %1946 = vdwg.mxu0
    %1947 = vmatprep.subr.mxu0 0.0
    %v1948 = vand.u32 %v104, 4294901760
    %v1949 = vsub.f32 %v104, %v1948
    %v1950 = vand.u32 %v1949, 4294901760
    %v1951 = vsub.f32 %v1949, %v1950
    %v1952 = vand.u32 %v1951, 4294901760
    %1953 = vmatpush1.msra.mxu0 %v1952
    %1954 = vmatprep.subr.mxu0 0.0
    %v1955 = vand.u32 %v103, 4294901760
    %v1956 = vsub.f32 %v103, %v1955
    %v1957 = vand.u32 %v1956, 4294901760
    %v1958 = vsub.f32 %v1956, %v1957
    %v1959 = vand.u32 %v1958, 4294901760
    %1960 = vmatpush1.msra.mxu0 %v1959
    %1961 = vmatprep.subr.mxu0 0.0
    %v1962 = vand.u32 %v102, 4294901760
    %v1963 = vsub.f32 %v102, %v1962
    %v1964 = vand.u32 %v1963, 4294901760
    %v1965 = vsub.f32 %v1963, %v1964
    %v1966 = vand.u32 %v1965, 4294901760
    %1967 = vmatpush1.msra.mxu0 %v1966
    %1968 = vmatprep.subr.mxu0 0.0
    %v1969 = vand.u32 %v101, 4294901760
    %v1970 = vsub.f32 %v101, %v1969
    %v1971 = vand.u32 %v1970, 4294901760
    %v1972 = vsub.f32 %v1970, %v1971
    %v1973 = vand.u32 %v1972, 4294901760
    %1974 = vmatpush1.msra.mxu0 %v1973
    %1975 = vmatprep.subr.mxu0 0.0
    %v1976 = vand.u32 %v100, 4294901760
    %v1977 = vsub.f32 %v100, %v1976
    %v1978 = vand.u32 %v1977, 4294901760
    %v1979 = vsub.f32 %v1977, %v1978
    %v1980 = vand.u32 %v1979, 4294901760
    %1981 = vmatpush1.msra.mxu0 %v1980
    %1982 = vmatprep.subr.mxu0 0.0
    %v1983 = vand.u32 %v99, 4294901760
    %v1984 = vsub.f32 %v99, %v1983
    %v1985 = vand.u32 %v1984, 4294901760
    %v1986 = vsub.f32 %v1984, %v1985
    %v1987 = vand.u32 %v1986, 4294901760
    %1988 = vmatpush1.msra.mxu0 %v1987
    %1989 = vmatprep.subr.mxu0 0.0
    %v1990 = vand.u32 %v98, 4294901760
    %v1991 = vsub.f32 %v98, %v1990
    %v1992 = vand.u32 %v1991, 4294901760
    %v1993 = vsub.f32 %v1991, %v1992
    %v1994 = vand.u32 %v1993, 4294901760
    %1995 = vmatpush1.msra.mxu0 %v1994
    %1996 = vmatprep.subr.mxu0 0.0
    %v1997 = vand.u32 %v97, 4294901760
    %v1998 = vsub.f32 %v97, %v1997
    %v1999 = vand.u32 %v1998, 4294901760
    %v2000 = vsub.f32 %v1998, %v1999
    %v2001 = vand.u32 %v2000, 4294901760
    %2002 = vmatpush1.msra.mxu0 %v2001
    %2003 = vmatprep.subr.mxu0 0.0
    %v2004 = vand.u32 %v96, 4294901760
    %v2005 = vsub.f32 %v96, %v2004
    %v2006 = vand.u32 %v2005, 4294901760
    %v2007 = vsub.f32 %v2005, %v2006
    %v2008 = vand.u32 %v2007, 4294901760
    %2009 = vmatpush1.msra.mxu0 %v2008
    %2010 = vmatprep.subr.mxu0 0.0
    %v2011 = vand.u32 %v95, 4294901760
    %v2012 = vsub.f32 %v95, %v2011
    %v2013 = vand.u32 %v2012, 4294901760
    %v2014 = vsub.f32 %v2012, %v2013
    %v2015 = vand.u32 %v2014, 4294901760
    %2016 = vmatpush1.msra.mxu0 %v2015
    %2017 = vmatprep.subr.mxu0 0.0
    %v2018 = vand.u32 %v94, 4294901760
    %v2019 = vsub.f32 %v94, %v2018
    %v2020 = vand.u32 %v2019, 4294901760
    %v2021 = vsub.f32 %v2019, %v2020
    %v2022 = vand.u32 %v2021, 4294901760
    %2023 = vmatpush1.msra.mxu0 %v2022
    %2024 = vmatprep.subr.mxu0 0.0
    %v2025 = vand.u32 %v93, 4294901760
    %v2026 = vsub.f32 %v93, %v2025
    %v2027 = vand.u32 %v2026, 4294901760
    %v2028 = vsub.f32 %v2026, %v2027
    %v2029 = vand.u32 %v2028, 4294901760
    %2030 = vmatpush1.msra.mxu0 %v2029
    %2031 = vmatprep.subr.mxu0 0.0
    %v2032 = vand.u32 %v92, 4294901760
    %v2033 = vsub.f32 %v92, %v2032
    %v2034 = vand.u32 %v2033, 4294901760
    %v2035 = vsub.f32 %v2033, %v2034
    %v2036 = vand.u32 %v2035, 4294901760
    %2037 = vmatpush1.msra.mxu0 %v2036
    %2038 = vmatprep.subr.mxu0 0.0
    %v2039 = vand.u32 %v91, 4294901760
    %v2040 = vsub.f32 %v91, %v2039
    %v2041 = vand.u32 %v2040, 4294901760
    %v2042 = vsub.f32 %v2040, %v2041
    %v2043 = vand.u32 %v2042, 4294901760
    %2044 = vmatpush1.msra.mxu0 %v2043
    %2045 = vmatprep.subr.mxu0 0.0
    %v2046 = vand.u32 %v90, 4294901760
    %v2047 = vsub.f32 %v90, %v2046
    %v2048 = vand.u32 %v2047, 4294901760
    %v2049 = vsub.f32 %v2047, %v2048
    %v2050 = vand.u32 %v2049, 4294901760
    %2051 = vmatpush1.msra.mxu0 %v2050
    %2052 = vmatprep.subr.mxu0 0.0
    %v2053 = vand.u32 %v89, 4294901760
    %v2054 = vsub.f32 %v89, %v2053
    %v2055 = vand.u32 %v2054, 4294901760
    %v2056 = vsub.f32 %v2054, %v2055
    %v2057 = vand.u32 %v2056, 4294901760
    %2058 = vmatpush1.msra.mxu0 %v2057
    %2059 = vmatprep.subr.mxu0 0.0
    %2060 = vmatpush2.msra.mxu0 0.0
    %2061 = vmatprep.subr.mxu0 0.0
    %2062 = vmatpush2.msra.mxu0 0.0
    %2063 = vmatprep.subr.mxu0 0.0
    %2064 = vmatpush2.msra.mxu0 0.0
    %2065 = vmatprep.subr.mxu0 0.0
    %2066 = vmatpush2.msra.mxu0 0.0
    %2067 = vmatprep.subr.mxu0 0.0
    %2068 = vmatpush2.msra.mxu0 0.0
    %2069 = vmatprep.subr.mxu0 0.0
    %2070 = vmatpush2.msra.mxu0 0.0
    %2071 = vmatprep.subr.mxu0 0.0
    %2072 = vmatpush2.msra.mxu0 0.0
    %2073 = vmatprep.subr.mxu0 0.0
    %2074 = vmatpush2.msra.mxu0 0.0
    %2075 = vmatprep.subr.mxu0 0.0
    %2076 = vmatpush2.msra.mxu0 0.0
    %2077 = vmatprep.subr.mxu0 0.0
    %2078 = vmatpush2.msra.mxu0 0.0
    %2079 = vmatprep.subr.mxu0 0.0
    %2080 = vmatpush2.msra.mxu0 0.0
    %2081 = vmatprep.subr.mxu0 0.0
    %2082 = vmatpush2.msra.mxu0 0.0
    %2083 = vmatprep.subr.mxu0 0.0
    %2084 = vmatpush2.msra.mxu0 0.0
    %2085 = vmatprep.subr.mxu0 0.0
    %2086 = vmatpush2.msra.mxu0 0.0
    %2087 = vmatprep.subr.mxu0 0.0
    %2088 = vmatpush2.msra.mxu0 0.0
    %2089 = vmatprep.subr.mxu0 0.0
    %2090 = vmatpush2.msra.mxu0 0.0
    %2091 = vmatprep.mubr.f32.mxu0 0.0
    %v2092 = vand.u32 %v126, 4294901760
    %2093 = vmatmul.mubr.f32.gmra.mxu0 %v2092
    %v2094 = vpop.f32.mrf.mxu0
    %v2095 = vadd.f32 %v1944, %v2094
    %v2096 = vpop.f32.mrf.mxu0
    %2097 = vdwg.mxu0
    %2098 = vmatprep.subr.mxu0 0.0
    %v2099 = vand.u32 %v104, 4294901760
    %v2100 = vsub.f32 %v104, %v2099
    %2101 = vmatpush1.msra.mxu0 %v2100
    %2102 = vmatprep.subr.mxu0 0.0
    %v2103 = vand.u32 %v103, 4294901760
    %v2104 = vsub.f32 %v103, %v2103
    %2105 = vmatpush1.msra.mxu0 %v2104
    %2106 = vmatprep.subr.mxu0 0.0
    %v2107 = vand.u32 %v102, 4294901760
    %v2108 = vsub.f32 %v102, %v2107
    %2109 = vmatpush1.msra.mxu0 %v2108
    %2110 = vmatprep.subr.mxu0 0.0
    %v2111 = vand.u32 %v101, 4294901760
    %v2112 = vsub.f32 %v101, %v2111
    %2113 = vmatpush1.msra.mxu0 %v2112
    %2114 = vmatprep.subr.mxu0 0.0
    %v2115 = vand.u32 %v100, 4294901760
    %v2116 = vsub.f32 %v100, %v2115
    %2117 = vmatpush1.msra.mxu0 %v2116
    %2118 = vmatprep.subr.mxu0 0.0
    %v2119 = vand.u32 %v99, 4294901760
    %v2120 = vsub.f32 %v99, %v2119
    %2121 = vmatpush1.msra.mxu0 %v2120
    %2122 = vmatprep.subr.mxu0 0.0
    %v2123 = vand.u32 %v98, 4294901760
    %v2124 = vsub.f32 %v98, %v2123
    %2125 = vmatpush1.msra.mxu0 %v2124
    %2126 = vmatprep.subr.mxu0 0.0
    %v2127 = vand.u32 %v97, 4294901760
    %v2128 = vsub.f32 %v97, %v2127
    %2129 = vmatpush1.msra.mxu0 %v2128
    %2130 = vmatprep.subr.mxu0 0.0
    %v2131 = vand.u32 %v96, 4294901760
    %v2132 = vsub.f32 %v96, %v2131
    %2133 = vmatpush1.msra.mxu0 %v2132
    %2134 = vmatprep.subr.mxu0 0.0
    %v2135 = vand.u32 %v95, 4294901760
    %v2136 = vsub.f32 %v95, %v2135
    %2137 = vmatpush1.msra.mxu0 %v2136
    %2138 = vmatprep.subr.mxu0 0.0
    %v2139 = vand.u32 %v94, 4294901760
    %v2140 = vsub.f32 %v94, %v2139
    %2141 = vmatpush1.msra.mxu0 %v2140
    %2142 = vmatprep.subr.mxu0 0.0
    %v2143 = vand.u32 %v93, 4294901760
    %v2144 = vsub.f32 %v93, %v2143
    %2145 = vmatpush1.msra.mxu0 %v2144
    %2146 = vmatprep.subr.mxu0 0.0
    %v2147 = vand.u32 %v92, 4294901760
    %v2148 = vsub.f32 %v92, %v2147
    %2149 = vmatpush1.msra.mxu0 %v2148
    %2150 = vmatprep.subr.mxu0 0.0
    %v2151 = vand.u32 %v91, 4294901760
    %v2152 = vsub.f32 %v91, %v2151
    %2153 = vmatpush1.msra.mxu0 %v2152
    %2154 = vmatprep.subr.mxu0 0.0
    %v2155 = vand.u32 %v90, 4294901760
    %v2156 = vsub.f32 %v90, %v2155
    %2157 = vmatpush1.msra.mxu0 %v2156
    %2158 = vmatprep.subr.mxu0 0.0
    %v2159 = vand.u32 %v89, 4294901760
    %v2160 = vsub.f32 %v89, %v2159
    %2161 = vmatpush1.msra.mxu0 %v2160
    %2162 = vmatprep.subr.mxu0 0.0
    %2163 = vmatpush2.msra.mxu0 0.0
    %2164 = vmatprep.subr.mxu0 0.0
    %2165 = vmatpush2.msra.mxu0 0.0
    %2166 = vmatprep.subr.mxu0 0.0
    %2167 = vmatpush2.msra.mxu0 0.0
    %2168 = vmatprep.subr.mxu0 0.0
    %2169 = vmatpush2.msra.mxu0 0.0
    %2170 = vmatprep.subr.mxu0 0.0
    %2171 = vmatpush2.msra.mxu0 0.0
    %2172 = vmatprep.subr.mxu0 0.0
    %2173 = vmatpush2.msra.mxu0 0.0
    %2174 = vmatprep.subr.mxu0 0.0
    %2175 = vmatpush2.msra.mxu0 0.0
    %2176 = vmatprep.subr.mxu0 0.0
    %2177 = vmatpush2.msra.mxu0 0.0
    %2178 = vmatprep.subr.mxu0 0.0
    %2179 = vmatpush2.msra.mxu0 0.0
    %2180 = vmatprep.subr.mxu0 0.0
    %2181 = vmatpush2.msra.mxu0 0.0
    %2182 = vmatprep.subr.mxu0 0.0
    %2183 = vmatpush2.msra.mxu0 0.0
    %2184 = vmatprep.subr.mxu0 0.0
    %2185 = vmatpush2.msra.mxu0 0.0
    %2186 = vmatprep.subr.mxu0 0.0
    %2187 = vmatpush2.msra.mxu0 0.0
    %2188 = vmatprep.subr.mxu0 0.0
    %2189 = vmatpush2.msra.mxu0 0.0
    %2190 = vmatprep.subr.mxu0 0.0
    %2191 = vmatpush2.msra.mxu0 0.0
    %2192 = vmatprep.subr.mxu0 0.0
    %2193 = vmatpush2.msra.mxu0 0.0
    %2194 = vmatprep.mubr.f32.mxu0 0.0
    %v2195 = vand.u32 %v126, 4294901760
    %v2196 = vsub.f32 %v126, %v2195
    %2197 = vmatmul.mubr.f32.gmra.mxu0 %v2196
    %v2198 = vpop.f32.mrf.mxu0
    %v2199 = vadd.f32 %v2095, %v2198
    %v2200 = vpop.f32.mrf.mxu0
    %2201 = vdwg.mxu0
    %2202 = vmatprep.subr.mxu0 0.0
    %v2203 = vand.u32 %v104, 4294901760
    %2204 = vmatpush1.msra.mxu0 %v2203
    %2205 = vmatprep.subr.mxu0 0.0
    %v2206 = vand.u32 %v103, 4294901760
    %2207 = vmatpush1.msra.mxu0 %v2206
    %2208 = vmatprep.subr.mxu0 0.0
    %v2209 = vand.u32 %v102, 4294901760
    %2210 = vmatpush1.msra.mxu0 %v2209
    %2211 = vmatprep.subr.mxu0 0.0
    %v2212 = vand.u32 %v101, 4294901760
    %2213 = vmatpush1.msra.mxu0 %v2212
    %2214 = vmatprep.subr.mxu0 0.0
    %v2215 = vand.u32 %v100, 4294901760
    %2216 = vmatpush1.msra.mxu0 %v2215
    %2217 = vmatprep.subr.mxu0 0.0
    %v2218 = vand.u32 %v99, 4294901760
    %2219 = vmatpush1.msra.mxu0 %v2218
    %2220 = vmatprep.subr.mxu0 0.0
    %v2221 = vand.u32 %v98, 4294901760
    %2222 = vmatpush1.msra.mxu0 %v2221
    %2223 = vmatprep.subr.mxu0 0.0
    %v2224 = vand.u32 %v97, 4294901760
    %2225 = vmatpush1.msra.mxu0 %v2224
    %2226 = vmatprep.subr.mxu0 0.0
    %v2227 = vand.u32 %v96, 4294901760
    %2228 = vmatpush1.msra.mxu0 %v2227
    %2229 = vmatprep.subr.mxu0 0.0
    %v2230 = vand.u32 %v95, 4294901760
    %2231 = vmatpush1.msra.mxu0 %v2230
    %2232 = vmatprep.subr.mxu0 0.0
    %v2233 = vand.u32 %v94, 4294901760
    %2234 = vmatpush1.msra.mxu0 %v2233
    %2235 = vmatprep.subr.mxu0 0.0
    %v2236 = vand.u32 %v93, 4294901760
    %2237 = vmatpush1.msra.mxu0 %v2236
    %2238 = vmatprep.subr.mxu0 0.0
    %v2239 = vand.u32 %v92, 4294901760
    %2240 = vmatpush1.msra.mxu0 %v2239
    %2241 = vmatprep.subr.mxu0 0.0
    %v2242 = vand.u32 %v91, 4294901760
    %2243 = vmatpush1.msra.mxu0 %v2242
    %2244 = vmatprep.subr.mxu0 0.0
    %v2245 = vand.u32 %v90, 4294901760
    %2246 = vmatpush1.msra.mxu0 %v2245
    %2247 = vmatprep.subr.mxu0 0.0
    %v2248 = vand.u32 %v89, 4294901760
    %2249 = vmatpush1.msra.mxu0 %v2248
    %2250 = vmatprep.subr.mxu0 0.0
    %2251 = vmatpush2.msra.mxu0 0.0
    %2252 = vmatprep.subr.mxu0 0.0
    %2253 = vmatpush2.msra.mxu0 0.0
    %2254 = vmatprep.subr.mxu0 0.0
    %2255 = vmatpush2.msra.mxu0 0.0
    %2256 = vmatprep.subr.mxu0 0.0
    %2257 = vmatpush2.msra.mxu0 0.0
    %2258 = vmatprep.subr.mxu0 0.0
    %2259 = vmatpush2.msra.mxu0 0.0
    %2260 = vmatprep.subr.mxu0 0.0
    %2261 = vmatpush2.msra.mxu0 0.0
    %2262 = vmatprep.subr.mxu0 0.0
    %2263 = vmatpush2.msra.mxu0 0.0
    %2264 = vmatprep.subr.mxu0 0.0
    %2265 = vmatpush2.msra.mxu0 0.0
    %2266 = vmatprep.subr.mxu0 0.0
    %2267 = vmatpush2.msra.mxu0 0.0
    %2268 = vmatprep.subr.mxu0 0.0
    %2269 = vmatpush2.msra.mxu0 0.0
    %2270 = vmatprep.subr.mxu0 0.0
    %2271 = vmatpush2.msra.mxu0 0.0
    %2272 = vmatprep.subr.mxu0 0.0
    %2273 = vmatpush2.msra.mxu0 0.0
    %2274 = vmatprep.subr.mxu0 0.0
    %2275 = vmatpush2.msra.mxu0 0.0
    %2276 = vmatprep.subr.mxu0 0.0
    %2277 = vmatpush2.msra.mxu0 0.0
    %2278 = vmatprep.subr.mxu0 0.0
    %2279 = vmatpush2.msra.mxu0 0.0
    %2280 = vmatprep.subr.mxu0 0.0
    %2281 = vmatpush2.msra.mxu0 0.0
    %2282 = vmatprep.mubr.f32.mxu0 0.0
    %v2283 = vand.u32 %v126, 4294901760
    %v2284 = vsub.f32 %v126, %v2283
    %v2285 = vand.u32 %v2284, 4294901760
    %2286 = vmatmul.mubr.f32.gmra.mxu0 %v2285
    %v2287 = vpop.f32.mrf.mxu0
    %v2288 = vadd.f32 %v2199, %v2287
    %v2289 = vpop.f32.mrf.mxu0
    %2290 = vdwg.mxu0
    %2291 = vmatprep.subr.mxu0 0.0
    %v2292 = vand.u32 %v104, 4294901760
    %v2293 = vsub.f32 %v104, %v2292
    %v2294 = vand.u32 %v2293, 4294901760
    %2295 = vmatpush1.msra.mxu0 %v2294
    %2296 = vmatprep.subr.mxu0 0.0
    %v2297 = vand.u32 %v103, 4294901760
    %v2298 = vsub.f32 %v103, %v2297
    %v2299 = vand.u32 %v2298, 4294901760
    %2300 = vmatpush1.msra.mxu0 %v2299
    %2301 = vmatprep.subr.mxu0 0.0
    %v2302 = vand.u32 %v102, 4294901760
    %v2303 = vsub.f32 %v102, %v2302
    %v2304 = vand.u32 %v2303, 4294901760
    %2305 = vmatpush1.msra.mxu0 %v2304
    %2306 = vmatprep.subr.mxu0 0.0
    %v2307 = vand.u32 %v101, 4294901760
    %v2308 = vsub.f32 %v101, %v2307
    %v2309 = vand.u32 %v2308, 4294901760
    %2310 = vmatpush1.msra.mxu0 %v2309
    %2311 = vmatprep.subr.mxu0 0.0
    %v2312 = vand.u32 %v100, 4294901760
    %v2313 = vsub.f32 %v100, %v2312
    %v2314 = vand.u32 %v2313, 4294901760
    %2315 = vmatpush1.msra.mxu0 %v2314
    %2316 = vmatprep.subr.mxu0 0.0
    %v2317 = vand.u32 %v99, 4294901760
    %v2318 = vsub.f32 %v99, %v2317
    %v2319 = vand.u32 %v2318, 4294901760
    %2320 = vmatpush1.msra.mxu0 %v2319
    %2321 = vmatprep.subr.mxu0 0.0
    %v2322 = vand.u32 %v98, 4294901760
    %v2323 = vsub.f32 %v98, %v2322
    %v2324 = vand.u32 %v2323, 4294901760
    %2325 = vmatpush1.msra.mxu0 %v2324
    %2326 = vmatprep.subr.mxu0 0.0
    %v2327 = vand.u32 %v97, 4294901760
    %v2328 = vsub.f32 %v97, %v2327
    %v2329 = vand.u32 %v2328, 4294901760
    %2330 = vmatpush1.msra.mxu0 %v2329
    %2331 = vmatprep.subr.mxu0 0.0
    %v2332 = vand.u32 %v96, 4294901760
    %v2333 = vsub.f32 %v96, %v2332
    %v2334 = vand.u32 %v2333, 4294901760
    %2335 = vmatpush1.msra.mxu0 %v2334
    %2336 = vmatprep.subr.mxu0 0.0
    %v2337 = vand.u32 %v95, 4294901760
    %v2338 = vsub.f32 %v95, %v2337
    %v2339 = vand.u32 %v2338, 4294901760
    %2340 = vmatpush1.msra.mxu0 %v2339
    %2341 = vmatprep.subr.mxu0 0.0
    %v2342 = vand.u32 %v94, 4294901760
    %v2343 = vsub.f32 %v94, %v2342
    %v2344 = vand.u32 %v2343, 4294901760
    %2345 = vmatpush1.msra.mxu0 %v2344
    %2346 = vmatprep.subr.mxu0 0.0
    %v2347 = vand.u32 %v93, 4294901760
    %v2348 = vsub.f32 %v93, %v2347
    %v2349 = vand.u32 %v2348, 4294901760
    %2350 = vmatpush1.msra.mxu0 %v2349
    %2351 = vmatprep.subr.mxu0 0.0
    %v2352 = vand.u32 %v92, 4294901760
    %v2353 = vsub.f32 %v92, %v2352
    %v2354 = vand.u32 %v2353, 4294901760
    %2355 = vmatpush1.msra.mxu0 %v2354
    %2356 = vmatprep.subr.mxu0 0.0
    %v2357 = vand.u32 %v91, 4294901760
    %v2358 = vsub.f32 %v91, %v2357
    %v2359 = vand.u32 %v2358, 4294901760
    %2360 = vmatpush1.msra.mxu0 %v2359
    %2361 = vmatprep.subr.mxu0 0.0
    %v2362 = vand.u32 %v90, 4294901760
    %v2363 = vsub.f32 %v90, %v2362
    %v2364 = vand.u32 %v2363, 4294901760
    %2365 = vmatpush1.msra.mxu0 %v2364
    %2366 = vmatprep.subr.mxu0 0.0
    %v2367 = vand.u32 %v89, 4294901760
    %v2368 = vsub.f32 %v89, %v2367
    %v2369 = vand.u32 %v2368, 4294901760
    %2370 = vmatpush1.msra.mxu0 %v2369
    %2371 = vmatprep.subr.mxu0 0.0
    %2372 = vmatpush2.msra.mxu0 0.0
    %2373 = vmatprep.subr.mxu0 0.0
    %2374 = vmatpush2.msra.mxu0 0.0
    %2375 = vmatprep.subr.mxu0 0.0
    %2376 = vmatpush2.msra.mxu0 0.0
    %2377 = vmatprep.subr.mxu0 0.0
    %2378 = vmatpush2.msra.mxu0 0.0
    %2379 = vmatprep.subr.mxu0 0.0
    %2380 = vmatpush2.msra.mxu0 0.0
    %2381 = vmatprep.subr.mxu0 0.0
    %2382 = vmatpush2.msra.mxu0 0.0
    %2383 = vmatprep.subr.mxu0 0.0
    %2384 = vmatpush2.msra.mxu0 0.0
    %2385 = vmatprep.subr.mxu0 0.0
    %2386 = vmatpush2.msra.mxu0 0.0
    %2387 = vmatprep.subr.mxu0 0.0
    %2388 = vmatpush2.msra.mxu0 0.0
    %2389 = vmatprep.subr.mxu0 0.0
    %2390 = vmatpush2.msra.mxu0 0.0
    %2391 = vmatprep.subr.mxu0 0.0
    %2392 = vmatpush2.msra.mxu0 0.0
    %2393 = vmatprep.subr.mxu0 0.0
    %2394 = vmatpush2.msra.mxu0 0.0
    %2395 = vmatprep.subr.mxu0 0.0
    %2396 = vmatpush2.msra.mxu0 0.0
    %2397 = vmatprep.subr.mxu0 0.0
    %2398 = vmatpush2.msra.mxu0 0.0
    %2399 = vmatprep.subr.mxu0 0.0
    %2400 = vmatpush2.msra.mxu0 0.0
    %2401 = vmatprep.subr.mxu0 0.0
    %2402 = vmatpush2.msra.mxu0 0.0
    %2403 = vmatprep.mubr.f32.mxu0 0.0
    %v2404 = vand.u32 %v126, 4294901760
    %2405 = vmatmul.mubr.f32.gmra.mxu0 %v2404
    %v2406 = vpop.f32.mrf.mxu0
    %v2407 = vadd.f32 %v2288, %v2406
    %v2408 = vpop.f32.mrf.mxu0
    %2409 = vdwg.mxu0
    %2410 = vmatprep.subr.mxu0 0.0
    %v2411 = vand.u32 %v104, 4294901760
    %2412 = vmatpush1.msra.mxu0 %v2411
    %2413 = vmatprep.subr.mxu0 0.0
    %v2414 = vand.u32 %v103, 4294901760
    %2415 = vmatpush1.msra.mxu0 %v2414
    %2416 = vmatprep.subr.mxu0 0.0
    %v2417 = vand.u32 %v102, 4294901760
    %2418 = vmatpush1.msra.mxu0 %v2417
    %2419 = vmatprep.subr.mxu0 0.0
    %v2420 = vand.u32 %v101, 4294901760
    %2421 = vmatpush1.msra.mxu0 %v2420
    %2422 = vmatprep.subr.mxu0 0.0
    %v2423 = vand.u32 %v100, 4294901760
    %2424 = vmatpush1.msra.mxu0 %v2423
    %2425 = vmatprep.subr.mxu0 0.0
    %v2426 = vand.u32 %v99, 4294901760
    %2427 = vmatpush1.msra.mxu0 %v2426
    %2428 = vmatprep.subr.mxu0 0.0
    %v2429 = vand.u32 %v98, 4294901760
    %2430 = vmatpush1.msra.mxu0 %v2429
    %2431 = vmatprep.subr.mxu0 0.0
    %v2432 = vand.u32 %v97, 4294901760
    %2433 = vmatpush1.msra.mxu0 %v2432
    %2434 = vmatprep.subr.mxu0 0.0
    %v2435 = vand.u32 %v96, 4294901760
    %2436 = vmatpush1.msra.mxu0 %v2435
    %2437 = vmatprep.subr.mxu0 0.0
    %v2438 = vand.u32 %v95, 4294901760
    %2439 = vmatpush1.msra.mxu0 %v2438
    %2440 = vmatprep.subr.mxu0 0.0
    %v2441 = vand.u32 %v94, 4294901760
    %2442 = vmatpush1.msra.mxu0 %v2441
    %2443 = vmatprep.subr.mxu0 0.0
    %v2444 = vand.u32 %v93, 4294901760
    %2445 = vmatpush1.msra.mxu0 %v2444
    %2446 = vmatprep.subr.mxu0 0.0
    %v2447 = vand.u32 %v92, 4294901760
    %2448 = vmatpush1.msra.mxu0 %v2447
    %2449 = vmatprep.subr.mxu0 0.0
    %v2450 = vand.u32 %v91, 4294901760
    %2451 = vmatpush1.msra.mxu0 %v2450
    %2452 = vmatprep.subr.mxu0 0.0
    %v2453 = vand.u32 %v90, 4294901760
    %2454 = vmatpush1.msra.mxu0 %v2453
    %2455 = vmatprep.subr.mxu0 0.0
    %v2456 = vand.u32 %v89, 4294901760
    %2457 = vmatpush1.msra.mxu0 %v2456
    %2458 = vmatprep.subr.mxu0 0.0
    %2459 = vmatpush2.msra.mxu0 0.0
    %2460 = vmatprep.subr.mxu0 0.0
    %2461 = vmatpush2.msra.mxu0 0.0
    %2462 = vmatprep.subr.mxu0 0.0
    %2463 = vmatpush2.msra.mxu0 0.0
    %2464 = vmatprep.subr.mxu0 0.0
    %2465 = vmatpush2.msra.mxu0 0.0
    %2466 = vmatprep.subr.mxu0 0.0
    %2467 = vmatpush2.msra.mxu0 0.0
    %2468 = vmatprep.subr.mxu0 0.0
    %2469 = vmatpush2.msra.mxu0 0.0
    %2470 = vmatprep.subr.mxu0 0.0
    %2471 = vmatpush2.msra.mxu0 0.0
    %2472 = vmatprep.subr.mxu0 0.0
    %2473 = vmatpush2.msra.mxu0 0.0
    %2474 = vmatprep.subr.mxu0 0.0
    %2475 = vmatpush2.msra.mxu0 0.0
    %2476 = vmatprep.subr.mxu0 0.0
    %2477 = vmatpush2.msra.mxu0 0.0
    %2478 = vmatprep.subr.mxu0 0.0
    %2479 = vmatpush2.msra.mxu0 0.0
    %2480 = vmatprep.subr.mxu0 0.0
    %2481 = vmatpush2.msra.mxu0 0.0
    %2482 = vmatprep.subr.mxu0 0.0
    %2483 = vmatpush2.msra.mxu0 0.0
    %2484 = vmatprep.subr.mxu0 0.0
    %2485 = vmatpush2.msra.mxu0 0.0
    %2486 = vmatprep.subr.mxu0 0.0
    %2487 = vmatpush2.msra.mxu0 0.0
    %2488 = vmatprep.subr.mxu0 0.0
    %2489 = vmatpush2.msra.mxu0 0.0
    %2490 = vmatprep.mubr.f32.mxu0 0.0
    %v2491 = vand.u32 %v126, 4294901760
    %2492 = vmatmul.mubr.f32.gmra.mxu0 %v2491
    %v2493 = vpop.f32.mrf.mxu0
    %v2494 = vadd.f32 %v2407, %v2493
    %v2495 = vpop.f32.mrf.mxu0
    %2496 = vdwg.mxu0
    %v2497 = vxor.u32 %v2494, 2147483648
    %v2498 = vmul.f32 %v2497, 1.442695
    %v2499 = vpow.pop %v2498
    %v2500 = vadd.f32 %v2499, 1.0
    %v2501 = vrcp.pop %v2500
    %v2502 = vmul.f32 1.0, %v2501
    %v2504 = vlaneseq
    %v2505 = vshrl.u32 %v2504, 7
    %v2506 = vsub.s32 0, %v2505
    %v2507 = vrot.slane %v23, %v2506
    %v2508 = vlaneseq
    %v2509 = vshrl.u32 %v2508, 7
    %v2510 = vsub.s32 1, %v2509
    %v2511 = vrot.slane %v23, %v2510
    %v2512 = vlaneseq
    %v2513 = vshrl.u32 %v2512, 7
    %v2514 = vsub.s32 2, %v2513
    %v2515 = vrot.slane %v23, %v2514
    %v2516 = vlaneseq
    %v2517 = vshrl.u32 %v2516, 7
    %v2518 = vsub.s32 3, %v2517
    %v2519 = vrot.slane %v23, %v2518
    %v2520 = vlaneseq
    %v2521 = vshrl.u32 %v2520, 7
    %v2522 = vsub.s32 4, %v2521
    %v2523 = vrot.slane %v23, %v2522
    %2529 = vmatprep.subr.mxu0 0.0
    %v2530 = vand.u32 %v40, 4294901760
    %2531 = vmatpush1.msra.mxu0 %v2530
    %2532 = vmatprep.subr.mxu0 0.0
    %v2533 = vand.u32 %v39, 4294901760
    %2534 = vmatpush1.msra.mxu0 %v2533
    %2535 = vmatprep.subr.mxu0 0.0
    %v2536 = vand.u32 %v38, 4294901760
    %2537 = vmatpush1.msra.mxu0 %v2536
    %2538 = vmatprep.subr.mxu0 0.0
    %v2539 = vand.u32 %v37, 4294901760
    %2540 = vmatpush1.msra.mxu0 %v2539
    %2541 = vmatprep.subr.mxu0 0.0
    %v2542 = vand.u32 %v36, 4294901760
    %2543 = vmatpush1.msra.mxu0 %v2542
    %2544 = vmatprep.subr.mxu0 0.0
    %v2545 = vand.u32 %v35, 4294901760
    %2546 = vmatpush1.msra.mxu0 %v2545
    %2547 = vmatprep.subr.mxu0 0.0
    %v2548 = vand.u32 %v34, 4294901760
    %2549 = vmatpush1.msra.mxu0 %v2548
    %2550 = vmatprep.subr.mxu0 0.0
    %v2551 = vand.u32 %v33, 4294901760
    %2552 = vmatpush1.msra.mxu0 %v2551
    %2553 = vmatprep.subr.mxu0 0.0
    %v2554 = vand.u32 %v32, 4294901760
    %2555 = vmatpush1.msra.mxu0 %v2554
    %2556 = vmatprep.subr.mxu0 0.0
    %v2557 = vand.u32 %v31, 4294901760
    %2558 = vmatpush1.msra.mxu0 %v2557
    %2559 = vmatprep.subr.mxu0 0.0
    %v2560 = vand.u32 %v30, 4294901760
    %2561 = vmatpush1.msra.mxu0 %v2560
    %2562 = vmatprep.subr.mxu0 0.0
    %v2563 = vand.u32 %v29, 4294901760
    %2564 = vmatpush1.msra.mxu0 %v2563
    %2565 = vmatprep.subr.mxu0 0.0
    %v2566 = vand.u32 %v28, 4294901760
    %2567 = vmatpush1.msra.mxu0 %v2566
    %2568 = vmatprep.subr.mxu0 0.0
    %v2569 = vand.u32 %v27, 4294901760
    %2570 = vmatpush1.msra.mxu0 %v2569
    %2571 = vmatprep.subr.mxu0 0.0
    %v2572 = vand.u32 %v26, 4294901760
    %2573 = vmatpush1.msra.mxu0 %v2572
    %2574 = vmatprep.subr.mxu0 0.0
    %v2575 = vand.u32 %v25, 4294901760
    %2576 = vmatpush1.msra.mxu0 %v2575
    %2577 = vmatprep.subr.mxu0 0.0
    %v2578 = vand.u32 %v56, 4294901760
    %2579 = vmatpush2.msra.mxu0 %v2578
    %2580 = vmatprep.subr.mxu0 0.0
    %v2581 = vand.u32 %v55, 4294901760
    %2582 = vmatpush2.msra.mxu0 %v2581
    %2583 = vmatprep.subr.mxu0 0.0
    %v2584 = vand.u32 %v54, 4294901760
    %2585 = vmatpush2.msra.mxu0 %v2584
    %2586 = vmatprep.subr.mxu0 0.0
    %v2587 = vand.u32 %v53, 4294901760
    %2588 = vmatpush2.msra.mxu0 %v2587
    %2589 = vmatprep.subr.mxu0 0.0
    %v2590 = vand.u32 %v52, 4294901760
    %2591 = vmatpush2.msra.mxu0 %v2590
    %2592 = vmatprep.subr.mxu0 0.0
    %v2593 = vand.u32 %v51, 4294901760
    %2594 = vmatpush2.msra.mxu0 %v2593
    %2595 = vmatprep.subr.mxu0 0.0
    %v2596 = vand.u32 %v50, 4294901760
    %2597 = vmatpush2.msra.mxu0 %v2596
    %2598 = vmatprep.subr.mxu0 0.0
    %v2599 = vand.u32 %v49, 4294901760
    %2600 = vmatpush2.msra.mxu0 %v2599
    %2601 = vmatprep.subr.mxu0 0.0
    %v2602 = vand.u32 %v48, 4294901760
    %2603 = vmatpush2.msra.mxu0 %v2602
    %2604 = vmatprep.subr.mxu0 0.0
    %v2605 = vand.u32 %v47, 4294901760
    %2606 = vmatpush2.msra.mxu0 %v2605
    %2607 = vmatprep.subr.mxu0 0.0
    %v2608 = vand.u32 %v46, 4294901760
    %2609 = vmatpush2.msra.mxu0 %v2608
    %2610 = vmatprep.subr.mxu0 0.0
    %v2611 = vand.u32 %v45, 4294901760
    %2612 = vmatpush2.msra.mxu0 %v2611
    %2613 = vmatprep.subr.mxu0 0.0
    %v2614 = vand.u32 %v44, 4294901760
    %2615 = vmatpush2.msra.mxu0 %v2614
    %2616 = vmatprep.subr.mxu0 0.0
    %v2617 = vand.u32 %v43, 4294901760
    %2618 = vmatpush2.msra.mxu0 %v2617
    %2619 = vmatprep.subr.mxu0 0.0
    %v2620 = vand.u32 %v42, 4294901760
    %2621 = vmatpush2.msra.mxu0 %v2620
    %2622 = vmatprep.subr.mxu0 0.0
    %v2623 = vand.u32 %v41, 4294901760
    %2624 = vmatpush2.msra.mxu0 %v2623
    %v2625 = vand.u32 %v2511, 4294901760
    %v2626 = vsub.f32 %v2511, %v2625
    %v2627 = vand.u32 %v2626, 4294901760
    %v2628 = vsub.f32 %v2626, %v2627
    %v2629 = vand.u32 %v2628, 4294901760
    %2630 = vmatprep.mubr.f32.mxu0 %v2629
    %v2631 = vand.u32 %v2507, 4294901760
    %v2632 = vsub.f32 %v2507, %v2631
    %v2633 = vand.u32 %v2632, 4294901760
    %v2634 = vsub.f32 %v2632, %v2633
    %v2635 = vand.u32 %v2634, 4294901760
    %2636 = vmatmul.mubr.f32.gmra.mxu0 %v2635
    %v2637 = vpop.f32.mrf.mxu0
    %v2638 = vadd.f32 %v105, %v2637
    %v2639 = vpop.f32.mrf.mxu0
    %2640 = vdwg.mxu0
    %2641 = vmatprep.subr.mxu0 0.0
    %v2642 = vand.u32 %v40, 4294901760
    %v2643 = vsub.f32 %v40, %v2642
    %v2644 = vand.u32 %v2643, 4294901760
    %v2645 = vsub.f32 %v2643, %v2644
    %v2646 = vand.u32 %v2645, 4294901760
    %2647 = vmatpush1.msra.mxu0 %v2646
    %2648 = vmatprep.subr.mxu0 0.0
    %v2649 = vand.u32 %v39, 4294901760
    %v2650 = vsub.f32 %v39, %v2649
    %v2651 = vand.u32 %v2650, 4294901760
    %v2652 = vsub.f32 %v2650, %v2651
    %v2653 = vand.u32 %v2652, 4294901760
    %2654 = vmatpush1.msra.mxu0 %v2653
    %2655 = vmatprep.subr.mxu0 0.0
    %v2656 = vand.u32 %v38, 4294901760
    %v2657 = vsub.f32 %v38, %v2656
    %v2658 = vand.u32 %v2657, 4294901760
    %v2659 = vsub.f32 %v2657, %v2658
    %v2660 = vand.u32 %v2659, 4294901760
    %2661 = vmatpush1.msra.mxu0 %v2660
    %2662 = vmatprep.subr.mxu0 0.0
    %v2663 = vand.u32 %v37, 4294901760
    %v2664 = vsub.f32 %v37, %v2663
    %v2665 = vand.u32 %v2664, 4294901760
    %v2666 = vsub.f32 %v2664, %v2665
    %v2667 = vand.u32 %v2666, 4294901760
    %2668 = vmatpush1.msra.mxu0 %v2667
    %2669 = vmatprep.subr.mxu0 0.0
    %v2670 = vand.u32 %v36, 4294901760
    %v2671 = vsub.f32 %v36, %v2670
    %v2672 = vand.u32 %v2671, 4294901760
    %v2673 = vsub.f32 %v2671, %v2672
    %v2674 = vand.u32 %v2673, 4294901760
    %2675 = vmatpush1.msra.mxu0 %v2674
    %2676 = vmatprep.subr.mxu0 0.0
    %v2677 = vand.u32 %v35, 4294901760
    %v2678 = vsub.f32 %v35, %v2677
    %v2679 = vand.u32 %v2678, 4294901760
    %v2680 = vsub.f32 %v2678, %v2679
    %v2681 = vand.u32 %v2680, 4294901760
    %2682 = vmatpush1.msra.mxu0 %v2681
    %2683 = vmatprep.subr.mxu0 0.0
    %v2684 = vand.u32 %v34, 4294901760
    %v2685 = vsub.f32 %v34, %v2684
    %v2686 = vand.u32 %v2685, 4294901760
    %v2687 = vsub.f32 %v2685, %v2686
    %v2688 = vand.u32 %v2687, 4294901760
    %2689 = vmatpush1.msra.mxu0 %v2688
    %2690 = vmatprep.subr.mxu0 0.0
    %v2691 = vand.u32 %v33, 4294901760
    %v2692 = vsub.f32 %v33, %v2691
    %v2693 = vand.u32 %v2692, 4294901760
    %v2694 = vsub.f32 %v2692, %v2693
    %v2695 = vand.u32 %v2694, 4294901760
    %2696 = vmatpush1.msra.mxu0 %v2695
    %2697 = vmatprep.subr.mxu0 0.0
    %v2698 = vand.u32 %v32, 4294901760
    %v2699 = vsub.f32 %v32, %v2698
    %v2700 = vand.u32 %v2699, 4294901760
    %v2701 = vsub.f32 %v2699, %v2700
    %v2702 = vand.u32 %v2701, 4294901760
    %2703 = vmatpush1.msra.mxu0 %v2702
    %2704 = vmatprep.subr.mxu0 0.0
    %v2705 = vand.u32 %v31, 4294901760
    %v2706 = vsub.f32 %v31, %v2705
    %v2707 = vand.u32 %v2706, 4294901760
    %v2708 = vsub.f32 %v2706, %v2707
    %v2709 = vand.u32 %v2708, 4294901760
    %2710 = vmatpush1.msra.mxu0 %v2709
    %2711 = vmatprep.subr.mxu0 0.0
    %v2712 = vand.u32 %v30, 4294901760
    %v2713 = vsub.f32 %v30, %v2712
    %v2714 = vand.u32 %v2713, 4294901760
    %v2715 = vsub.f32 %v2713, %v2714
    %v2716 = vand.u32 %v2715, 4294901760
    %2717 = vmatpush1.msra.mxu0 %v2716
    %2718 = vmatprep.subr.mxu0 0.0
    %v2719 = vand.u32 %v29, 4294901760
    %v2720 = vsub.f32 %v29, %v2719
    %v2721 = vand.u32 %v2720, 4294901760
    %v2722 = vsub.f32 %v2720, %v2721
    %v2723 = vand.u32 %v2722, 4294901760
    %2724 = vmatpush1.msra.mxu0 %v2723
    %2725 = vmatprep.subr.mxu0 0.0
    %v2726 = vand.u32 %v28, 4294901760
    %v2727 = vsub.f32 %v28, %v2726
    %v2728 = vand.u32 %v2727, 4294901760
    %v2729 = vsub.f32 %v2727, %v2728
    %v2730 = vand.u32 %v2729, 4294901760
    %2731 = vmatpush1.msra.mxu0 %v2730
    %2732 = vmatprep.subr.mxu0 0.0
    %v2733 = vand.u32 %v27, 4294901760
    %v2734 = vsub.f32 %v27, %v2733
    %v2735 = vand.u32 %v2734, 4294901760
    %v2736 = vsub.f32 %v2734, %v2735
    %v2737 = vand.u32 %v2736, 4294901760
    %2738 = vmatpush1.msra.mxu0 %v2737
    %2739 = vmatprep.subr.mxu0 0.0
    %v2740 = vand.u32 %v26, 4294901760
    %v2741 = vsub.f32 %v26, %v2740
    %v2742 = vand.u32 %v2741, 4294901760
    %v2743 = vsub.f32 %v2741, %v2742
    %v2744 = vand.u32 %v2743, 4294901760
    %2745 = vmatpush1.msra.mxu0 %v2744
    %2746 = vmatprep.subr.mxu0 0.0
    %v2747 = vand.u32 %v25, 4294901760
    %v2748 = vsub.f32 %v25, %v2747
    %v2749 = vand.u32 %v2748, 4294901760
    %v2750 = vsub.f32 %v2748, %v2749
    %v2751 = vand.u32 %v2750, 4294901760
    %2752 = vmatpush1.msra.mxu0 %v2751
    %2753 = vmatprep.subr.mxu0 0.0
    %v2754 = vand.u32 %v56, 4294901760
    %v2755 = vsub.f32 %v56, %v2754
    %v2756 = vand.u32 %v2755, 4294901760
    %v2757 = vsub.f32 %v2755, %v2756
    %v2758 = vand.u32 %v2757, 4294901760
    %2759 = vmatpush2.msra.mxu0 %v2758
    %2760 = vmatprep.subr.mxu0 0.0
    %v2761 = vand.u32 %v55, 4294901760
    %v2762 = vsub.f32 %v55, %v2761
    %v2763 = vand.u32 %v2762, 4294901760
    %v2764 = vsub.f32 %v2762, %v2763
    %v2765 = vand.u32 %v2764, 4294901760
    %2766 = vmatpush2.msra.mxu0 %v2765
    %2767 = vmatprep.subr.mxu0 0.0
    %v2768 = vand.u32 %v54, 4294901760
    %v2769 = vsub.f32 %v54, %v2768
    %v2770 = vand.u32 %v2769, 4294901760
    %v2771 = vsub.f32 %v2769, %v2770
    %v2772 = vand.u32 %v2771, 4294901760
    %2773 = vmatpush2.msra.mxu0 %v2772
    %2774 = vmatprep.subr.mxu0 0.0
    %v2775 = vand.u32 %v53, 4294901760
    %v2776 = vsub.f32 %v53, %v2775
    %v2777 = vand.u32 %v2776, 4294901760
    %v2778 = vsub.f32 %v2776, %v2777
    %v2779 = vand.u32 %v2778, 4294901760
    %2780 = vmatpush2.msra.mxu0 %v2779
    %2781 = vmatprep.subr.mxu0 0.0
    %v2782 = vand.u32 %v52, 4294901760
    %v2783 = vsub.f32 %v52, %v2782
    %v2784 = vand.u32 %v2783, 4294901760
    %v2785 = vsub.f32 %v2783, %v2784
    %v2786 = vand.u32 %v2785, 4294901760
    %2787 = vmatpush2.msra.mxu0 %v2786
    %2788 = vmatprep.subr.mxu0 0.0
    %v2789 = vand.u32 %v51, 4294901760
    %v2790 = vsub.f32 %v51, %v2789
    %v2791 = vand.u32 %v2790, 4294901760
    %v2792 = vsub.f32 %v2790, %v2791
    %v2793 = vand.u32 %v2792, 4294901760
    %2794 = vmatpush2.msra.mxu0 %v2793
    %2795 = vmatprep.subr.mxu0 0.0
    %v2796 = vand.u32 %v50, 4294901760
    %v2797 = vsub.f32 %v50, %v2796
    %v2798 = vand.u32 %v2797, 4294901760
    %v2799 = vsub.f32 %v2797, %v2798
    %v2800 = vand.u32 %v2799, 4294901760
    %2801 = vmatpush2.msra.mxu0 %v2800
    %2802 = vmatprep.subr.mxu0 0.0
    %v2803 = vand.u32 %v49, 4294901760
    %v2804 = vsub.f32 %v49, %v2803
    %v2805 = vand.u32 %v2804, 4294901760
    %v2806 = vsub.f32 %v2804, %v2805
    %v2807 = vand.u32 %v2806, 4294901760
    %2808 = vmatpush2.msra.mxu0 %v2807
    %2809 = vmatprep.subr.mxu0 0.0
    %v2810 = vand.u32 %v48, 4294901760
    %v2811 = vsub.f32 %v48, %v2810
    %v2812 = vand.u32 %v2811, 4294901760
    %v2813 = vsub.f32 %v2811, %v2812
    %v2814 = vand.u32 %v2813, 4294901760
    %2815 = vmatpush2.msra.mxu0 %v2814
    %2816 = vmatprep.subr.mxu0 0.0
    %v2817 = vand.u32 %v47, 4294901760
    %v2818 = vsub.f32 %v47, %v2817
    %v2819 = vand.u32 %v2818, 4294901760
    %v2820 = vsub.f32 %v2818, %v2819
    %v2821 = vand.u32 %v2820, 4294901760
    %2822 = vmatpush2.msra.mxu0 %v2821
    %2823 = vmatprep.subr.mxu0 0.0
    %v2824 = vand.u32 %v46, 4294901760
    %v2825 = vsub.f32 %v46, %v2824
    %v2826 = vand.u32 %v2825, 4294901760
    %v2827 = vsub.f32 %v2825, %v2826
    %v2828 = vand.u32 %v2827, 4294901760
    %2829 = vmatpush2.msra.mxu0 %v2828
    %2830 = vmatprep.subr.mxu0 0.0
    %v2831 = vand.u32 %v45, 4294901760
    %v2832 = vsub.f32 %v45, %v2831
    %v2833 = vand.u32 %v2832, 4294901760
    %v2834 = vsub.f32 %v2832, %v2833
    %v2835 = vand.u32 %v2834, 4294901760
    %2836 = vmatpush2.msra.mxu0 %v2835
    %2837 = vmatprep.subr.mxu0 0.0
    %v2838 = vand.u32 %v44, 4294901760
    %v2839 = vsub.f32 %v44, %v2838
    %v2840 = vand.u32 %v2839, 4294901760
    %v2841 = vsub.f32 %v2839, %v2840
    %v2842 = vand.u32 %v2841, 4294901760
    %2843 = vmatpush2.msra.mxu0 %v2842
    %2844 = vmatprep.subr.mxu0 0.0
    %v2845 = vand.u32 %v43, 4294901760
    %v2846 = vsub.f32 %v43, %v2845
    %v2847 = vand.u32 %v2846, 4294901760
    %v2848 = vsub.f32 %v2846, %v2847
    %v2849 = vand.u32 %v2848, 4294901760
    %2850 = vmatpush2.msra.mxu0 %v2849
    %2851 = vmatprep.subr.mxu0 0.0
    %v2852 = vand.u32 %v42, 4294901760
    %v2853 = vsub.f32 %v42, %v2852
    %v2854 = vand.u32 %v2853, 4294901760
    %v2855 = vsub.f32 %v2853, %v2854
    %v2856 = vand.u32 %v2855, 4294901760
    %2857 = vmatpush2.msra.mxu0 %v2856
    %2858 = vmatprep.subr.mxu0 0.0
    %v2859 = vand.u32 %v41, 4294901760
    %v2860 = vsub.f32 %v41, %v2859
    %v2861 = vand.u32 %v2860, 4294901760
    %v2862 = vsub.f32 %v2860, %v2861
    %v2863 = vand.u32 %v2862, 4294901760
    %2864 = vmatpush2.msra.mxu0 %v2863
    %v2865 = vand.u32 %v2511, 4294901760
    %2866 = vmatprep.mubr.f32.mxu0 %v2865
    %v2867 = vand.u32 %v2507, 4294901760
    %2868 = vmatmul.mubr.f32.gmra.mxu0 %v2867
    %v2869 = vpop.f32.mrf.mxu0
    %v2870 = vadd.f32 %v2638, %v2869
    %v2871 = vpop.f32.mrf.mxu0
    %2872 = vdwg.mxu0
    %2873 = vmatprep.subr.mxu0 0.0
    %v2874 = vand.u32 %v40, 4294901760
    %v2875 = vsub.f32 %v40, %v2874
    %2876 = vmatpush1.msra.mxu0 %v2875
    %2877 = vmatprep.subr.mxu0 0.0
    %v2878 = vand.u32 %v39, 4294901760
    %v2879 = vsub.f32 %v39, %v2878
    %2880 = vmatpush1.msra.mxu0 %v2879
    %2881 = vmatprep.subr.mxu0 0.0
    %v2882 = vand.u32 %v38, 4294901760
    %v2883 = vsub.f32 %v38, %v2882
    %2884 = vmatpush1.msra.mxu0 %v2883
    %2885 = vmatprep.subr.mxu0 0.0
    %v2886 = vand.u32 %v37, 4294901760
    %v2887 = vsub.f32 %v37, %v2886
    %2888 = vmatpush1.msra.mxu0 %v2887
    %2889 = vmatprep.subr.mxu0 0.0
    %v2890 = vand.u32 %v36, 4294901760
    %v2891 = vsub.f32 %v36, %v2890
    %2892 = vmatpush1.msra.mxu0 %v2891
    %2893 = vmatprep.subr.mxu0 0.0
    %v2894 = vand.u32 %v35, 4294901760
    %v2895 = vsub.f32 %v35, %v2894
    %2896 = vmatpush1.msra.mxu0 %v2895
    %2897 = vmatprep.subr.mxu0 0.0
    %v2898 = vand.u32 %v34, 4294901760
    %v2899 = vsub.f32 %v34, %v2898
    %2900 = vmatpush1.msra.mxu0 %v2899
    %2901 = vmatprep.subr.mxu0 0.0
    %v2902 = vand.u32 %v33, 4294901760
    %v2903 = vsub.f32 %v33, %v2902
    %2904 = vmatpush1.msra.mxu0 %v2903
    %2905 = vmatprep.subr.mxu0 0.0
    %v2906 = vand.u32 %v32, 4294901760
    %v2907 = vsub.f32 %v32, %v2906
    %2908 = vmatpush1.msra.mxu0 %v2907
    %2909 = vmatprep.subr.mxu0 0.0
    %v2910 = vand.u32 %v31, 4294901760
    %v2911 = vsub.f32 %v31, %v2910
    %2912 = vmatpush1.msra.mxu0 %v2911
    %2913 = vmatprep.subr.mxu0 0.0
    %v2914 = vand.u32 %v30, 4294901760
    %v2915 = vsub.f32 %v30, %v2914
    %2916 = vmatpush1.msra.mxu0 %v2915
    %2917 = vmatprep.subr.mxu0 0.0
    %v2918 = vand.u32 %v29, 4294901760
    %v2919 = vsub.f32 %v29, %v2918
    %2920 = vmatpush1.msra.mxu0 %v2919
    %2921 = vmatprep.subr.mxu0 0.0
    %v2922 = vand.u32 %v28, 4294901760
    %v2923 = vsub.f32 %v28, %v2922
    %2924 = vmatpush1.msra.mxu0 %v2923
    %2925 = vmatprep.subr.mxu0 0.0
    %v2926 = vand.u32 %v27, 4294901760
    %v2927 = vsub.f32 %v27, %v2926
    %2928 = vmatpush1.msra.mxu0 %v2927
    %2929 = vmatprep.subr.mxu0 0.0
    %v2930 = vand.u32 %v26, 4294901760
    %v2931 = vsub.f32 %v26, %v2930
    %2932 = vmatpush1.msra.mxu0 %v2931
    %2933 = vmatprep.subr.mxu0 0.0
    %v2934 = vand.u32 %v25, 4294901760
    %v2935 = vsub.f32 %v25, %v2934
    %2936 = vmatpush1.msra.mxu0 %v2935
    %2937 = vmatprep.subr.mxu0 0.0
    %v2938 = vand.u32 %v56, 4294901760
    %v2939 = vsub.f32 %v56, %v2938
    %2940 = vmatpush2.msra.mxu0 %v2939
    %2941 = vmatprep.subr.mxu0 0.0
    %v2942 = vand.u32 %v55, 4294901760
    %v2943 = vsub.f32 %v55, %v2942
    %2944 = vmatpush2.msra.mxu0 %v2943
    %2945 = vmatprep.subr.mxu0 0.0
    %v2946 = vand.u32 %v54, 4294901760
    %v2947 = vsub.f32 %v54, %v2946
    %2948 = vmatpush2.msra.mxu0 %v2947
    %2949 = vmatprep.subr.mxu0 0.0
    %v2950 = vand.u32 %v53, 4294901760
    %v2951 = vsub.f32 %v53, %v2950
    %2952 = vmatpush2.msra.mxu0 %v2951
    %2953 = vmatprep.subr.mxu0 0.0
    %v2954 = vand.u32 %v52, 4294901760
    %v2955 = vsub.f32 %v52, %v2954
    %2956 = vmatpush2.msra.mxu0 %v2955
    %2957 = vmatprep.subr.mxu0 0.0
    %v2958 = vand.u32 %v51, 4294901760
    %v2959 = vsub.f32 %v51, %v2958
    %2960 = vmatpush2.msra.mxu0 %v2959
    %2961 = vmatprep.subr.mxu0 0.0
    %v2962 = vand.u32 %v50, 4294901760
    %v2963 = vsub.f32 %v50, %v2962
    %2964 = vmatpush2.msra.mxu0 %v2963
    %2965 = vmatprep.subr.mxu0 0.0
    %v2966 = vand.u32 %v49, 4294901760
    %v2967 = vsub.f32 %v49, %v2966
    %2968 = vmatpush2.msra.mxu0 %v2967
    %2969 = vmatprep.subr.mxu0 0.0
    %v2970 = vand.u32 %v48, 4294901760
    %v2971 = vsub.f32 %v48, %v2970
    %2972 = vmatpush2.msra.mxu0 %v2971
    %2973 = vmatprep.subr.mxu0 0.0
    %v2974 = vand.u32 %v47, 4294901760
    %v2975 = vsub.f32 %v47, %v2974
    %2976 = vmatpush2.msra.mxu0 %v2975
    %2977 = vmatprep.subr.mxu0 0.0
    %v2978 = vand.u32 %v46, 4294901760
    %v2979 = vsub.f32 %v46, %v2978
    %2980 = vmatpush2.msra.mxu0 %v2979
    %2981 = vmatprep.subr.mxu0 0.0
    %v2982 = vand.u32 %v45, 4294901760
    %v2983 = vsub.f32 %v45, %v2982
    %2984 = vmatpush2.msra.mxu0 %v2983
    %2985 = vmatprep.subr.mxu0 0.0
    %v2986 = vand.u32 %v44, 4294901760
    %v2987 = vsub.f32 %v44, %v2986
    %2988 = vmatpush2.msra.mxu0 %v2987
    %2989 = vmatprep.subr.mxu0 0.0
    %v2990 = vand.u32 %v43, 4294901760
    %v2991 = vsub.f32 %v43, %v2990
    %2992 = vmatpush2.msra.mxu0 %v2991
    %2993 = vmatprep.subr.mxu0 0.0
    %v2994 = vand.u32 %v42, 4294901760
    %v2995 = vsub.f32 %v42, %v2994
    %2996 = vmatpush2.msra.mxu0 %v2995
    %2997 = vmatprep.subr.mxu0 0.0
    %v2998 = vand.u32 %v41, 4294901760
    %v2999 = vsub.f32 %v41, %v2998
    %3000 = vmatpush2.msra.mxu0 %v2999
    %v3001 = vand.u32 %v2511, 4294901760
    %v3002 = vsub.f32 %v2511, %v3001
    %3003 = vmatprep.mubr.f32.mxu0 %v3002
    %v3004 = vand.u32 %v2507, 4294901760
    %v3005 = vsub.f32 %v2507, %v3004
    %3006 = vmatmul.mubr.f32.gmra.mxu0 %v3005
    %v3007 = vpop.f32.mrf.mxu0
    %v3008 = vadd.f32 %v2870, %v3007
    %v3009 = vpop.f32.mrf.mxu0
    %3010 = vdwg.mxu0
    %3011 = vmatprep.subr.mxu0 0.0
    %v3012 = vand.u32 %v40, 4294901760
    %3013 = vmatpush1.msra.mxu0 %v3012
    %3014 = vmatprep.subr.mxu0 0.0
    %v3015 = vand.u32 %v39, 4294901760
    %3016 = vmatpush1.msra.mxu0 %v3015
    %3017 = vmatprep.subr.mxu0 0.0
    %v3018 = vand.u32 %v38, 4294901760
    %3019 = vmatpush1.msra.mxu0 %v3018
    %3020 = vmatprep.subr.mxu0 0.0
    %v3021 = vand.u32 %v37, 4294901760
    %3022 = vmatpush1.msra.mxu0 %v3021
    %3023 = vmatprep.subr.mxu0 0.0
    %v3024 = vand.u32 %v36, 4294901760
    %3025 = vmatpush1.msra.mxu0 %v3024
    %3026 = vmatprep.subr.mxu0 0.0
    %v3027 = vand.u32 %v35, 4294901760
    %3028 = vmatpush1.msra.mxu0 %v3027
    %3029 = vmatprep.subr.mxu0 0.0
    %v3030 = vand.u32 %v34, 4294901760
    %3031 = vmatpush1.msra.mxu0 %v3030
    %3032 = vmatprep.subr.mxu0 0.0
    %v3033 = vand.u32 %v33, 4294901760
    %3034 = vmatpush1.msra.mxu0 %v3033
    %3035 = vmatprep.subr.mxu0 0.0
    %v3036 = vand.u32 %v32, 4294901760
    %3037 = vmatpush1.msra.mxu0 %v3036
    %3038 = vmatprep.subr.mxu0 0.0
    %v3039 = vand.u32 %v31, 4294901760
    %3040 = vmatpush1.msra.mxu0 %v3039
    %3041 = vmatprep.subr.mxu0 0.0
    %v3042 = vand.u32 %v30, 4294901760
    %3043 = vmatpush1.msra.mxu0 %v3042
    %3044 = vmatprep.subr.mxu0 0.0
    %v3045 = vand.u32 %v29, 4294901760
    %3046 = vmatpush1.msra.mxu0 %v3045
    %3047 = vmatprep.subr.mxu0 0.0
    %v3048 = vand.u32 %v28, 4294901760
    %3049 = vmatpush1.msra.mxu0 %v3048
    %3050 = vmatprep.subr.mxu0 0.0
    %v3051 = vand.u32 %v27, 4294901760
    %3052 = vmatpush1.msra.mxu0 %v3051
    %3053 = vmatprep.subr.mxu0 0.0
    %v3054 = vand.u32 %v26, 4294901760
    %3055 = vmatpush1.msra.mxu0 %v3054
    %3056 = vmatprep.subr.mxu0 0.0
    %v3057 = vand.u32 %v25, 4294901760
    %3058 = vmatpush1.msra.mxu0 %v3057
    %3059 = vmatprep.subr.mxu0 0.0
    %v3060 = vand.u32 %v56, 4294901760
    %3061 = vmatpush2.msra.mxu0 %v3060
    %3062 = vmatprep.subr.mxu0 0.0
    %v3063 = vand.u32 %v55, 4294901760
    %3064 = vmatpush2.msra.mxu0 %v3063
    %3065 = vmatprep.subr.mxu0 0.0
    %v3066 = vand.u32 %v54, 4294901760
    %3067 = vmatpush2.msra.mxu0 %v3066
    %3068 = vmatprep.subr.mxu0 0.0
    %v3069 = vand.u32 %v53, 4294901760
    %3070 = vmatpush2.msra.mxu0 %v3069
    %3071 = vmatprep.subr.mxu0 0.0
    %v3072 = vand.u32 %v52, 4294901760
    %3073 = vmatpush2.msra.mxu0 %v3072
    %3074 = vmatprep.subr.mxu0 0.0
    %v3075 = vand.u32 %v51, 4294901760
    %3076 = vmatpush2.msra.mxu0 %v3075
    %3077 = vmatprep.subr.mxu0 0.0
    %v3078 = vand.u32 %v50, 4294901760
    %3079 = vmatpush2.msra.mxu0 %v3078
    %3080 = vmatprep.subr.mxu0 0.0
    %v3081 = vand.u32 %v49, 4294901760
    %3082 = vmatpush2.msra.mxu0 %v3081
    %3083 = vmatprep.subr.mxu0 0.0
    %v3084 = vand.u32 %v48, 4294901760
    %3085 = vmatpush2.msra.mxu0 %v3084
    %3086 = vmatprep.subr.mxu0 0.0
    %v3087 = vand.u32 %v47, 4294901760
    %3088 = vmatpush2.msra.mxu0 %v3087
    %3089 = vmatprep.subr.mxu0 0.0
    %v3090 = vand.u32 %v46, 4294901760
    %3091 = vmatpush2.msra.mxu0 %v3090
    %3092 = vmatprep.subr.mxu0 0.0
    %v3093 = vand.u32 %v45, 4294901760
    %3094 = vmatpush2.msra.mxu0 %v3093
    %3095 = vmatprep.subr.mxu0 0.0
    %v3096 = vand.u32 %v44, 4294901760
    %3097 = vmatpush2.msra.mxu0 %v3096
    %3098 = vmatprep.subr.mxu0 0.0
    %v3099 = vand.u32 %v43, 4294901760
    %3100 = vmatpush2.msra.mxu0 %v3099
    %3101 = vmatprep.subr.mxu0 0.0
    %v3102 = vand.u32 %v42, 4294901760
    %3103 = vmatpush2.msra.mxu0 %v3102
    %3104 = vmatprep.subr.mxu0 0.0
    %v3105 = vand.u32 %v41, 4294901760
    %3106 = vmatpush2.msra.mxu0 %v3105
    %v3107 = vand.u32 %v2511, 4294901760
    %v3108 = vsub.f32 %v2511, %v3107
    %v3109 = vand.u32 %v3108, 4294901760
    %3110 = vmatprep.mubr.f32.mxu0 %v3109
    %v3111 = vand.u32 %v2507, 4294901760
    %v3112 = vsub.f32 %v2507, %v3111
    %v3113 = vand.u32 %v3112, 4294901760
    %3114 = vmatmul.mubr.f32.gmra.mxu0 %v3113
    %v3115 = vpop.f32.mrf.mxu0
    %v3116 = vadd.f32 %v3008, %v3115
    %v3117 = vpop.f32.mrf.mxu0
    %3118 = vdwg.mxu0
    %3119 = vmatprep.subr.mxu0 0.0
    %v3120 = vand.u32 %v40, 4294901760
    %v3121 = vsub.f32 %v40, %v3120
    %v3122 = vand.u32 %v3121, 4294901760
    %3123 = vmatpush1.msra.mxu0 %v3122
    %3124 = vmatprep.subr.mxu0 0.0
    %v3125 = vand.u32 %v39, 4294901760
    %v3126 = vsub.f32 %v39, %v3125
    %v3127 = vand.u32 %v3126, 4294901760
    %3128 = vmatpush1.msra.mxu0 %v3127
    %3129 = vmatprep.subr.mxu0 0.0
    %v3130 = vand.u32 %v38, 4294901760
    %v3131 = vsub.f32 %v38, %v3130
    %v3132 = vand.u32 %v3131, 4294901760
    %3133 = vmatpush1.msra.mxu0 %v3132
    %3134 = vmatprep.subr.mxu0 0.0
    %v3135 = vand.u32 %v37, 4294901760
    %v3136 = vsub.f32 %v37, %v3135
    %v3137 = vand.u32 %v3136, 4294901760
    %3138 = vmatpush1.msra.mxu0 %v3137
    %3139 = vmatprep.subr.mxu0 0.0
    %v3140 = vand.u32 %v36, 4294901760
    %v3141 = vsub.f32 %v36, %v3140
    %v3142 = vand.u32 %v3141, 4294901760
    %3143 = vmatpush1.msra.mxu0 %v3142
    %3144 = vmatprep.subr.mxu0 0.0
    %v3145 = vand.u32 %v35, 4294901760
    %v3146 = vsub.f32 %v35, %v3145
    %v3147 = vand.u32 %v3146, 4294901760
    %3148 = vmatpush1.msra.mxu0 %v3147
    %3149 = vmatprep.subr.mxu0 0.0
    %v3150 = vand.u32 %v34, 4294901760
    %v3151 = vsub.f32 %v34, %v3150
    %v3152 = vand.u32 %v3151, 4294901760
    %3153 = vmatpush1.msra.mxu0 %v3152
    %3154 = vmatprep.subr.mxu0 0.0
    %v3155 = vand.u32 %v33, 4294901760
    %v3156 = vsub.f32 %v33, %v3155
    %v3157 = vand.u32 %v3156, 4294901760
    %3158 = vmatpush1.msra.mxu0 %v3157
    %3159 = vmatprep.subr.mxu0 0.0
    %v3160 = vand.u32 %v32, 4294901760
    %v3161 = vsub.f32 %v32, %v3160
    %v3162 = vand.u32 %v3161, 4294901760
    %3163 = vmatpush1.msra.mxu0 %v3162
    %3164 = vmatprep.subr.mxu0 0.0
    %v3165 = vand.u32 %v31, 4294901760
    %v3166 = vsub.f32 %v31, %v3165
    %v3167 = vand.u32 %v3166, 4294901760
    %3168 = vmatpush1.msra.mxu0 %v3167
    %3169 = vmatprep.subr.mxu0 0.0
    %v3170 = vand.u32 %v30, 4294901760
    %v3171 = vsub.f32 %v30, %v3170
    %v3172 = vand.u32 %v3171, 4294901760
    %3173 = vmatpush1.msra.mxu0 %v3172
    %3174 = vmatprep.subr.mxu0 0.0
    %v3175 = vand.u32 %v29, 4294901760
    %v3176 = vsub.f32 %v29, %v3175
    %v3177 = vand.u32 %v3176, 4294901760
    %3178 = vmatpush1.msra.mxu0 %v3177
    %3179 = vmatprep.subr.mxu0 0.0
    %v3180 = vand.u32 %v28, 4294901760
    %v3181 = vsub.f32 %v28, %v3180
    %v3182 = vand.u32 %v3181, 4294901760
    %3183 = vmatpush1.msra.mxu0 %v3182
    %3184 = vmatprep.subr.mxu0 0.0
    %v3185 = vand.u32 %v27, 4294901760
    %v3186 = vsub.f32 %v27, %v3185
    %v3187 = vand.u32 %v3186, 4294901760
    %3188 = vmatpush1.msra.mxu0 %v3187
    %3189 = vmatprep.subr.mxu0 0.0
    %v3190 = vand.u32 %v26, 4294901760
    %v3191 = vsub.f32 %v26, %v3190
    %v3192 = vand.u32 %v3191, 4294901760
    %3193 = vmatpush1.msra.mxu0 %v3192
    %3194 = vmatprep.subr.mxu0 0.0
    %v3195 = vand.u32 %v25, 4294901760
    %v3196 = vsub.f32 %v25, %v3195
    %v3197 = vand.u32 %v3196, 4294901760
    %3198 = vmatpush1.msra.mxu0 %v3197
    %3199 = vmatprep.subr.mxu0 0.0
    %v3200 = vand.u32 %v56, 4294901760
    %v3201 = vsub.f32 %v56, %v3200
    %v3202 = vand.u32 %v3201, 4294901760
    %3203 = vmatpush2.msra.mxu0 %v3202
    %3204 = vmatprep.subr.mxu0 0.0
    %v3205 = vand.u32 %v55, 4294901760
    %v3206 = vsub.f32 %v55, %v3205
    %v3207 = vand.u32 %v3206, 4294901760
    %3208 = vmatpush2.msra.mxu0 %v3207
    %3209 = vmatprep.subr.mxu0 0.0
    %v3210 = vand.u32 %v54, 4294901760
    %v3211 = vsub.f32 %v54, %v3210
    %v3212 = vand.u32 %v3211, 4294901760
    %3213 = vmatpush2.msra.mxu0 %v3212
    %3214 = vmatprep.subr.mxu0 0.0
    %v3215 = vand.u32 %v53, 4294901760
    %v3216 = vsub.f32 %v53, %v3215
    %v3217 = vand.u32 %v3216, 4294901760
    %3218 = vmatpush2.msra.mxu0 %v3217
    %3219 = vmatprep.subr.mxu0 0.0
    %v3220 = vand.u32 %v52, 4294901760
    %v3221 = vsub.f32 %v52, %v3220
    %v3222 = vand.u32 %v3221, 4294901760
    %3223 = vmatpush2.msra.mxu0 %v3222
    %3224 = vmatprep.subr.mxu0 0.0
    %v3225 = vand.u32 %v51, 4294901760
    %v3226 = vsub.f32 %v51, %v3225
    %v3227 = vand.u32 %v3226, 4294901760
    %3228 = vmatpush2.msra.mxu0 %v3227
    %3229 = vmatprep.subr.mxu0 0.0
    %v3230 = vand.u32 %v50, 4294901760
    %v3231 = vsub.f32 %v50, %v3230
    %v3232 = vand.u32 %v3231, 4294901760
    %3233 = vmatpush2.msra.mxu0 %v3232
    %3234 = vmatprep.subr.mxu0 0.0
    %v3235 = vand.u32 %v49, 4294901760
    %v3236 = vsub.f32 %v49, %v3235
    %v3237 = vand.u32 %v3236, 4294901760
    %3238 = vmatpush2.msra.mxu0 %v3237
    %3239 = vmatprep.subr.mxu0 0.0
    %v3240 = vand.u32 %v48, 4294901760
    %v3241 = vsub.f32 %v48, %v3240
    %v3242 = vand.u32 %v3241, 4294901760
    %3243 = vmatpush2.msra.mxu0 %v3242
    %3244 = vmatprep.subr.mxu0 0.0
    %v3245 = vand.u32 %v47, 4294901760
    %v3246 = vsub.f32 %v47, %v3245
    %v3247 = vand.u32 %v3246, 4294901760
    %3248 = vmatpush2.msra.mxu0 %v3247
    %3249 = vmatprep.subr.mxu0 0.0
    %v3250 = vand.u32 %v46, 4294901760
    %v3251 = vsub.f32 %v46, %v3250
    %v3252 = vand.u32 %v3251, 4294901760
    %3253 = vmatpush2.msra.mxu0 %v3252
    %3254 = vmatprep.subr.mxu0 0.0
    %v3255 = vand.u32 %v45, 4294901760
    %v3256 = vsub.f32 %v45, %v3255
    %v3257 = vand.u32 %v3256, 4294901760
    %3258 = vmatpush2.msra.mxu0 %v3257
    %3259 = vmatprep.subr.mxu0 0.0
    %v3260 = vand.u32 %v44, 4294901760
    %v3261 = vsub.f32 %v44, %v3260
    %v3262 = vand.u32 %v3261, 4294901760
    %3263 = vmatpush2.msra.mxu0 %v3262
    %3264 = vmatprep.subr.mxu0 0.0
    %v3265 = vand.u32 %v43, 4294901760
    %v3266 = vsub.f32 %v43, %v3265
    %v3267 = vand.u32 %v3266, 4294901760
    %3268 = vmatpush2.msra.mxu0 %v3267
    %3269 = vmatprep.subr.mxu0 0.0
    %v3270 = vand.u32 %v42, 4294901760
    %v3271 = vsub.f32 %v42, %v3270
    %v3272 = vand.u32 %v3271, 4294901760
    %3273 = vmatpush2.msra.mxu0 %v3272
    %3274 = vmatprep.subr.mxu0 0.0
    %v3275 = vand.u32 %v41, 4294901760
    %v3276 = vsub.f32 %v41, %v3275
    %v3277 = vand.u32 %v3276, 4294901760
    %3278 = vmatpush2.msra.mxu0 %v3277
    %v3279 = vand.u32 %v2511, 4294901760
    %3280 = vmatprep.mubr.f32.mxu0 %v3279
    %v3281 = vand.u32 %v2507, 4294901760
    %3282 = vmatmul.mubr.f32.gmra.mxu0 %v3281
    %v3283 = vpop.f32.mrf.mxu0
    %v3284 = vadd.f32 %v3116, %v3283
    %v3285 = vpop.f32.mrf.mxu0
    %3286 = vdwg.mxu0
    %3287 = vmatprep.subr.mxu0 0.0
    %v3288 = vand.u32 %v40, 4294901760
    %3289 = vmatpush1.msra.mxu0 %v3288
    %3290 = vmatprep.subr.mxu0 0.0
    %v3291 = vand.u32 %v39, 4294901760
    %3292 = vmatpush1.msra.mxu0 %v3291
    %3293 = vmatprep.subr.mxu0 0.0
    %v3294 = vand.u32 %v38, 4294901760
    %3295 = vmatpush1.msra.mxu0 %v3294
    %3296 = vmatprep.subr.mxu0 0.0
    %v3297 = vand.u32 %v37, 4294901760
    %3298 = vmatpush1.msra.mxu0 %v3297
    %3299 = vmatprep.subr.mxu0 0.0
    %v3300 = vand.u32 %v36, 4294901760
    %3301 = vmatpush1.msra.mxu0 %v3300
    %3302 = vmatprep.subr.mxu0 0.0
    %v3303 = vand.u32 %v35, 4294901760
    %3304 = vmatpush1.msra.mxu0 %v3303
    %3305 = vmatprep.subr.mxu0 0.0
    %v3306 = vand.u32 %v34, 4294901760
    %3307 = vmatpush1.msra.mxu0 %v3306
    %3308 = vmatprep.subr.mxu0 0.0
    %v3309 = vand.u32 %v33, 4294901760
    %3310 = vmatpush1.msra.mxu0 %v3309
    %3311 = vmatprep.subr.mxu0 0.0
    %v3312 = vand.u32 %v32, 4294901760
    %3313 = vmatpush1.msra.mxu0 %v3312
    %3314 = vmatprep.subr.mxu0 0.0
    %v3315 = vand.u32 %v31, 4294901760
    %3316 = vmatpush1.msra.mxu0 %v3315
    %3317 = vmatprep.subr.mxu0 0.0
    %v3318 = vand.u32 %v30, 4294901760
    %3319 = vmatpush1.msra.mxu0 %v3318
    %3320 = vmatprep.subr.mxu0 0.0
    %v3321 = vand.u32 %v29, 4294901760
    %3322 = vmatpush1.msra.mxu0 %v3321
    %3323 = vmatprep.subr.mxu0 0.0
    %v3324 = vand.u32 %v28, 4294901760
    %3325 = vmatpush1.msra.mxu0 %v3324
    %3326 = vmatprep.subr.mxu0 0.0
    %v3327 = vand.u32 %v27, 4294901760
    %3328 = vmatpush1.msra.mxu0 %v3327
    %3329 = vmatprep.subr.mxu0 0.0
    %v3330 = vand.u32 %v26, 4294901760
    %3331 = vmatpush1.msra.mxu0 %v3330
    %3332 = vmatprep.subr.mxu0 0.0
    %v3333 = vand.u32 %v25, 4294901760
    %3334 = vmatpush1.msra.mxu0 %v3333
    %3335 = vmatprep.subr.mxu0 0.0
    %v3336 = vand.u32 %v56, 4294901760
    %3337 = vmatpush2.msra.mxu0 %v3336
    %3338 = vmatprep.subr.mxu0 0.0
    %v3339 = vand.u32 %v55, 4294901760
    %3340 = vmatpush2.msra.mxu0 %v3339
    %3341 = vmatprep.subr.mxu0 0.0
    %v3342 = vand.u32 %v54, 4294901760
    %3343 = vmatpush2.msra.mxu0 %v3342
    %3344 = vmatprep.subr.mxu0 0.0
    %v3345 = vand.u32 %v53, 4294901760
    %3346 = vmatpush2.msra.mxu0 %v3345
    %3347 = vmatprep.subr.mxu0 0.0
    %v3348 = vand.u32 %v52, 4294901760
    %3349 = vmatpush2.msra.mxu0 %v3348
    %3350 = vmatprep.subr.mxu0 0.0
    %v3351 = vand.u32 %v51, 4294901760
    %3352 = vmatpush2.msra.mxu0 %v3351
    %3353 = vmatprep.subr.mxu0 0.0
    %v3354 = vand.u32 %v50, 4294901760
    %3355 = vmatpush2.msra.mxu0 %v3354
    %3356 = vmatprep.subr.mxu0 0.0
    %v3357 = vand.u32 %v49, 4294901760
    %3358 = vmatpush2.msra.mxu0 %v3357
    %3359 = vmatprep.subr.mxu0 0.0
    %v3360 = vand.u32 %v48, 4294901760
    %3361 = vmatpush2.msra.mxu0 %v3360
    %3362 = vmatprep.subr.mxu0 0.0
    %v3363 = vand.u32 %v47, 4294901760
    %3364 = vmatpush2.msra.mxu0 %v3363
    %3365 = vmatprep.subr.mxu0 0.0
    %v3366 = vand.u32 %v46, 4294901760
    %3367 = vmatpush2.msra.mxu0 %v3366
    %3368 = vmatprep.subr.mxu0 0.0
    %v3369 = vand.u32 %v45, 4294901760
    %3370 = vmatpush2.msra.mxu0 %v3369
    %3371 = vmatprep.subr.mxu0 0.0
    %v3372 = vand.u32 %v44, 4294901760
    %3373 = vmatpush2.msra.mxu0 %v3372
    %3374 = vmatprep.subr.mxu0 0.0
    %v3375 = vand.u32 %v43, 4294901760
    %3376 = vmatpush2.msra.mxu0 %v3375
    %3377 = vmatprep.subr.mxu0 0.0
    %v3378 = vand.u32 %v42, 4294901760
    %3379 = vmatpush2.msra.mxu0 %v3378
    %3380 = vmatprep.subr.mxu0 0.0
    %v3381 = vand.u32 %v41, 4294901760
    %3382 = vmatpush2.msra.mxu0 %v3381
    %v3383 = vand.u32 %v2511, 4294901760
    %3384 = vmatprep.mubr.f32.mxu0 %v3383
    %v3385 = vand.u32 %v2507, 4294901760
    %3386 = vmatmul.mubr.f32.gmra.mxu0 %v3385
    %v3387 = vpop.f32.mrf.mxu0
    %v3388 = vadd.f32 %v3284, %v3387
    %v3389 = vpop.f32.mrf.mxu0
    %3390 = vdwg.mxu0
    %3391 = vmatprep.subr.mxu0 0.0
    %v3392 = vand.u32 %v72, 4294901760
    %3393 = vmatpush1.msra.mxu0 %v3392
    %3394 = vmatprep.subr.mxu0 0.0
    %v3395 = vand.u32 %v71, 4294901760
    %3396 = vmatpush1.msra.mxu0 %v3395
    %3397 = vmatprep.subr.mxu0 0.0
    %v3398 = vand.u32 %v70, 4294901760
    %3399 = vmatpush1.msra.mxu0 %v3398
    %3400 = vmatprep.subr.mxu0 0.0
    %v3401 = vand.u32 %v69, 4294901760
    %3402 = vmatpush1.msra.mxu0 %v3401
    %3403 = vmatprep.subr.mxu0 0.0
    %v3404 = vand.u32 %v68, 4294901760
    %3405 = vmatpush1.msra.mxu0 %v3404
    %3406 = vmatprep.subr.mxu0 0.0
    %v3407 = vand.u32 %v67, 4294901760
    %3408 = vmatpush1.msra.mxu0 %v3407
    %3409 = vmatprep.subr.mxu0 0.0
    %v3410 = vand.u32 %v66, 4294901760
    %3411 = vmatpush1.msra.mxu0 %v3410
    %3412 = vmatprep.subr.mxu0 0.0
    %v3413 = vand.u32 %v65, 4294901760
    %3414 = vmatpush1.msra.mxu0 %v3413
    %3415 = vmatprep.subr.mxu0 0.0
    %v3416 = vand.u32 %v64, 4294901760
    %3417 = vmatpush1.msra.mxu0 %v3416
    %3418 = vmatprep.subr.mxu0 0.0
    %v3419 = vand.u32 %v63, 4294901760
    %3420 = vmatpush1.msra.mxu0 %v3419
    %3421 = vmatprep.subr.mxu0 0.0
    %v3422 = vand.u32 %v62, 4294901760
    %3423 = vmatpush1.msra.mxu0 %v3422
    %3424 = vmatprep.subr.mxu0 0.0
    %v3425 = vand.u32 %v61, 4294901760
    %3426 = vmatpush1.msra.mxu0 %v3425
    %3427 = vmatprep.subr.mxu0 0.0
    %v3428 = vand.u32 %v60, 4294901760
    %3429 = vmatpush1.msra.mxu0 %v3428
    %3430 = vmatprep.subr.mxu0 0.0
    %v3431 = vand.u32 %v59, 4294901760
    %3432 = vmatpush1.msra.mxu0 %v3431
    %3433 = vmatprep.subr.mxu0 0.0
    %v3434 = vand.u32 %v58, 4294901760
    %3435 = vmatpush1.msra.mxu0 %v3434
    %3436 = vmatprep.subr.mxu0 0.0
    %v3437 = vand.u32 %v57, 4294901760
    %3438 = vmatpush1.msra.mxu0 %v3437
    %3439 = vmatprep.subr.mxu0 0.0
    %v3440 = vand.u32 %v88, 4294901760
    %3441 = vmatpush2.msra.mxu0 %v3440
    %3442 = vmatprep.subr.mxu0 0.0
    %v3443 = vand.u32 %v87, 4294901760
    %3444 = vmatpush2.msra.mxu0 %v3443
    %3445 = vmatprep.subr.mxu0 0.0
    %v3446 = vand.u32 %v86, 4294901760
    %3447 = vmatpush2.msra.mxu0 %v3446
    %3448 = vmatprep.subr.mxu0 0.0
    %v3449 = vand.u32 %v85, 4294901760
    %3450 = vmatpush2.msra.mxu0 %v3449
    %3451 = vmatprep.subr.mxu0 0.0
    %v3452 = vand.u32 %v84, 4294901760
    %3453 = vmatpush2.msra.mxu0 %v3452
    %3454 = vmatprep.subr.mxu0 0.0
    %v3455 = vand.u32 %v83, 4294901760
    %3456 = vmatpush2.msra.mxu0 %v3455
    %3457 = vmatprep.subr.mxu0 0.0
    %v3458 = vand.u32 %v82, 4294901760
    %3459 = vmatpush2.msra.mxu0 %v3458
    %3460 = vmatprep.subr.mxu0 0.0
    %v3461 = vand.u32 %v81, 4294901760
    %3462 = vmatpush2.msra.mxu0 %v3461
    %3463 = vmatprep.subr.mxu0 0.0
    %v3464 = vand.u32 %v80, 4294901760
    %3465 = vmatpush2.msra.mxu0 %v3464
    %3466 = vmatprep.subr.mxu0 0.0
    %v3467 = vand.u32 %v79, 4294901760
    %3468 = vmatpush2.msra.mxu0 %v3467
    %3469 = vmatprep.subr.mxu0 0.0
    %v3470 = vand.u32 %v78, 4294901760
    %3471 = vmatpush2.msra.mxu0 %v3470
    %3472 = vmatprep.subr.mxu0 0.0
    %v3473 = vand.u32 %v77, 4294901760
    %3474 = vmatpush2.msra.mxu0 %v3473
    %3475 = vmatprep.subr.mxu0 0.0
    %v3476 = vand.u32 %v76, 4294901760
    %3477 = vmatpush2.msra.mxu0 %v3476
    %3478 = vmatprep.subr.mxu0 0.0
    %v3479 = vand.u32 %v75, 4294901760
    %3480 = vmatpush2.msra.mxu0 %v3479
    %3481 = vmatprep.subr.mxu0 0.0
    %v3482 = vand.u32 %v74, 4294901760
    %3483 = vmatpush2.msra.mxu0 %v3482
    %3484 = vmatprep.subr.mxu0 0.0
    %v3485 = vand.u32 %v73, 4294901760
    %3486 = vmatpush2.msra.mxu0 %v3485
    %v3487 = vand.u32 %v2519, 4294901760
    %v3488 = vsub.f32 %v2519, %v3487
    %v3489 = vand.u32 %v3488, 4294901760
    %v3490 = vsub.f32 %v3488, %v3489
    %v3491 = vand.u32 %v3490, 4294901760
    %3492 = vmatprep.mubr.f32.mxu0 %v3491
    %v3493 = vand.u32 %v2515, 4294901760
    %v3494 = vsub.f32 %v2515, %v3493
    %v3495 = vand.u32 %v3494, 4294901760
    %v3496 = vsub.f32 %v3494, %v3495
    %v3497 = vand.u32 %v3496, 4294901760
    %3498 = vmatmul.mubr.f32.gmra.mxu0 %v3497
    %v3499 = vpop.f32.mrf.mxu0
    %v3500 = vadd.f32 %v3388, %v3499
    %v3501 = vpop.f32.mrf.mxu0
    %3502 = vdwg.mxu0
    %3503 = vmatprep.subr.mxu0 0.0
    %v3504 = vand.u32 %v72, 4294901760
    %v3505 = vsub.f32 %v72, %v3504
    %v3506 = vand.u32 %v3505, 4294901760
    %v3507 = vsub.f32 %v3505, %v3506
    %v3508 = vand.u32 %v3507, 4294901760
    %3509 = vmatpush1.msra.mxu0 %v3508
    %3510 = vmatprep.subr.mxu0 0.0
    %v3511 = vand.u32 %v71, 4294901760
    %v3512 = vsub.f32 %v71, %v3511
    %v3513 = vand.u32 %v3512, 4294901760
    %v3514 = vsub.f32 %v3512, %v3513
    %v3515 = vand.u32 %v3514, 4294901760
    %3516 = vmatpush1.msra.mxu0 %v3515
    %3517 = vmatprep.subr.mxu0 0.0
    %v3518 = vand.u32 %v70, 4294901760
    %v3519 = vsub.f32 %v70, %v3518
    %v3520 = vand.u32 %v3519, 4294901760
    %v3521 = vsub.f32 %v3519, %v3520
    %v3522 = vand.u32 %v3521, 4294901760
    %3523 = vmatpush1.msra.mxu0 %v3522
    %3524 = vmatprep.subr.mxu0 0.0
    %v3525 = vand.u32 %v69, 4294901760
    %v3526 = vsub.f32 %v69, %v3525
    %v3527 = vand.u32 %v3526, 4294901760
    %v3528 = vsub.f32 %v3526, %v3527
    %v3529 = vand.u32 %v3528, 4294901760
    %3530 = vmatpush1.msra.mxu0 %v3529
    %3531 = vmatprep.subr.mxu0 0.0
    %v3532 = vand.u32 %v68, 4294901760
    %v3533 = vsub.f32 %v68, %v3532
    %v3534 = vand.u32 %v3533, 4294901760
    %v3535 = vsub.f32 %v3533, %v3534
    %v3536 = vand.u32 %v3535, 4294901760
    %3537 = vmatpush1.msra.mxu0 %v3536
    %3538 = vmatprep.subr.mxu0 0.0
    %v3539 = vand.u32 %v67, 4294901760
    %v3540 = vsub.f32 %v67, %v3539
    %v3541 = vand.u32 %v3540, 4294901760
    %v3542 = vsub.f32 %v3540, %v3541
    %v3543 = vand.u32 %v3542, 4294901760
    %3544 = vmatpush1.msra.mxu0 %v3543
    %3545 = vmatprep.subr.mxu0 0.0
    %v3546 = vand.u32 %v66, 4294901760
    %v3547 = vsub.f32 %v66, %v3546
    %v3548 = vand.u32 %v3547, 4294901760
    %v3549 = vsub.f32 %v3547, %v3548
    %v3550 = vand.u32 %v3549, 4294901760
    %3551 = vmatpush1.msra.mxu0 %v3550
    %3552 = vmatprep.subr.mxu0 0.0
    %v3553 = vand.u32 %v65, 4294901760
    %v3554 = vsub.f32 %v65, %v3553
    %v3555 = vand.u32 %v3554, 4294901760
    %v3556 = vsub.f32 %v3554, %v3555
    %v3557 = vand.u32 %v3556, 4294901760
    %3558 = vmatpush1.msra.mxu0 %v3557
    %3559 = vmatprep.subr.mxu0 0.0
    %v3560 = vand.u32 %v64, 4294901760
    %v3561 = vsub.f32 %v64, %v3560
    %v3562 = vand.u32 %v3561, 4294901760
    %v3563 = vsub.f32 %v3561, %v3562
    %v3564 = vand.u32 %v3563, 4294901760
    %3565 = vmatpush1.msra.mxu0 %v3564
    %3566 = vmatprep.subr.mxu0 0.0
    %v3567 = vand.u32 %v63, 4294901760
    %v3568 = vsub.f32 %v63, %v3567
    %v3569 = vand.u32 %v3568, 4294901760
    %v3570 = vsub.f32 %v3568, %v3569
    %v3571 = vand.u32 %v3570, 4294901760
    %3572 = vmatpush1.msra.mxu0 %v3571
    %3573 = vmatprep.subr.mxu0 0.0
    %v3574 = vand.u32 %v62, 4294901760
    %v3575 = vsub.f32 %v62, %v3574
    %v3576 = vand.u32 %v3575, 4294901760
    %v3577 = vsub.f32 %v3575, %v3576
    %v3578 = vand.u32 %v3577, 4294901760
    %3579 = vmatpush1.msra.mxu0 %v3578
    %3580 = vmatprep.subr.mxu0 0.0
    %v3581 = vand.u32 %v61, 4294901760
    %v3582 = vsub.f32 %v61, %v3581
    %v3583 = vand.u32 %v3582, 4294901760
    %v3584 = vsub.f32 %v3582, %v3583
    %v3585 = vand.u32 %v3584, 4294901760
    %3586 = vmatpush1.msra.mxu0 %v3585
    %3587 = vmatprep.subr.mxu0 0.0
    %v3588 = vand.u32 %v60, 4294901760
    %v3589 = vsub.f32 %v60, %v3588
    %v3590 = vand.u32 %v3589, 4294901760
    %v3591 = vsub.f32 %v3589, %v3590
    %v3592 = vand.u32 %v3591, 4294901760
    %3593 = vmatpush1.msra.mxu0 %v3592
    %3594 = vmatprep.subr.mxu0 0.0
    %v3595 = vand.u32 %v59, 4294901760
    %v3596 = vsub.f32 %v59, %v3595
    %v3597 = vand.u32 %v3596, 4294901760
    %v3598 = vsub.f32 %v3596, %v3597
    %v3599 = vand.u32 %v3598, 4294901760
    %3600 = vmatpush1.msra.mxu0 %v3599
    %3601 = vmatprep.subr.mxu0 0.0
    %v3602 = vand.u32 %v58, 4294901760
    %v3603 = vsub.f32 %v58, %v3602
    %v3604 = vand.u32 %v3603, 4294901760
    %v3605 = vsub.f32 %v3603, %v3604
    %v3606 = vand.u32 %v3605, 4294901760
    %3607 = vmatpush1.msra.mxu0 %v3606
    %3608 = vmatprep.subr.mxu0 0.0
    %v3609 = vand.u32 %v57, 4294901760
    %v3610 = vsub.f32 %v57, %v3609
    %v3611 = vand.u32 %v3610, 4294901760
    %v3612 = vsub.f32 %v3610, %v3611
    %v3613 = vand.u32 %v3612, 4294901760
    %3614 = vmatpush1.msra.mxu0 %v3613
    %3615 = vmatprep.subr.mxu0 0.0
    %v3616 = vand.u32 %v88, 4294901760
    %v3617 = vsub.f32 %v88, %v3616
    %v3618 = vand.u32 %v3617, 4294901760
    %v3619 = vsub.f32 %v3617, %v3618
    %v3620 = vand.u32 %v3619, 4294901760
    %3621 = vmatpush2.msra.mxu0 %v3620
    %3622 = vmatprep.subr.mxu0 0.0
    %v3623 = vand.u32 %v87, 4294901760
    %v3624 = vsub.f32 %v87, %v3623
    %v3625 = vand.u32 %v3624, 4294901760
    %v3626 = vsub.f32 %v3624, %v3625
    %v3627 = vand.u32 %v3626, 4294901760
    %3628 = vmatpush2.msra.mxu0 %v3627
    %3629 = vmatprep.subr.mxu0 0.0
    %v3630 = vand.u32 %v86, 4294901760
    %v3631 = vsub.f32 %v86, %v3630
    %v3632 = vand.u32 %v3631, 4294901760
    %v3633 = vsub.f32 %v3631, %v3632
    %v3634 = vand.u32 %v3633, 4294901760
    %3635 = vmatpush2.msra.mxu0 %v3634
    %3636 = vmatprep.subr.mxu0 0.0
    %v3637 = vand.u32 %v85, 4294901760
    %v3638 = vsub.f32 %v85, %v3637
    %v3639 = vand.u32 %v3638, 4294901760
    %v3640 = vsub.f32 %v3638, %v3639
    %v3641 = vand.u32 %v3640, 4294901760
    %3642 = vmatpush2.msra.mxu0 %v3641
    %3643 = vmatprep.subr.mxu0 0.0
    %v3644 = vand.u32 %v84, 4294901760
    %v3645 = vsub.f32 %v84, %v3644
    %v3646 = vand.u32 %v3645, 4294901760
    %v3647 = vsub.f32 %v3645, %v3646
    %v3648 = vand.u32 %v3647, 4294901760
    %3649 = vmatpush2.msra.mxu0 %v3648
    %3650 = vmatprep.subr.mxu0 0.0
    %v3651 = vand.u32 %v83, 4294901760
    %v3652 = vsub.f32 %v83, %v3651
    %v3653 = vand.u32 %v3652, 4294901760
    %v3654 = vsub.f32 %v3652, %v3653
    %v3655 = vand.u32 %v3654, 4294901760
    %3656 = vmatpush2.msra.mxu0 %v3655
    %3657 = vmatprep.subr.mxu0 0.0
    %v3658 = vand.u32 %v82, 4294901760
    %v3659 = vsub.f32 %v82, %v3658
    %v3660 = vand.u32 %v3659, 4294901760
    %v3661 = vsub.f32 %v3659, %v3660
    %v3662 = vand.u32 %v3661, 4294901760
    %3663 = vmatpush2.msra.mxu0 %v3662
    %3664 = vmatprep.subr.mxu0 0.0
    %v3665 = vand.u32 %v81, 4294901760
    %v3666 = vsub.f32 %v81, %v3665
    %v3667 = vand.u32 %v3666, 4294901760
    %v3668 = vsub.f32 %v3666, %v3667
    %v3669 = vand.u32 %v3668, 4294901760
    %3670 = vmatpush2.msra.mxu0 %v3669
    %3671 = vmatprep.subr.mxu0 0.0
    %v3672 = vand.u32 %v80, 4294901760
    %v3673 = vsub.f32 %v80, %v3672
    %v3674 = vand.u32 %v3673, 4294901760
    %v3675 = vsub.f32 %v3673, %v3674
    %v3676 = vand.u32 %v3675, 4294901760
    %3677 = vmatpush2.msra.mxu0 %v3676
    %3678 = vmatprep.subr.mxu0 0.0
    %v3679 = vand.u32 %v79, 4294901760
    %v3680 = vsub.f32 %v79, %v3679
    %v3681 = vand.u32 %v3680, 4294901760
    %v3682 = vsub.f32 %v3680, %v3681
    %v3683 = vand.u32 %v3682, 4294901760
    %3684 = vmatpush2.msra.mxu0 %v3683
    %3685 = vmatprep.subr.mxu0 0.0
    %v3686 = vand.u32 %v78, 4294901760
    %v3687 = vsub.f32 %v78, %v3686
    %v3688 = vand.u32 %v3687, 4294901760
    %v3689 = vsub.f32 %v3687, %v3688
    %v3690 = vand.u32 %v3689, 4294901760
    %3691 = vmatpush2.msra.mxu0 %v3690
    %3692 = vmatprep.subr.mxu0 0.0
    %v3693 = vand.u32 %v77, 4294901760
    %v3694 = vsub.f32 %v77, %v3693
    %v3695 = vand.u32 %v3694, 4294901760
    %v3696 = vsub.f32 %v3694, %v3695
    %v3697 = vand.u32 %v3696, 4294901760
    %3698 = vmatpush2.msra.mxu0 %v3697
    %3699 = vmatprep.subr.mxu0 0.0
    %v3700 = vand.u32 %v76, 4294901760
    %v3701 = vsub.f32 %v76, %v3700
    %v3702 = vand.u32 %v3701, 4294901760
    %v3703 = vsub.f32 %v3701, %v3702
    %v3704 = vand.u32 %v3703, 4294901760
    %3705 = vmatpush2.msra.mxu0 %v3704
    %3706 = vmatprep.subr.mxu0 0.0
    %v3707 = vand.u32 %v75, 4294901760
    %v3708 = vsub.f32 %v75, %v3707
    %v3709 = vand.u32 %v3708, 4294901760
    %v3710 = vsub.f32 %v3708, %v3709
    %v3711 = vand.u32 %v3710, 4294901760
    %3712 = vmatpush2.msra.mxu0 %v3711
    %3713 = vmatprep.subr.mxu0 0.0
    %v3714 = vand.u32 %v74, 4294901760
    %v3715 = vsub.f32 %v74, %v3714
    %v3716 = vand.u32 %v3715, 4294901760
    %v3717 = vsub.f32 %v3715, %v3716
    %v3718 = vand.u32 %v3717, 4294901760
    %3719 = vmatpush2.msra.mxu0 %v3718
    %3720 = vmatprep.subr.mxu0 0.0
    %v3721 = vand.u32 %v73, 4294901760
    %v3722 = vsub.f32 %v73, %v3721
    %v3723 = vand.u32 %v3722, 4294901760
    %v3724 = vsub.f32 %v3722, %v3723
    %v3725 = vand.u32 %v3724, 4294901760
    %3726 = vmatpush2.msra.mxu0 %v3725
    %v3727 = vand.u32 %v2519, 4294901760
    %3728 = vmatprep.mubr.f32.mxu0 %v3727
    %v3729 = vand.u32 %v2515, 4294901760
    %3730 = vmatmul.mubr.f32.gmra.mxu0 %v3729
    %v3731 = vpop.f32.mrf.mxu0
    %v3732 = vadd.f32 %v3500, %v3731
    %v3733 = vpop.f32.mrf.mxu0
    %3734 = vdwg.mxu0
    %3735 = vmatprep.subr.mxu0 0.0
    %v3736 = vand.u32 %v72, 4294901760
    %v3737 = vsub.f32 %v72, %v3736
    %3738 = vmatpush1.msra.mxu0 %v3737
    %3739 = vmatprep.subr.mxu0 0.0
    %v3740 = vand.u32 %v71, 4294901760
    %v3741 = vsub.f32 %v71, %v3740
    %3742 = vmatpush1.msra.mxu0 %v3741
    %3743 = vmatprep.subr.mxu0 0.0
    %v3744 = vand.u32 %v70, 4294901760
    %v3745 = vsub.f32 %v70, %v3744
    %3746 = vmatpush1.msra.mxu0 %v3745
    %3747 = vmatprep.subr.mxu0 0.0
    %v3748 = vand.u32 %v69, 4294901760
    %v3749 = vsub.f32 %v69, %v3748
    %3750 = vmatpush1.msra.mxu0 %v3749
    %3751 = vmatprep.subr.mxu0 0.0
    %v3752 = vand.u32 %v68, 4294901760
    %v3753 = vsub.f32 %v68, %v3752
    %3754 = vmatpush1.msra.mxu0 %v3753
    %3755 = vmatprep.subr.mxu0 0.0
    %v3756 = vand.u32 %v67, 4294901760
    %v3757 = vsub.f32 %v67, %v3756
    %3758 = vmatpush1.msra.mxu0 %v3757
    %3759 = vmatprep.subr.mxu0 0.0
    %v3760 = vand.u32 %v66, 4294901760
    %v3761 = vsub.f32 %v66, %v3760
    %3762 = vmatpush1.msra.mxu0 %v3761
    %3763 = vmatprep.subr.mxu0 0.0
    %v3764 = vand.u32 %v65, 4294901760
    %v3765 = vsub.f32 %v65, %v3764
    %3766 = vmatpush1.msra.mxu0 %v3765
    %3767 = vmatprep.subr.mxu0 0.0
    %v3768 = vand.u32 %v64, 4294901760
    %v3769 = vsub.f32 %v64, %v3768
    %3770 = vmatpush1.msra.mxu0 %v3769
    %3771 = vmatprep.subr.mxu0 0.0
    %v3772 = vand.u32 %v63, 4294901760
    %v3773 = vsub.f32 %v63, %v3772
    %3774 = vmatpush1.msra.mxu0 %v3773
    %3775 = vmatprep.subr.mxu0 0.0
    %v3776 = vand.u32 %v62, 4294901760
    %v3777 = vsub.f32 %v62, %v3776
    %3778 = vmatpush1.msra.mxu0 %v3777
    %3779 = vmatprep.subr.mxu0 0.0
    %v3780 = vand.u32 %v61, 4294901760
    %v3781 = vsub.f32 %v61, %v3780
    %3782 = vmatpush1.msra.mxu0 %v3781
    %3783 = vmatprep.subr.mxu0 0.0
    %v3784 = vand.u32 %v60, 4294901760
    %v3785 = vsub.f32 %v60, %v3784
    %3786 = vmatpush1.msra.mxu0 %v3785
    %3787 = vmatprep.subr.mxu0 0.0
    %v3788 = vand.u32 %v59, 4294901760
    %v3789 = vsub.f32 %v59, %v3788
    %3790 = vmatpush1.msra.mxu0 %v3789
    %3791 = vmatprep.subr.mxu0 0.0
    %v3792 = vand.u32 %v58, 4294901760
    %v3793 = vsub.f32 %v58, %v3792
    %3794 = vmatpush1.msra.mxu0 %v3793
    %3795 = vmatprep.subr.mxu0 0.0
    %v3796 = vand.u32 %v57, 4294901760
    %v3797 = vsub.f32 %v57, %v3796
    %3798 = vmatpush1.msra.mxu0 %v3797
    %3799 = vmatprep.subr.mxu0 0.0
    %v3800 = vand.u32 %v88, 4294901760
    %v3801 = vsub.f32 %v88, %v3800
    %3802 = vmatpush2.msra.mxu0 %v3801
    %3803 = vmatprep.subr.mxu0 0.0
    %v3804 = vand.u32 %v87, 4294901760
    %v3805 = vsub.f32 %v87, %v3804
    %3806 = vmatpush2.msra.mxu0 %v3805
    %3807 = vmatprep.subr.mxu0 0.0
    %v3808 = vand.u32 %v86, 4294901760
    %v3809 = vsub.f32 %v86, %v3808
    %3810 = vmatpush2.msra.mxu0 %v3809
    %3811 = vmatprep.subr.mxu0 0.0
    %v3812 = vand.u32 %v85, 4294901760
    %v3813 = vsub.f32 %v85, %v3812
    %3814 = vmatpush2.msra.mxu0 %v3813
    %3815 = vmatprep.subr.mxu0 0.0
    %v3816 = vand.u32 %v84, 4294901760
    %v3817 = vsub.f32 %v84, %v3816
    %3818 = vmatpush2.msra.mxu0 %v3817
    %3819 = vmatprep.subr.mxu0 0.0
    %v3820 = vand.u32 %v83, 4294901760
    %v3821 = vsub.f32 %v83, %v3820
    %3822 = vmatpush2.msra.mxu0 %v3821
    %3823 = vmatprep.subr.mxu0 0.0
    %v3824 = vand.u32 %v82, 4294901760
    %v3825 = vsub.f32 %v82, %v3824
    %3826 = vmatpush2.msra.mxu0 %v3825
    %3827 = vmatprep.subr.mxu0 0.0
    %v3828 = vand.u32 %v81, 4294901760
    %v3829 = vsub.f32 %v81, %v3828
    %3830 = vmatpush2.msra.mxu0 %v3829
    %3831 = vmatprep.subr.mxu0 0.0
    %v3832 = vand.u32 %v80, 4294901760
    %v3833 = vsub.f32 %v80, %v3832
    %3834 = vmatpush2.msra.mxu0 %v3833
    %3835 = vmatprep.subr.mxu0 0.0
    %v3836 = vand.u32 %v79, 4294901760
    %v3837 = vsub.f32 %v79, %v3836
    %3838 = vmatpush2.msra.mxu0 %v3837
    %3839 = vmatprep.subr.mxu0 0.0
    %v3840 = vand.u32 %v78, 4294901760
    %v3841 = vsub.f32 %v78, %v3840
    %3842 = vmatpush2.msra.mxu0 %v3841
    %3843 = vmatprep.subr.mxu0 0.0
    %v3844 = vand.u32 %v77, 4294901760
    %v3845 = vsub.f32 %v77, %v3844
    %3846 = vmatpush2.msra.mxu0 %v3845
    %3847 = vmatprep.subr.mxu0 0.0
    %v3848 = vand.u32 %v76, 4294901760
    %v3849 = vsub.f32 %v76, %v3848
    %3850 = vmatpush2.msra.mxu0 %v3849
    %3851 = vmatprep.subr.mxu0 0.0
    %v3852 = vand.u32 %v75, 4294901760
    %v3853 = vsub.f32 %v75, %v3852
    %3854 = vmatpush2.msra.mxu0 %v3853
    %3855 = vmatprep.subr.mxu0 0.0
    %v3856 = vand.u32 %v74, 4294901760
    %v3857 = vsub.f32 %v74, %v3856
    %3858 = vmatpush2.msra.mxu0 %v3857
    %3859 = vmatprep.subr.mxu0 0.0
    %v3860 = vand.u32 %v73, 4294901760
    %v3861 = vsub.f32 %v73, %v3860
    %3862 = vmatpush2.msra.mxu0 %v3861
    %v3863 = vand.u32 %v2519, 4294901760
    %v3864 = vsub.f32 %v2519, %v3863
    %3865 = vmatprep.mubr.f32.mxu0 %v3864
    %v3866 = vand.u32 %v2515, 4294901760
    %v3867 = vsub.f32 %v2515, %v3866
    %3868 = vmatmul.mubr.f32.gmra.mxu0 %v3867
    %v3869 = vpop.f32.mrf.mxu0
    %v3870 = vadd.f32 %v3732, %v3869
    %v3871 = vpop.f32.mrf.mxu0
    %3872 = vdwg.mxu0
    %3873 = vmatprep.subr.mxu0 0.0
    %v3874 = vand.u32 %v72, 4294901760
    %3875 = vmatpush1.msra.mxu0 %v3874
    %3876 = vmatprep.subr.mxu0 0.0
    %v3877 = vand.u32 %v71, 4294901760
    %3878 = vmatpush1.msra.mxu0 %v3877
    %3879 = vmatprep.subr.mxu0 0.0
    %v3880 = vand.u32 %v70, 4294901760
    %3881 = vmatpush1.msra.mxu0 %v3880
    %3882 = vmatprep.subr.mxu0 0.0
    %v3883 = vand.u32 %v69, 4294901760
    %3884 = vmatpush1.msra.mxu0 %v3883
    %3885 = vmatprep.subr.mxu0 0.0
    %v3886 = vand.u32 %v68, 4294901760
    %3887 = vmatpush1.msra.mxu0 %v3886
    %3888 = vmatprep.subr.mxu0 0.0
    %v3889 = vand.u32 %v67, 4294901760
    %3890 = vmatpush1.msra.mxu0 %v3889
    %3891 = vmatprep.subr.mxu0 0.0
    %v3892 = vand.u32 %v66, 4294901760
    %3893 = vmatpush1.msra.mxu0 %v3892
    %3894 = vmatprep.subr.mxu0 0.0
    %v3895 = vand.u32 %v65, 4294901760
    %3896 = vmatpush1.msra.mxu0 %v3895
    %3897 = vmatprep.subr.mxu0 0.0
    %v3898 = vand.u32 %v64, 4294901760
    %3899 = vmatpush1.msra.mxu0 %v3898
    %3900 = vmatprep.subr.mxu0 0.0
    %v3901 = vand.u32 %v63, 4294901760
    %3902 = vmatpush1.msra.mxu0 %v3901
    %3903 = vmatprep.subr.mxu0 0.0
    %v3904 = vand.u32 %v62, 4294901760
    %3905 = vmatpush1.msra.mxu0 %v3904
    %3906 = vmatprep.subr.mxu0 0.0
    %v3907 = vand.u32 %v61, 4294901760
    %3908 = vmatpush1.msra.mxu0 %v3907
    %3909 = vmatprep.subr.mxu0 0.0
    %v3910 = vand.u32 %v60, 4294901760
    %3911 = vmatpush1.msra.mxu0 %v3910
    %3912 = vmatprep.subr.mxu0 0.0
    %v3913 = vand.u32 %v59, 4294901760
    %3914 = vmatpush1.msra.mxu0 %v3913
    %3915 = vmatprep.subr.mxu0 0.0
    %v3916 = vand.u32 %v58, 4294901760
    %3917 = vmatpush1.msra.mxu0 %v3916
    %3918 = vmatprep.subr.mxu0 0.0
    %v3919 = vand.u32 %v57, 4294901760
    %3920 = vmatpush1.msra.mxu0 %v3919
    %3921 = vmatprep.subr.mxu0 0.0
    %v3922 = vand.u32 %v88, 4294901760
    %3923 = vmatpush2.msra.mxu0 %v3922
    %3924 = vmatprep.subr.mxu0 0.0
    %v3925 = vand.u32 %v87, 4294901760
    %3926 = vmatpush2.msra.mxu0 %v3925
    %3927 = vmatprep.subr.mxu0 0.0
    %v3928 = vand.u32 %v86, 4294901760
    %3929 = vmatpush2.msra.mxu0 %v3928
    %3930 = vmatprep.subr.mxu0 0.0
    %v3931 = vand.u32 %v85, 4294901760
    %3932 = vmatpush2.msra.mxu0 %v3931
    %3933 = vmatprep.subr.mxu0 0.0
    %v3934 = vand.u32 %v84, 4294901760
    %3935 = vmatpush2.msra.mxu0 %v3934
    %3936 = vmatprep.subr.mxu0 0.0
    %v3937 = vand.u32 %v83, 4294901760
    %3938 = vmatpush2.msra.mxu0 %v3937
    %3939 = vmatprep.subr.mxu0 0.0
    %v3940 = vand.u32 %v82, 4294901760
    %3941 = vmatpush2.msra.mxu0 %v3940
    %3942 = vmatprep.subr.mxu0 0.0
    %v3943 = vand.u32 %v81, 4294901760
    %3944 = vmatpush2.msra.mxu0 %v3943
    %3945 = vmatprep.subr.mxu0 0.0
    %v3946 = vand.u32 %v80, 4294901760
    %3947 = vmatpush2.msra.mxu0 %v3946
    %3948 = vmatprep.subr.mxu0 0.0
    %v3949 = vand.u32 %v79, 4294901760
    %3950 = vmatpush2.msra.mxu0 %v3949
    %3951 = vmatprep.subr.mxu0 0.0
    %v3952 = vand.u32 %v78, 4294901760
    %3953 = vmatpush2.msra.mxu0 %v3952
    %3954 = vmatprep.subr.mxu0 0.0
    %v3955 = vand.u32 %v77, 4294901760
    %3956 = vmatpush2.msra.mxu0 %v3955
    %3957 = vmatprep.subr.mxu0 0.0
    %v3958 = vand.u32 %v76, 4294901760
    %3959 = vmatpush2.msra.mxu0 %v3958
    %3960 = vmatprep.subr.mxu0 0.0
    %v3961 = vand.u32 %v75, 4294901760
    %3962 = vmatpush2.msra.mxu0 %v3961
    %3963 = vmatprep.subr.mxu0 0.0
    %v3964 = vand.u32 %v74, 4294901760
    %3965 = vmatpush2.msra.mxu0 %v3964
    %3966 = vmatprep.subr.mxu0 0.0
    %v3967 = vand.u32 %v73, 4294901760
    %3968 = vmatpush2.msra.mxu0 %v3967
    %v3969 = vand.u32 %v2519, 4294901760
    %v3970 = vsub.f32 %v2519, %v3969
    %v3971 = vand.u32 %v3970, 4294901760
    %3972 = vmatprep.mubr.f32.mxu0 %v3971
    %v3973 = vand.u32 %v2515, 4294901760
    %v3974 = vsub.f32 %v2515, %v3973
    %v3975 = vand.u32 %v3974, 4294901760
    %3976 = vmatmul.mubr.f32.gmra.mxu0 %v3975
    %v3977 = vpop.f32.mrf.mxu0
    %v3978 = vadd.f32 %v3870, %v3977
    %v3979 = vpop.f32.mrf.mxu0
    %3980 = vdwg.mxu0
    %3981 = vmatprep.subr.mxu0 0.0
    %v3982 = vand.u32 %v72, 4294901760
    %v3983 = vsub.f32 %v72, %v3982
    %v3984 = vand.u32 %v3983, 4294901760
    %3985 = vmatpush1.msra.mxu0 %v3984
    %3986 = vmatprep.subr.mxu0 0.0
    %v3987 = vand.u32 %v71, 4294901760
    %v3988 = vsub.f32 %v71, %v3987
    %v3989 = vand.u32 %v3988, 4294901760
    %3990 = vmatpush1.msra.mxu0 %v3989
    %3991 = vmatprep.subr.mxu0 0.0
    %v3992 = vand.u32 %v70, 4294901760
    %v3993 = vsub.f32 %v70, %v3992
    %v3994 = vand.u32 %v3993, 4294901760
    %3995 = vmatpush1.msra.mxu0 %v3994
    %3996 = vmatprep.subr.mxu0 0.0
    %v3997 = vand.u32 %v69, 4294901760
    %v3998 = vsub.f32 %v69, %v3997
    %v3999 = vand.u32 %v3998, 4294901760
    %4000 = vmatpush1.msra.mxu0 %v3999
    %4001 = vmatprep.subr.mxu0 0.0
    %v4002 = vand.u32 %v68, 4294901760
    %v4003 = vsub.f32 %v68, %v4002
    %v4004 = vand.u32 %v4003, 4294901760
    %4005 = vmatpush1.msra.mxu0 %v4004
    %4006 = vmatprep.subr.mxu0 0.0
    %v4007 = vand.u32 %v67, 4294901760
    %v4008 = vsub.f32 %v67, %v4007
    %v4009 = vand.u32 %v4008, 4294901760
    %4010 = vmatpush1.msra.mxu0 %v4009
    %4011 = vmatprep.subr.mxu0 0.0
    %v4012 = vand.u32 %v66, 4294901760
    %v4013 = vsub.f32 %v66, %v4012
    %v4014 = vand.u32 %v4013, 4294901760
    %4015 = vmatpush1.msra.mxu0 %v4014
    %4016 = vmatprep.subr.mxu0 0.0
    %v4017 = vand.u32 %v65, 4294901760
    %v4018 = vsub.f32 %v65, %v4017
    %v4019 = vand.u32 %v4018, 4294901760
    %4020 = vmatpush1.msra.mxu0 %v4019
    %4021 = vmatprep.subr.mxu0 0.0
    %v4022 = vand.u32 %v64, 4294901760
    %v4023 = vsub.f32 %v64, %v4022
    %v4024 = vand.u32 %v4023, 4294901760
    %4025 = vmatpush1.msra.mxu0 %v4024
    %4026 = vmatprep.subr.mxu0 0.0
    %v4027 = vand.u32 %v63, 4294901760
    %v4028 = vsub.f32 %v63, %v4027
    %v4029 = vand.u32 %v4028, 4294901760
    %4030 = vmatpush1.msra.mxu0 %v4029
    %4031 = vmatprep.subr.mxu0 0.0
    %v4032 = vand.u32 %v62, 4294901760
    %v4033 = vsub.f32 %v62, %v4032
    %v4034 = vand.u32 %v4033, 4294901760
    %4035 = vmatpush1.msra.mxu0 %v4034
    %4036 = vmatprep.subr.mxu0 0.0
    %v4037 = vand.u32 %v61, 4294901760
    %v4038 = vsub.f32 %v61, %v4037
    %v4039 = vand.u32 %v4038, 4294901760
    %4040 = vmatpush1.msra.mxu0 %v4039
    %4041 = vmatprep.subr.mxu0 0.0
    %v4042 = vand.u32 %v60, 4294901760
    %v4043 = vsub.f32 %v60, %v4042
    %v4044 = vand.u32 %v4043, 4294901760
    %4045 = vmatpush1.msra.mxu0 %v4044
    %4046 = vmatprep.subr.mxu0 0.0
    %v4047 = vand.u32 %v59, 4294901760
    %v4048 = vsub.f32 %v59, %v4047
    %v4049 = vand.u32 %v4048, 4294901760
    %4050 = vmatpush1.msra.mxu0 %v4049
    %4051 = vmatprep.subr.mxu0 0.0
    %v4052 = vand.u32 %v58, 4294901760
    %v4053 = vsub.f32 %v58, %v4052
    %v4054 = vand.u32 %v4053, 4294901760
    %4055 = vmatpush1.msra.mxu0 %v4054
    %4056 = vmatprep.subr.mxu0 0.0
    %v4057 = vand.u32 %v57, 4294901760
    %v4058 = vsub.f32 %v57, %v4057
    %v4059 = vand.u32 %v4058, 4294901760
    %4060 = vmatpush1.msra.mxu0 %v4059
    %4061 = vmatprep.subr.mxu0 0.0
    %v4062 = vand.u32 %v88, 4294901760
    %v4063 = vsub.f32 %v88, %v4062
    %v4064 = vand.u32 %v4063, 4294901760
    %4065 = vmatpush2.msra.mxu0 %v4064
    %4066 = vmatprep.subr.mxu0 0.0
    %v4067 = vand.u32 %v87, 4294901760
    %v4068 = vsub.f32 %v87, %v4067
    %v4069 = vand.u32 %v4068, 4294901760
    %4070 = vmatpush2.msra.mxu0 %v4069
    %4071 = vmatprep.subr.mxu0 0.0
    %v4072 = vand.u32 %v86, 4294901760
    %v4073 = vsub.f32 %v86, %v4072
    %v4074 = vand.u32 %v4073, 4294901760
    %4075 = vmatpush2.msra.mxu0 %v4074
    %4076 = vmatprep.subr.mxu0 0.0
    %v4077 = vand.u32 %v85, 4294901760
    %v4078 = vsub.f32 %v85, %v4077
    %v4079 = vand.u32 %v4078, 4294901760
    %4080 = vmatpush2.msra.mxu0 %v4079
    %4081 = vmatprep.subr.mxu0 0.0
    %v4082 = vand.u32 %v84, 4294901760
    %v4083 = vsub.f32 %v84, %v4082
    %v4084 = vand.u32 %v4083, 4294901760
    %4085 = vmatpush2.msra.mxu0 %v4084
    %4086 = vmatprep.subr.mxu0 0.0
    %v4087 = vand.u32 %v83, 4294901760
    %v4088 = vsub.f32 %v83, %v4087
    %v4089 = vand.u32 %v4088, 4294901760
    %4090 = vmatpush2.msra.mxu0 %v4089
    %4091 = vmatprep.subr.mxu0 0.0
    %v4092 = vand.u32 %v82, 4294901760
    %v4093 = vsub.f32 %v82, %v4092
    %v4094 = vand.u32 %v4093, 4294901760
    %4095 = vmatpush2.msra.mxu0 %v4094
    %4096 = vmatprep.subr.mxu0 0.0
    %v4097 = vand.u32 %v81, 4294901760
    %v4098 = vsub.f32 %v81, %v4097
    %v4099 = vand.u32 %v4098, 4294901760
    %4100 = vmatpush2.msra.mxu0 %v4099
    %4101 = vmatprep.subr.mxu0 0.0
    %v4102 = vand.u32 %v80, 4294901760
    %v4103 = vsub.f32 %v80, %v4102
    %v4104 = vand.u32 %v4103, 4294901760
    %4105 = vmatpush2.msra.mxu0 %v4104
    %4106 = vmatprep.subr.mxu0 0.0
    %v4107 = vand.u32 %v79, 4294901760
    %v4108 = vsub.f32 %v79, %v4107
    %v4109 = vand.u32 %v4108, 4294901760
    %4110 = vmatpush2.msra.mxu0 %v4109
    %4111 = vmatprep.subr.mxu0 0.0
    %v4112 = vand.u32 %v78, 4294901760
    %v4113 = vsub.f32 %v78, %v4112
    %v4114 = vand.u32 %v4113, 4294901760
    %4115 = vmatpush2.msra.mxu0 %v4114
    %4116 = vmatprep.subr.mxu0 0.0
    %v4117 = vand.u32 %v77, 4294901760
    %v4118 = vsub.f32 %v77, %v4117
    %v4119 = vand.u32 %v4118, 4294901760
    %4120 = vmatpush2.msra.mxu0 %v4119
    %4121 = vmatprep.subr.mxu0 0.0
    %v4122 = vand.u32 %v76, 4294901760
    %v4123 = vsub.f32 %v76, %v4122
    %v4124 = vand.u32 %v4123, 4294901760
    %4125 = vmatpush2.msra.mxu0 %v4124
    %4126 = vmatprep.subr.mxu0 0.0
    %v4127 = vand.u32 %v75, 4294901760
    %v4128 = vsub.f32 %v75, %v4127
    %v4129 = vand.u32 %v4128, 4294901760
    %4130 = vmatpush2.msra.mxu0 %v4129
    %4131 = vmatprep.subr.mxu0 0.0
    %v4132 = vand.u32 %v74, 4294901760
    %v4133 = vsub.f32 %v74, %v4132
    %v4134 = vand.u32 %v4133, 4294901760
    %4135 = vmatpush2.msra.mxu0 %v4134
    %4136 = vmatprep.subr.mxu0 0.0
    %v4137 = vand.u32 %v73, 4294901760
    %v4138 = vsub.f32 %v73, %v4137
    %v4139 = vand.u32 %v4138, 4294901760
    %4140 = vmatpush2.msra.mxu0 %v4139
    %v4141 = vand.u32 %v2519, 4294901760
    %4142 = vmatprep.mubr.f32.mxu0 %v4141
    %v4143 = vand.u32 %v2515, 4294901760
    %4144 = vmatmul.mubr.f32.gmra.mxu0 %v4143
    %v4145 = vpop.f32.mrf.mxu0
    %v4146 = vadd.f32 %v3978, %v4145
    %v4147 = vpop.f32.mrf.mxu0
    %4148 = vdwg.mxu0
    %4149 = vmatprep.subr.mxu0 0.0
    %v4150 = vand.u32 %v72, 4294901760
    %4151 = vmatpush1.msra.mxu0 %v4150
    %4152 = vmatprep.subr.mxu0 0.0
    %v4153 = vand.u32 %v71, 4294901760
    %4154 = vmatpush1.msra.mxu0 %v4153
    %4155 = vmatprep.subr.mxu0 0.0
    %v4156 = vand.u32 %v70, 4294901760
    %4157 = vmatpush1.msra.mxu0 %v4156
    %4158 = vmatprep.subr.mxu0 0.0
    %v4159 = vand.u32 %v69, 4294901760
    %4160 = vmatpush1.msra.mxu0 %v4159
    %4161 = vmatprep.subr.mxu0 0.0
    %v4162 = vand.u32 %v68, 4294901760
    %4163 = vmatpush1.msra.mxu0 %v4162
    %4164 = vmatprep.subr.mxu0 0.0
    %v4165 = vand.u32 %v67, 4294901760
    %4166 = vmatpush1.msra.mxu0 %v4165
    %4167 = vmatprep.subr.mxu0 0.0
    %v4168 = vand.u32 %v66, 4294901760
    %4169 = vmatpush1.msra.mxu0 %v4168
    %4170 = vmatprep.subr.mxu0 0.0
    %v4171 = vand.u32 %v65, 4294901760
    %4172 = vmatpush1.msra.mxu0 %v4171
    %4173 = vmatprep.subr.mxu0 0.0
    %v4174 = vand.u32 %v64, 4294901760
    %4175 = vmatpush1.msra.mxu0 %v4174
    %4176 = vmatprep.subr.mxu0 0.0
    %v4177 = vand.u32 %v63, 4294901760
    %4178 = vmatpush1.msra.mxu0 %v4177
    %4179 = vmatprep.subr.mxu0 0.0
    %v4180 = vand.u32 %v62, 4294901760
    %4181 = vmatpush1.msra.mxu0 %v4180
    %4182 = vmatprep.subr.mxu0 0.0
    %v4183 = vand.u32 %v61, 4294901760
    %4184 = vmatpush1.msra.mxu0 %v4183
    %4185 = vmatprep.subr.mxu0 0.0
    %v4186 = vand.u32 %v60, 4294901760
    %4187 = vmatpush1.msra.mxu0 %v4186
    %4188 = vmatprep.subr.mxu0 0.0
    %v4189 = vand.u32 %v59, 4294901760
    %4190 = vmatpush1.msra.mxu0 %v4189
    %4191 = vmatprep.subr.mxu0 0.0
    %v4192 = vand.u32 %v58, 4294901760
    %4193 = vmatpush1.msra.mxu0 %v4192
    %4194 = vmatprep.subr.mxu0 0.0
    %v4195 = vand.u32 %v57, 4294901760
    %4196 = vmatpush1.msra.mxu0 %v4195
    %4197 = vmatprep.subr.mxu0 0.0
    %v4198 = vand.u32 %v88, 4294901760
    %4199 = vmatpush2.msra.mxu0 %v4198
    %4200 = vmatprep.subr.mxu0 0.0
    %v4201 = vand.u32 %v87, 4294901760
    %4202 = vmatpush2.msra.mxu0 %v4201
    %4203 = vmatprep.subr.mxu0 0.0
    %v4204 = vand.u32 %v86, 4294901760
    %4205 = vmatpush2.msra.mxu0 %v4204
    %4206 = vmatprep.subr.mxu0 0.0
    %v4207 = vand.u32 %v85, 4294901760
    %4208 = vmatpush2.msra.mxu0 %v4207
    %4209 = vmatprep.subr.mxu0 0.0
    %v4210 = vand.u32 %v84, 4294901760
    %4211 = vmatpush2.msra.mxu0 %v4210
    %4212 = vmatprep.subr.mxu0 0.0
    %v4213 = vand.u32 %v83, 4294901760
    %4214 = vmatpush2.msra.mxu0 %v4213
    %4215 = vmatprep.subr.mxu0 0.0
    %v4216 = vand.u32 %v82, 4294901760
    %4217 = vmatpush2.msra.mxu0 %v4216
    %4218 = vmatprep.subr.mxu0 0.0
    %v4219 = vand.u32 %v81, 4294901760
    %4220 = vmatpush2.msra.mxu0 %v4219
    %4221 = vmatprep.subr.mxu0 0.0
    %v4222 = vand.u32 %v80, 4294901760
    %4223 = vmatpush2.msra.mxu0 %v4222
    %4224 = vmatprep.subr.mxu0 0.0
    %v4225 = vand.u32 %v79, 4294901760
    %4226 = vmatpush2.msra.mxu0 %v4225
    %4227 = vmatprep.subr.mxu0 0.0
    %v4228 = vand.u32 %v78, 4294901760
    %4229 = vmatpush2.msra.mxu0 %v4228
    %4230 = vmatprep.subr.mxu0 0.0
    %v4231 = vand.u32 %v77, 4294901760
    %4232 = vmatpush2.msra.mxu0 %v4231
    %4233 = vmatprep.subr.mxu0 0.0
    %v4234 = vand.u32 %v76, 4294901760
    %4235 = vmatpush2.msra.mxu0 %v4234
    %4236 = vmatprep.subr.mxu0 0.0
    %v4237 = vand.u32 %v75, 4294901760
    %4238 = vmatpush2.msra.mxu0 %v4237
    %4239 = vmatprep.subr.mxu0 0.0
    %v4240 = vand.u32 %v74, 4294901760
    %4241 = vmatpush2.msra.mxu0 %v4240
    %4242 = vmatprep.subr.mxu0 0.0
    %v4243 = vand.u32 %v73, 4294901760
    %4244 = vmatpush2.msra.mxu0 %v4243
    %v4245 = vand.u32 %v2519, 4294901760
    %4246 = vmatprep.mubr.f32.mxu0 %v4245
    %v4247 = vand.u32 %v2515, 4294901760
    %4248 = vmatmul.mubr.f32.gmra.mxu0 %v4247
    %v4249 = vpop.f32.mrf.mxu0
    %v4250 = vadd.f32 %v4146, %v4249
    %v4251 = vpop.f32.mrf.mxu0
    %4252 = vdwg.mxu0
    %4253 = vmatprep.subr.mxu0 0.0
    %v4254 = vand.u32 %v104, 4294901760
    %4255 = vmatpush1.msra.mxu0 %v4254
    %4256 = vmatprep.subr.mxu0 0.0
    %v4257 = vand.u32 %v103, 4294901760
    %4258 = vmatpush1.msra.mxu0 %v4257
    %4259 = vmatprep.subr.mxu0 0.0
    %v4260 = vand.u32 %v102, 4294901760
    %4261 = vmatpush1.msra.mxu0 %v4260
    %4262 = vmatprep.subr.mxu0 0.0
    %v4263 = vand.u32 %v101, 4294901760
    %4264 = vmatpush1.msra.mxu0 %v4263
    %4265 = vmatprep.subr.mxu0 0.0
    %v4266 = vand.u32 %v100, 4294901760
    %4267 = vmatpush1.msra.mxu0 %v4266
    %4268 = vmatprep.subr.mxu0 0.0
    %v4269 = vand.u32 %v99, 4294901760
    %4270 = vmatpush1.msra.mxu0 %v4269
    %4271 = vmatprep.subr.mxu0 0.0
    %v4272 = vand.u32 %v98, 4294901760
    %4273 = vmatpush1.msra.mxu0 %v4272
    %4274 = vmatprep.subr.mxu0 0.0
    %v4275 = vand.u32 %v97, 4294901760
    %4276 = vmatpush1.msra.mxu0 %v4275
    %4277 = vmatprep.subr.mxu0 0.0
    %v4278 = vand.u32 %v96, 4294901760
    %4279 = vmatpush1.msra.mxu0 %v4278
    %4280 = vmatprep.subr.mxu0 0.0
    %v4281 = vand.u32 %v95, 4294901760
    %4282 = vmatpush1.msra.mxu0 %v4281
    %4283 = vmatprep.subr.mxu0 0.0
    %v4284 = vand.u32 %v94, 4294901760
    %4285 = vmatpush1.msra.mxu0 %v4284
    %4286 = vmatprep.subr.mxu0 0.0
    %v4287 = vand.u32 %v93, 4294901760
    %4288 = vmatpush1.msra.mxu0 %v4287
    %4289 = vmatprep.subr.mxu0 0.0
    %v4290 = vand.u32 %v92, 4294901760
    %4291 = vmatpush1.msra.mxu0 %v4290
    %4292 = vmatprep.subr.mxu0 0.0
    %v4293 = vand.u32 %v91, 4294901760
    %4294 = vmatpush1.msra.mxu0 %v4293
    %4295 = vmatprep.subr.mxu0 0.0
    %v4296 = vand.u32 %v90, 4294901760
    %4297 = vmatpush1.msra.mxu0 %v4296
    %4298 = vmatprep.subr.mxu0 0.0
    %v4299 = vand.u32 %v89, 4294901760
    %4300 = vmatpush1.msra.mxu0 %v4299
    %4301 = vmatprep.subr.mxu0 0.0
    %4302 = vmatpush2.msra.mxu0 0.0
    %4303 = vmatprep.subr.mxu0 0.0
    %4304 = vmatpush2.msra.mxu0 0.0
    %4305 = vmatprep.subr.mxu0 0.0
    %4306 = vmatpush2.msra.mxu0 0.0
    %4307 = vmatprep.subr.mxu0 0.0
    %4308 = vmatpush2.msra.mxu0 0.0
    %4309 = vmatprep.subr.mxu0 0.0
    %4310 = vmatpush2.msra.mxu0 0.0
    %4311 = vmatprep.subr.mxu0 0.0
    %4312 = vmatpush2.msra.mxu0 0.0
    %4313 = vmatprep.subr.mxu0 0.0
    %4314 = vmatpush2.msra.mxu0 0.0
    %4315 = vmatprep.subr.mxu0 0.0
    %4316 = vmatpush2.msra.mxu0 0.0
    %4317 = vmatprep.subr.mxu0 0.0
    %4318 = vmatpush2.msra.mxu0 0.0
    %4319 = vmatprep.subr.mxu0 0.0
    %4320 = vmatpush2.msra.mxu0 0.0
    %4321 = vmatprep.subr.mxu0 0.0
    %4322 = vmatpush2.msra.mxu0 0.0
    %4323 = vmatprep.subr.mxu0 0.0
    %4324 = vmatpush2.msra.mxu0 0.0
    %4325 = vmatprep.subr.mxu0 0.0
    %4326 = vmatpush2.msra.mxu0 0.0
    %4327 = vmatprep.subr.mxu0 0.0
    %4328 = vmatpush2.msra.mxu0 0.0
    %4329 = vmatprep.subr.mxu0 0.0
    %4330 = vmatpush2.msra.mxu0 0.0
    %4331 = vmatprep.subr.mxu0 0.0
    %4332 = vmatpush2.msra.mxu0 0.0
    %4333 = vmatprep.mubr.f32.mxu0 0.0
    %v4334 = vand.u32 %v2523, 4294901760
    %v4335 = vsub.f32 %v2523, %v4334
    %v4336 = vand.u32 %v4335, 4294901760
    %v4337 = vsub.f32 %v4335, %v4336
    %v4338 = vand.u32 %v4337, 4294901760
    %4339 = vmatmul.mubr.f32.gmra.mxu0 %v4338
    %v4340 = vpop.f32.mrf.mxu0
    %v4341 = vadd.f32 %v4250, %v4340
    %v4342 = vpop.f32.mrf.mxu0
    %4343 = vdwg.mxu0
    %4344 = vmatprep.subr.mxu0 0.0
    %v4345 = vand.u32 %v104, 4294901760
    %v4346 = vsub.f32 %v104, %v4345
    %v4347 = vand.u32 %v4346, 4294901760
    %v4348 = vsub.f32 %v4346, %v4347
    %v4349 = vand.u32 %v4348, 4294901760
    %4350 = vmatpush1.msra.mxu0 %v4349
    %4351 = vmatprep.subr.mxu0 0.0
    %v4352 = vand.u32 %v103, 4294901760
    %v4353 = vsub.f32 %v103, %v4352
    %v4354 = vand.u32 %v4353, 4294901760
    %v4355 = vsub.f32 %v4353, %v4354
    %v4356 = vand.u32 %v4355, 4294901760
    %4357 = vmatpush1.msra.mxu0 %v4356
    %4358 = vmatprep.subr.mxu0 0.0
    %v4359 = vand.u32 %v102, 4294901760
    %v4360 = vsub.f32 %v102, %v4359
    %v4361 = vand.u32 %v4360, 4294901760
    %v4362 = vsub.f32 %v4360, %v4361
    %v4363 = vand.u32 %v4362, 4294901760
    %4364 = vmatpush1.msra.mxu0 %v4363
    %4365 = vmatprep.subr.mxu0 0.0
    %v4366 = vand.u32 %v101, 4294901760
    %v4367 = vsub.f32 %v101, %v4366
    %v4368 = vand.u32 %v4367, 4294901760
    %v4369 = vsub.f32 %v4367, %v4368
    %v4370 = vand.u32 %v4369, 4294901760
    %4371 = vmatpush1.msra.mxu0 %v4370
    %4372 = vmatprep.subr.mxu0 0.0
    %v4373 = vand.u32 %v100, 4294901760
    %v4374 = vsub.f32 %v100, %v4373
    %v4375 = vand.u32 %v4374, 4294901760
    %v4376 = vsub.f32 %v4374, %v4375
    %v4377 = vand.u32 %v4376, 4294901760
    %4378 = vmatpush1.msra.mxu0 %v4377
    %4379 = vmatprep.subr.mxu0 0.0
    %v4380 = vand.u32 %v99, 4294901760
    %v4381 = vsub.f32 %v99, %v4380
    %v4382 = vand.u32 %v4381, 4294901760
    %v4383 = vsub.f32 %v4381, %v4382
    %v4384 = vand.u32 %v4383, 4294901760
    %4385 = vmatpush1.msra.mxu0 %v4384
    %4386 = vmatprep.subr.mxu0 0.0
    %v4387 = vand.u32 %v98, 4294901760
    %v4388 = vsub.f32 %v98, %v4387
    %v4389 = vand.u32 %v4388, 4294901760
    %v4390 = vsub.f32 %v4388, %v4389
    %v4391 = vand.u32 %v4390, 4294901760
    %4392 = vmatpush1.msra.mxu0 %v4391
    %4393 = vmatprep.subr.mxu0 0.0
    %v4394 = vand.u32 %v97, 4294901760
    %v4395 = vsub.f32 %v97, %v4394
    %v4396 = vand.u32 %v4395, 4294901760
    %v4397 = vsub.f32 %v4395, %v4396
    %v4398 = vand.u32 %v4397, 4294901760
    %4399 = vmatpush1.msra.mxu0 %v4398
    %4400 = vmatprep.subr.mxu0 0.0
    %v4401 = vand.u32 %v96, 4294901760
    %v4402 = vsub.f32 %v96, %v4401
    %v4403 = vand.u32 %v4402, 4294901760
    %v4404 = vsub.f32 %v4402, %v4403
    %v4405 = vand.u32 %v4404, 4294901760
    %4406 = vmatpush1.msra.mxu0 %v4405
    %4407 = vmatprep.subr.mxu0 0.0
    %v4408 = vand.u32 %v95, 4294901760
    %v4409 = vsub.f32 %v95, %v4408
    %v4410 = vand.u32 %v4409, 4294901760
    %v4411 = vsub.f32 %v4409, %v4410
    %v4412 = vand.u32 %v4411, 4294901760
    %4413 = vmatpush1.msra.mxu0 %v4412
    %4414 = vmatprep.subr.mxu0 0.0
    %v4415 = vand.u32 %v94, 4294901760
    %v4416 = vsub.f32 %v94, %v4415
    %v4417 = vand.u32 %v4416, 4294901760
    %v4418 = vsub.f32 %v4416, %v4417
    %v4419 = vand.u32 %v4418, 4294901760
    %4420 = vmatpush1.msra.mxu0 %v4419
    %4421 = vmatprep.subr.mxu0 0.0
    %v4422 = vand.u32 %v93, 4294901760
    %v4423 = vsub.f32 %v93, %v4422
    %v4424 = vand.u32 %v4423, 4294901760
    %v4425 = vsub.f32 %v4423, %v4424
    %v4426 = vand.u32 %v4425, 4294901760
    %4427 = vmatpush1.msra.mxu0 %v4426
    %4428 = vmatprep.subr.mxu0 0.0
    %v4429 = vand.u32 %v92, 4294901760
    %v4430 = vsub.f32 %v92, %v4429
    %v4431 = vand.u32 %v4430, 4294901760
    %v4432 = vsub.f32 %v4430, %v4431
    %v4433 = vand.u32 %v4432, 4294901760
    %4434 = vmatpush1.msra.mxu0 %v4433
    %4435 = vmatprep.subr.mxu0 0.0
    %v4436 = vand.u32 %v91, 4294901760
    %v4437 = vsub.f32 %v91, %v4436
    %v4438 = vand.u32 %v4437, 4294901760
    %v4439 = vsub.f32 %v4437, %v4438
    %v4440 = vand.u32 %v4439, 4294901760
    %4441 = vmatpush1.msra.mxu0 %v4440
    %4442 = vmatprep.subr.mxu0 0.0
    %v4443 = vand.u32 %v90, 4294901760
    %v4444 = vsub.f32 %v90, %v4443
    %v4445 = vand.u32 %v4444, 4294901760
    %v4446 = vsub.f32 %v4444, %v4445
    %v4447 = vand.u32 %v4446, 4294901760
    %4448 = vmatpush1.msra.mxu0 %v4447
    %4449 = vmatprep.subr.mxu0 0.0
    %v4450 = vand.u32 %v89, 4294901760
    %v4451 = vsub.f32 %v89, %v4450
    %v4452 = vand.u32 %v4451, 4294901760
    %v4453 = vsub.f32 %v4451, %v4452
    %v4454 = vand.u32 %v4453, 4294901760
    %4455 = vmatpush1.msra.mxu0 %v4454
    %4456 = vmatprep.subr.mxu0 0.0
    %4457 = vmatpush2.msra.mxu0 0.0
    %4458 = vmatprep.subr.mxu0 0.0
    %4459 = vmatpush2.msra.mxu0 0.0
    %4460 = vmatprep.subr.mxu0 0.0
    %4461 = vmatpush2.msra.mxu0 0.0
    %4462 = vmatprep.subr.mxu0 0.0
    %4463 = vmatpush2.msra.mxu0 0.0
    %4464 = vmatprep.subr.mxu0 0.0
    %4465 = vmatpush2.msra.mxu0 0.0
    %4466 = vmatprep.subr.mxu0 0.0
    %4467 = vmatpush2.msra.mxu0 0.0
    %4468 = vmatprep.subr.mxu0 0.0
    %4469 = vmatpush2.msra.mxu0 0.0
    %4470 = vmatprep.subr.mxu0 0.0
    %4471 = vmatpush2.msra.mxu0 0.0
    %4472 = vmatprep.subr.mxu0 0.0
    %4473 = vmatpush2.msra.mxu0 0.0
    %4474 = vmatprep.subr.mxu0 0.0
    %4475 = vmatpush2.msra.mxu0 0.0
    %4476 = vmatprep.subr.mxu0 0.0
    %4477 = vmatpush2.msra.mxu0 0.0
    %4478 = vmatprep.subr.mxu0 0.0
    %4479 = vmatpush2.msra.mxu0 0.0
    %4480 = vmatprep.subr.mxu0 0.0
    %4481 = vmatpush2.msra.mxu0 0.0
    %4482 = vmatprep.subr.mxu0 0.0
    %4483 = vmatpush2.msra.mxu0 0.0
    %4484 = vmatprep.subr.mxu0 0.0
    %4485 = vmatpush2.msra.mxu0 0.0
    %4486 = vmatprep.subr.mxu0 0.0
    %4487 = vmatpush2.msra.mxu0 0.0
    %4488 = vmatprep.mubr.f32.mxu0 0.0
    %v4489 = vand.u32 %v2523, 4294901760
    %4490 = vmatmul.mubr.f32.gmra.mxu0 %v4489
    %v4491 = vpop.f32.mrf.mxu0
    %v4492 = vadd.f32 %v4341, %v4491
    %v4493 = vpop.f32.mrf.mxu0
    %4494 = vdwg.mxu0
    %4495 = vmatprep.subr.mxu0 0.0
    %v4496 = vand.u32 %v104, 4294901760
    %v4497 = vsub.f32 %v104, %v4496
    %4498 = vmatpush1.msra.mxu0 %v4497
    %4499 = vmatprep.subr.mxu0 0.0
    %v4500 = vand.u32 %v103, 4294901760
    %v4501 = vsub.f32 %v103, %v4500
    %4502 = vmatpush1.msra.mxu0 %v4501
    %4503 = vmatprep.subr.mxu0 0.0
    %v4504 = vand.u32 %v102, 4294901760
    %v4505 = vsub.f32 %v102, %v4504
    %4506 = vmatpush1.msra.mxu0 %v4505
    %4507 = vmatprep.subr.mxu0 0.0
    %v4508 = vand.u32 %v101, 4294901760
    %v4509 = vsub.f32 %v101, %v4508
    %4510 = vmatpush1.msra.mxu0 %v4509
    %4511 = vmatprep.subr.mxu0 0.0
    %v4512 = vand.u32 %v100, 4294901760
    %v4513 = vsub.f32 %v100, %v4512
    %4514 = vmatpush1.msra.mxu0 %v4513
    %4515 = vmatprep.subr.mxu0 0.0
    %v4516 = vand.u32 %v99, 4294901760
    %v4517 = vsub.f32 %v99, %v4516
    %4518 = vmatpush1.msra.mxu0 %v4517
    %4519 = vmatprep.subr.mxu0 0.0
    %v4520 = vand.u32 %v98, 4294901760
    %v4521 = vsub.f32 %v98, %v4520
    %4522 = vmatpush1.msra.mxu0 %v4521
    %4523 = vmatprep.subr.mxu0 0.0
    %v4524 = vand.u32 %v97, 4294901760
    %v4525 = vsub.f32 %v97, %v4524
    %4526 = vmatpush1.msra.mxu0 %v4525
    %4527 = vmatprep.subr.mxu0 0.0
    %v4528 = vand.u32 %v96, 4294901760
    %v4529 = vsub.f32 %v96, %v4528
    %4530 = vmatpush1.msra.mxu0 %v4529
    %4531 = vmatprep.subr.mxu0 0.0
    %v4532 = vand.u32 %v95, 4294901760
    %v4533 = vsub.f32 %v95, %v4532
    %4534 = vmatpush1.msra.mxu0 %v4533
    %4535 = vmatprep.subr.mxu0 0.0
    %v4536 = vand.u32 %v94, 4294901760
    %v4537 = vsub.f32 %v94, %v4536
    %4538 = vmatpush1.msra.mxu0 %v4537
    %4539 = vmatprep.subr.mxu0 0.0
    %v4540 = vand.u32 %v93, 4294901760
    %v4541 = vsub.f32 %v93, %v4540
    %4542 = vmatpush1.msra.mxu0 %v4541
    %4543 = vmatprep.subr.mxu0 0.0
    %v4544 = vand.u32 %v92, 4294901760
    %v4545 = vsub.f32 %v92, %v4544
    %4546 = vmatpush1.msra.mxu0 %v4545
    %4547 = vmatprep.subr.mxu0 0.0
    %v4548 = vand.u32 %v91, 4294901760
    %v4549 = vsub.f32 %v91, %v4548
    %4550 = vmatpush1.msra.mxu0 %v4549
    %4551 = vmatprep.subr.mxu0 0.0
    %v4552 = vand.u32 %v90, 4294901760
    %v4553 = vsub.f32 %v90, %v4552
    %4554 = vmatpush1.msra.mxu0 %v4553
    %4555 = vmatprep.subr.mxu0 0.0
    %v4556 = vand.u32 %v89, 4294901760
    %v4557 = vsub.f32 %v89, %v4556
    %4558 = vmatpush1.msra.mxu0 %v4557
    %4559 = vmatprep.subr.mxu0 0.0
    %4560 = vmatpush2.msra.mxu0 0.0
    %4561 = vmatprep.subr.mxu0 0.0
    %4562 = vmatpush2.msra.mxu0 0.0
    %4563 = vmatprep.subr.mxu0 0.0
    %4564 = vmatpush2.msra.mxu0 0.0
    %4565 = vmatprep.subr.mxu0 0.0
    %4566 = vmatpush2.msra.mxu0 0.0
    %4567 = vmatprep.subr.mxu0 0.0
    %4568 = vmatpush2.msra.mxu0 0.0
    %4569 = vmatprep.subr.mxu0 0.0
    %4570 = vmatpush2.msra.mxu0 0.0
    %4571 = vmatprep.subr.mxu0 0.0
    %4572 = vmatpush2.msra.mxu0 0.0
    %4573 = vmatprep.subr.mxu0 0.0
    %4574 = vmatpush2.msra.mxu0 0.0
    %4575 = vmatprep.subr.mxu0 0.0
    %4576 = vmatpush2.msra.mxu0 0.0
    %4577 = vmatprep.subr.mxu0 0.0
    %4578 = vmatpush2.msra.mxu0 0.0
    %4579 = vmatprep.subr.mxu0 0.0
    %4580 = vmatpush2.msra.mxu0 0.0
    %4581 = vmatprep.subr.mxu0 0.0
    %4582 = vmatpush2.msra.mxu0 0.0
    %4583 = vmatprep.subr.mxu0 0.0
    %4584 = vmatpush2.msra.mxu0 0.0
    %4585 = vmatprep.subr.mxu0 0.0
    %4586 = vmatpush2.msra.mxu0 0.0
    %4587 = vmatprep.subr.mxu0 0.0
    %4588 = vmatpush2.msra.mxu0 0.0
    %4589 = vmatprep.subr.mxu0 0.0
    %4590 = vmatpush2.msra.mxu0 0.0
    %4591 = vmatprep.mubr.f32.mxu0 0.0
    %v4592 = vand.u32 %v2523, 4294901760
    %v4593 = vsub.f32 %v2523, %v4592
    %4594 = vmatmul.mubr.f32.gmra.mxu0 %v4593
    %v4595 = vpop.f32.mrf.mxu0
    %v4596 = vadd.f32 %v4492, %v4595
    %v4597 = vpop.f32.mrf.mxu0
    %4598 = vdwg.mxu0
    %4599 = vmatprep.subr.mxu0 0.0
    %v4600 = vand.u32 %v104, 4294901760
    %4601 = vmatpush1.msra.mxu0 %v4600
    %4602 = vmatprep.subr.mxu0 0.0
    %v4603 = vand.u32 %v103, 4294901760
    %4604 = vmatpush1.msra.mxu0 %v4603
    %4605 = vmatprep.subr.mxu0 0.0
    %v4606 = vand.u32 %v102, 4294901760
    %4607 = vmatpush1.msra.mxu0 %v4606
    %4608 = vmatprep.subr.mxu0 0.0
    %v4609 = vand.u32 %v101, 4294901760
    %4610 = vmatpush1.msra.mxu0 %v4609
    %4611 = vmatprep.subr.mxu0 0.0
    %v4612 = vand.u32 %v100, 4294901760
    %4613 = vmatpush1.msra.mxu0 %v4612
    %4614 = vmatprep.subr.mxu0 0.0
    %v4615 = vand.u32 %v99, 4294901760
    %4616 = vmatpush1.msra.mxu0 %v4615
    %4617 = vmatprep.subr.mxu0 0.0
    %v4618 = vand.u32 %v98, 4294901760
    %4619 = vmatpush1.msra.mxu0 %v4618
    %4620 = vmatprep.subr.mxu0 0.0
    %v4621 = vand.u32 %v97, 4294901760
    %4622 = vmatpush1.msra.mxu0 %v4621
    %4623 = vmatprep.subr.mxu0 0.0
    %v4624 = vand.u32 %v96, 4294901760
    %4625 = vmatpush1.msra.mxu0 %v4624
    %4626 = vmatprep.subr.mxu0 0.0
    %v4627 = vand.u32 %v95, 4294901760
    %4628 = vmatpush1.msra.mxu0 %v4627
    %4629 = vmatprep.subr.mxu0 0.0
    %v4630 = vand.u32 %v94, 4294901760
    %4631 = vmatpush1.msra.mxu0 %v4630
    %4632 = vmatprep.subr.mxu0 0.0
    %v4633 = vand.u32 %v93, 4294901760
    %4634 = vmatpush1.msra.mxu0 %v4633
    %4635 = vmatprep.subr.mxu0 0.0
    %v4636 = vand.u32 %v92, 4294901760
    %4637 = vmatpush1.msra.mxu0 %v4636
    %4638 = vmatprep.subr.mxu0 0.0
    %v4639 = vand.u32 %v91, 4294901760
    %4640 = vmatpush1.msra.mxu0 %v4639
    %4641 = vmatprep.subr.mxu0 0.0
    %v4642 = vand.u32 %v90, 4294901760
    %4643 = vmatpush1.msra.mxu0 %v4642
    %4644 = vmatprep.subr.mxu0 0.0
    %v4645 = vand.u32 %v89, 4294901760
    %4646 = vmatpush1.msra.mxu0 %v4645
    %4647 = vmatprep.subr.mxu0 0.0
    %4648 = vmatpush2.msra.mxu0 0.0
    %4649 = vmatprep.subr.mxu0 0.0
    %4650 = vmatpush2.msra.mxu0 0.0
    %4651 = vmatprep.subr.mxu0 0.0
    %4652 = vmatpush2.msra.mxu0 0.0
    %4653 = vmatprep.subr.mxu0 0.0
    %4654 = vmatpush2.msra.mxu0 0.0
    %4655 = vmatprep.subr.mxu0 0.0
    %4656 = vmatpush2.msra.mxu0 0.0
    %4657 = vmatprep.subr.mxu0 0.0
    %4658 = vmatpush2.msra.mxu0 0.0
    %4659 = vmatprep.subr.mxu0 0.0
    %4660 = vmatpush2.msra.mxu0 0.0
    %4661 = vmatprep.subr.mxu0 0.0
    %4662 = vmatpush2.msra.mxu0 0.0
    %4663 = vmatprep.subr.mxu0 0.0
    %4664 = vmatpush2.msra.mxu0 0.0
    %4665 = vmatprep.subr.mxu0 0.0
    %4666 = vmatpush2.msra.mxu0 0.0
    %4667 = vmatprep.subr.mxu0 0.0
    %4668 = vmatpush2.msra.mxu0 0.0
    %4669 = vmatprep.subr.mxu0 0.0
    %4670 = vmatpush2.msra.mxu0 0.0
    %4671 = vmatprep.subr.mxu0 0.0
    %4672 = vmatpush2.msra.mxu0 0.0
    %4673 = vmatprep.subr.mxu0 0.0
    %4674 = vmatpush2.msra.mxu0 0.0
    %4675 = vmatprep.subr.mxu0 0.0
    %4676 = vmatpush2.msra.mxu0 0.0
    %4677 = vmatprep.subr.mxu0 0.0
    %4678 = vmatpush2.msra.mxu0 0.0
    %4679 = vmatprep.mubr.f32.mxu0 0.0
    %v4680 = vand.u32 %v2523, 4294901760
    %v4681 = vsub.f32 %v2523, %v4680
    %v4682 = vand.u32 %v4681, 4294901760
    %4683 = vmatmul.mubr.f32.gmra.mxu0 %v4682
    %v4684 = vpop.f32.mrf.mxu0
    %v4685 = vadd.f32 %v4596, %v4684
    %v4686 = vpop.f32.mrf.mxu0
    %4687 = vdwg.mxu0
    %4688 = vmatprep.subr.mxu0 0.0
    %v4689 = vand.u32 %v104, 4294901760
    %v4690 = vsub.f32 %v104, %v4689
    %v4691 = vand.u32 %v4690, 4294901760
    %4692 = vmatpush1.msra.mxu0 %v4691
    %4693 = vmatprep.subr.mxu0 0.0
    %v4694 = vand.u32 %v103, 4294901760
    %v4695 = vsub.f32 %v103, %v4694
    %v4696 = vand.u32 %v4695, 4294901760
    %4697 = vmatpush1.msra.mxu0 %v4696
    %4698 = vmatprep.subr.mxu0 0.0
    %v4699 = vand.u32 %v102, 4294901760
    %v4700 = vsub.f32 %v102, %v4699
    %v4701 = vand.u32 %v4700, 4294901760
    %4702 = vmatpush1.msra.mxu0 %v4701
    %4703 = vmatprep.subr.mxu0 0.0
    %v4704 = vand.u32 %v101, 4294901760
    %v4705 = vsub.f32 %v101, %v4704
    %v4706 = vand.u32 %v4705, 4294901760
    %4707 = vmatpush1.msra.mxu0 %v4706
    %4708 = vmatprep.subr.mxu0 0.0
    %v4709 = vand.u32 %v100, 4294901760
    %v4710 = vsub.f32 %v100, %v4709
    %v4711 = vand.u32 %v4710, 4294901760
    %4712 = vmatpush1.msra.mxu0 %v4711
    %4713 = vmatprep.subr.mxu0 0.0
    %v4714 = vand.u32 %v99, 4294901760
    %v4715 = vsub.f32 %v99, %v4714
    %v4716 = vand.u32 %v4715, 4294901760
    %4717 = vmatpush1.msra.mxu0 %v4716
    %4718 = vmatprep.subr.mxu0 0.0
    %v4719 = vand.u32 %v98, 4294901760
    %v4720 = vsub.f32 %v98, %v4719
    %v4721 = vand.u32 %v4720, 4294901760
    %4722 = vmatpush1.msra.mxu0 %v4721
    %4723 = vmatprep.subr.mxu0 0.0
    %v4724 = vand.u32 %v97, 4294901760
    %v4725 = vsub.f32 %v97, %v4724
    %v4726 = vand.u32 %v4725, 4294901760
    %4727 = vmatpush1.msra.mxu0 %v4726
    %4728 = vmatprep.subr.mxu0 0.0
    %v4729 = vand.u32 %v96, 4294901760
    %v4730 = vsub.f32 %v96, %v4729
    %v4731 = vand.u32 %v4730, 4294901760
    %4732 = vmatpush1.msra.mxu0 %v4731
    %4733 = vmatprep.subr.mxu0 0.0
    %v4734 = vand.u32 %v95, 4294901760
    %v4735 = vsub.f32 %v95, %v4734
    %v4736 = vand.u32 %v4735, 4294901760
    %4737 = vmatpush1.msra.mxu0 %v4736
    %4738 = vmatprep.subr.mxu0 0.0
    %v4739 = vand.u32 %v94, 4294901760
    %v4740 = vsub.f32 %v94, %v4739
    %v4741 = vand.u32 %v4740, 4294901760
    %4742 = vmatpush1.msra.mxu0 %v4741
    %4743 = vmatprep.subr.mxu0 0.0
    %v4744 = vand.u32 %v93, 4294901760
    %v4745 = vsub.f32 %v93, %v4744
    %v4746 = vand.u32 %v4745, 4294901760
    %4747 = vmatpush1.msra.mxu0 %v4746
    %4748 = vmatprep.subr.mxu0 0.0
    %v4749 = vand.u32 %v92, 4294901760
    %v4750 = vsub.f32 %v92, %v4749
    %v4751 = vand.u32 %v4750, 4294901760
    %4752 = vmatpush1.msra.mxu0 %v4751
    %4753 = vmatprep.subr.mxu0 0.0
    %v4754 = vand.u32 %v91, 4294901760
    %v4755 = vsub.f32 %v91, %v4754
    %v4756 = vand.u32 %v4755, 4294901760
    %4757 = vmatpush1.msra.mxu0 %v4756
    %4758 = vmatprep.subr.mxu0 0.0
    %v4759 = vand.u32 %v90, 4294901760
    %v4760 = vsub.f32 %v90, %v4759
    %v4761 = vand.u32 %v4760, 4294901760
    %4762 = vmatpush1.msra.mxu0 %v4761
    %4763 = vmatprep.subr.mxu0 0.0
    %v4764 = vand.u32 %v89, 4294901760
    %v4765 = vsub.f32 %v89, %v4764
    %v4766 = vand.u32 %v4765, 4294901760
    %4767 = vmatpush1.msra.mxu0 %v4766
    %4768 = vmatprep.subr.mxu0 0.0
    %4769 = vmatpush2.msra.mxu0 0.0
    %4770 = vmatprep.subr.mxu0 0.0
    %4771 = vmatpush2.msra.mxu0 0.0
    %4772 = vmatprep.subr.mxu0 0.0
    %4773 = vmatpush2.msra.mxu0 0.0
    %4774 = vmatprep.subr.mxu0 0.0
    %4775 = vmatpush2.msra.mxu0 0.0
    %4776 = vmatprep.subr.mxu0 0.0
    %4777 = vmatpush2.msra.mxu0 0.0
    %4778 = vmatprep.subr.mxu0 0.0
    %4779 = vmatpush2.msra.mxu0 0.0
    %4780 = vmatprep.subr.mxu0 0.0
    %4781 = vmatpush2.msra.mxu0 0.0
    %4782 = vmatprep.subr.mxu0 0.0
    %4783 = vmatpush2.msra.mxu0 0.0
    %4784 = vmatprep.subr.mxu0 0.0
    %4785 = vmatpush2.msra.mxu0 0.0
    %4786 = vmatprep.subr.mxu0 0.0
    %4787 = vmatpush2.msra.mxu0 0.0
    %4788 = vmatprep.subr.mxu0 0.0
    %4789 = vmatpush2.msra.mxu0 0.0
    %4790 = vmatprep.subr.mxu0 0.0
    %4791 = vmatpush2.msra.mxu0 0.0
    %4792 = vmatprep.subr.mxu0 0.0
    %4793 = vmatpush2.msra.mxu0 0.0
    %4794 = vmatprep.subr.mxu0 0.0
    %4795 = vmatpush2.msra.mxu0 0.0
    %4796 = vmatprep.subr.mxu0 0.0
    %4797 = vmatpush2.msra.mxu0 0.0
    %4798 = vmatprep.subr.mxu0 0.0
    %4799 = vmatpush2.msra.mxu0 0.0
    %4800 = vmatprep.mubr.f32.mxu0 0.0
    %v4801 = vand.u32 %v2523, 4294901760
    %4802 = vmatmul.mubr.f32.gmra.mxu0 %v4801
    %v4803 = vpop.f32.mrf.mxu0
    %v4804 = vadd.f32 %v4685, %v4803
    %v4805 = vpop.f32.mrf.mxu0
    %4806 = vdwg.mxu0
    %4807 = vmatprep.subr.mxu0 0.0
    %v4808 = vand.u32 %v104, 4294901760
    %4809 = vmatpush1.msra.mxu0 %v4808
    %4810 = vmatprep.subr.mxu0 0.0
    %v4811 = vand.u32 %v103, 4294901760
    %4812 = vmatpush1.msra.mxu0 %v4811
    %4813 = vmatprep.subr.mxu0 0.0
    %v4814 = vand.u32 %v102, 4294901760
    %4815 = vmatpush1.msra.mxu0 %v4814
    %4816 = vmatprep.subr.mxu0 0.0
    %v4817 = vand.u32 %v101, 4294901760
    %4818 = vmatpush1.msra.mxu0 %v4817
    %4819 = vmatprep.subr.mxu0 0.0
    %v4820 = vand.u32 %v100, 4294901760
    %4821 = vmatpush1.msra.mxu0 %v4820
    %4822 = vmatprep.subr.mxu0 0.0
    %v4823 = vand.u32 %v99, 4294901760
    %4824 = vmatpush1.msra.mxu0 %v4823
    %4825 = vmatprep.subr.mxu0 0.0
    %v4826 = vand.u32 %v98, 4294901760
    %4827 = vmatpush1.msra.mxu0 %v4826
    %4828 = vmatprep.subr.mxu0 0.0
    %v4829 = vand.u32 %v97, 4294901760
    %4830 = vmatpush1.msra.mxu0 %v4829
    %4831 = vmatprep.subr.mxu0 0.0
    %v4832 = vand.u32 %v96, 4294901760
    %4833 = vmatpush1.msra.mxu0 %v4832
    %4834 = vmatprep.subr.mxu0 0.0
    %v4835 = vand.u32 %v95, 4294901760
    %4836 = vmatpush1.msra.mxu0 %v4835
    %4837 = vmatprep.subr.mxu0 0.0
    %v4838 = vand.u32 %v94, 4294901760
    %4839 = vmatpush1.msra.mxu0 %v4838
    %4840 = vmatprep.subr.mxu0 0.0
    %v4841 = vand.u32 %v93, 4294901760
    %4842 = vmatpush1.msra.mxu0 %v4841
    %4843 = vmatprep.subr.mxu0 0.0
    %v4844 = vand.u32 %v92, 4294901760
    %4845 = vmatpush1.msra.mxu0 %v4844
    %4846 = vmatprep.subr.mxu0 0.0
    %v4847 = vand.u32 %v91, 4294901760
    %4848 = vmatpush1.msra.mxu0 %v4847
    %4849 = vmatprep.subr.mxu0 0.0
    %v4850 = vand.u32 %v90, 4294901760
    %4851 = vmatpush1.msra.mxu0 %v4850
    %4852 = vmatprep.subr.mxu0 0.0
    %v4853 = vand.u32 %v89, 4294901760
    %4854 = vmatpush1.msra.mxu0 %v4853
    %4855 = vmatprep.subr.mxu0 0.0
    %4856 = vmatpush2.msra.mxu0 0.0
    %4857 = vmatprep.subr.mxu0 0.0
    %4858 = vmatpush2.msra.mxu0 0.0
    %4859 = vmatprep.subr.mxu0 0.0
    %4860 = vmatpush2.msra.mxu0 0.0
    %4861 = vmatprep.subr.mxu0 0.0
    %4862 = vmatpush2.msra.mxu0 0.0
    %4863 = vmatprep.subr.mxu0 0.0
    %4864 = vmatpush2.msra.mxu0 0.0
    %4865 = vmatprep.subr.mxu0 0.0
    %4866 = vmatpush2.msra.mxu0 0.0
    %4867 = vmatprep.subr.mxu0 0.0
    %4868 = vmatpush2.msra.mxu0 0.0
    %4869 = vmatprep.subr.mxu0 0.0
    %4870 = vmatpush2.msra.mxu0 0.0
    %4871 = vmatprep.subr.mxu0 0.0
    %4872 = vmatpush2.msra.mxu0 0.0
    %4873 = vmatprep.subr.mxu0 0.0
    %4874 = vmatpush2.msra.mxu0 0.0
    %4875 = vmatprep.subr.mxu0 0.0
    %4876 = vmatpush2.msra.mxu0 0.0
    %4877 = vmatprep.subr.mxu0 0.0
    %4878 = vmatpush2.msra.mxu0 0.0
    %4879 = vmatprep.subr.mxu0 0.0
    %4880 = vmatpush2.msra.mxu0 0.0
    %4881 = vmatprep.subr.mxu0 0.0
    %4882 = vmatpush2.msra.mxu0 0.0
    %4883 = vmatprep.subr.mxu0 0.0
    %4884 = vmatpush2.msra.mxu0 0.0
    %4885 = vmatprep.subr.mxu0 0.0
    %4886 = vmatpush2.msra.mxu0 0.0
    %4887 = vmatprep.mubr.f32.mxu0 0.0
    %v4888 = vand.u32 %v2523, 4294901760
    %4889 = vmatmul.mubr.f32.gmra.mxu0 %v4888
    %v4890 = vpop.f32.mrf.mxu0
    %v4891 = vadd.f32 %v4804, %v4890
    %v4892 = vpop.f32.mrf.mxu0
    %4893 = vdwg.mxu0
    %v4894 = vxor.u32 %v4891, 2147483648
    %v4895 = vmul.f32 %v4894, 1.442695
    %v4896 = vpow.pop %v4895
    %v4897 = vadd.f32 %v4896, 1.0
    %v4898 = vrcp.pop %v4897
    %v4899 = vmul.f32 1.0, %v4898
    %v4900 = vadd.f32 %v2502, %v4899
    %v4901 = vrcp.pop %v4900
    %v4902 = vmul.f32 %v2502, %v4901
    %v4903 = vld [vmem:[%s2] sm:$0xff]
    %v4904 = vld [vmem:[%s2 + $0x8] sm:$0xff]
    %v4905 = vld [vmem:[%s2 + $0x10] sm:$0xff]
    %v4906 = vld [vmem:[%s2 + $0x18] sm:$0xff]
    %v4907 = vld [vmem:[%s2 + $0x20] sm:$0xff]
    %vm4908 = vcmask 64512
    %v4910 = vsel %vm4908, %v4902, 0
    %4912 = vmatprep.subr.mxu0 0.0
    %4913 = vmatpush1.msra.mxu0 0.0
    %4914 = vmatprep.subr.mxu0 0.0
    %4915 = vmatpush1.msra.mxu0 0.0
    %4916 = vmatprep.subr.mxu0 0.0
    %4917 = vmatpush1.msra.mxu0 0.0
    %4918 = vmatprep.subr.mxu0 0.0
    %4919 = vmatpush1.msra.mxu0 0.0
    %4920 = vmatprep.subr.mxu0 0.0
    %4921 = vmatpush1.msra.mxu0 0.0
    %4922 = vmatprep.subr.mxu0 0.0
    %4923 = vmatpush1.msra.mxu0 0.0
    %4924 = vmatprep.subr.mxu0 0.0
    %4925 = vmatpush1.msra.mxu0 0.0
    %4926 = vmatprep.subr.mxu0 0.0
    %4927 = vmatpush1.msra.mxu0 0.0
    %4928 = vmatprep.subr.mxu0 0.0
    %4929 = vmatpush1.msra.mxu0 0.0
    %4930 = vmatprep.subr.mxu0 0.0
    %4931 = vmatpush1.msra.mxu0 0.0
    %4932 = vmatprep.subr.mxu0 0.0
    %4933 = vmatpush1.msra.mxu0 0.0
    %4934 = vmatprep.subr.mxu0 0.0
    %4935 = vmatpush1.msra.mxu0 0.0
    %4936 = vmatprep.subr.mxu0 0.0
    %4937 = vmatpush1.msra.mxu0 0.0
    %4938 = vmatprep.subr.mxu0 0.0
    %4939 = vmatpush1.msra.mxu0 0.0
    %4940 = vmatprep.subr.mxu0 0.0
    %4941 = vmatpush1.msra.mxu0 0.0
    %v4942 = vand.u32 %v4904, 4294901760
    %4943 = vmatprep.subr.mxu0 %v4942
    %v4944 = vand.u32 %v4903, 4294901760
    %4945 = vmatpush1.msra.mxu0 %v4944
    %4946 = vmatprep.subr.mxu0 0.0
    %4947 = vmatpush2.msra.mxu0 0.0
    %4948 = vmatprep.subr.mxu0 0.0
    %4949 = vmatpush2.msra.mxu0 0.0
    %4950 = vmatprep.subr.mxu0 0.0
    %4951 = vmatpush2.msra.mxu0 0.0
    %4952 = vmatprep.subr.mxu0 0.0
    %4953 = vmatpush2.msra.mxu0 0.0
    %4954 = vmatprep.subr.mxu0 0.0
    %4955 = vmatpush2.msra.mxu0 0.0
    %4956 = vmatprep.subr.mxu0 0.0
    %4957 = vmatpush2.msra.mxu0 0.0
    %4958 = vmatprep.subr.mxu0 0.0
    %4959 = vmatpush2.msra.mxu0 0.0
    %4960 = vmatprep.subr.mxu0 0.0
    %4961 = vmatpush2.msra.mxu0 0.0
    %4962 = vmatprep.subr.mxu0 0.0
    %4963 = vmatpush2.msra.mxu0 0.0
    %4964 = vmatprep.subr.mxu0 0.0
    %4965 = vmatpush2.msra.mxu0 0.0
    %4966 = vmatprep.subr.mxu0 0.0
    %4967 = vmatpush2.msra.mxu0 0.0
    %4968 = vmatprep.subr.mxu0 0.0
    %4969 = vmatpush2.msra.mxu0 0.0
    %4970 = vmatprep.subr.mxu0 0.0
    %4971 = vmatpush2.msra.mxu0 0.0
    %4972 = vmatprep.subr.mxu0 0.0
    %4973 = vmatpush2.msra.mxu0 0.0
    %4974 = vmatprep.subr.mxu0 0.0
    %4975 = vmatpush2.msra.mxu0 0.0
    %4976 = vmatprep.subr.mxu0 0.0
    %4977 = vmatpush2.msra.mxu0 0.0
    %4978 = vmatprep.mubr.f32.mxu0 0.0
    %v4979 = vand.u32 %v4910, 4294901760
    %v4980 = vsub.f32 %v4910, %v4979
    %v4981 = vand.u32 %v4980, 4294901760
    %v4982 = vsub.f32 %v4980, %v4981
    %v4983 = vand.u32 %v4982, 4294901760
    %4984 = vmatmul.mubr.f32.gmra.mxu0 %v4983
    %v4985 = vpop.f32.mrf.mxu0
    %v4986 = vadd.f32 0.0, %v4985
    %v4987 = vpop.f32.mrf.mxu0
    %v4988 = vadd.f32 0.0, %v4987
    %4989 = vdwg.mxu0
    %4990 = vmatprep.subr.mxu0 0.0
    %4991 = vmatpush1.msra.mxu0 0.0
    %4992 = vmatprep.subr.mxu0 0.0
    %4993 = vmatpush1.msra.mxu0 0.0
    %4994 = vmatprep.subr.mxu0 0.0
    %4995 = vmatpush1.msra.mxu0 0.0
    %4996 = vmatprep.subr.mxu0 0.0
    %4997 = vmatpush1.msra.mxu0 0.0
    %4998 = vmatprep.subr.mxu0 0.0
    %4999 = vmatpush1.msra.mxu0 0.0
    %5000 = vmatprep.subr.mxu0 0.0
    %5001 = vmatpush1.msra.mxu0 0.0
    %5002 = vmatprep.subr.mxu0 0.0
    %5003 = vmatpush1.msra.mxu0 0.0
    %5004 = vmatprep.subr.mxu0 0.0
    %5005 = vmatpush1.msra.mxu0 0.0
    %5006 = vmatprep.subr.mxu0 0.0
    %5007 = vmatpush1.msra.mxu0 0.0
    %5008 = vmatprep.subr.mxu0 0.0
    %5009 = vmatpush1.msra.mxu0 0.0
    %5010 = vmatprep.subr.mxu0 0.0
    %5011 = vmatpush1.msra.mxu0 0.0
    %5012 = vmatprep.subr.mxu0 0.0
    %5013 = vmatpush1.msra.mxu0 0.0
    %5014 = vmatprep.subr.mxu0 0.0
    %5015 = vmatpush1.msra.mxu0 0.0
    %5016 = vmatprep.subr.mxu0 0.0
    %5017 = vmatpush1.msra.mxu0 0.0
    %5018 = vmatprep.subr.mxu0 0.0
    %5019 = vmatpush1.msra.mxu0 0.0
    %v5020 = vand.u32 %v4904, 4294901760
    %v5021 = vsub.f32 %v4904, %v5020
    %v5022 = vand.u32 %v5021, 4294901760
    %v5023 = vsub.f32 %v5021, %v5022
    %v5024 = vand.u32 %v5023, 4294901760
    %5025 = vmatprep.subr.mxu0 %v5024
    %v5026 = vand.u32 %v4903, 4294901760
    %v5027 = vsub.f32 %v4903, %v5026
    %v5028 = vand.u32 %v5027, 4294901760
    %v5029 = vsub.f32 %v5027, %v5028
    %v5030 = vand.u32 %v5029, 4294901760
    %5031 = vmatpush1.msra.mxu0 %v5030
    %5032 = vmatprep.subr.mxu0 0.0
    %5033 = vmatpush2.msra.mxu0 0.0
    %5034 = vmatprep.subr.mxu0 0.0
    %5035 = vmatpush2.msra.mxu0 0.0
    %5036 = vmatprep.subr.mxu0 0.0
    %5037 = vmatpush2.msra.mxu0 0.0
    %5038 = vmatprep.subr.mxu0 0.0
    %5039 = vmatpush2.msra.mxu0 0.0
    %5040 = vmatprep.subr.mxu0 0.0
    %5041 = vmatpush2.msra.mxu0 0.0
    %5042 = vmatprep.subr.mxu0 0.0
    %5043 = vmatpush2.msra.mxu0 0.0
    %5044 = vmatprep.subr.mxu0 0.0
    %5045 = vmatpush2.msra.mxu0 0.0
    %5046 = vmatprep.subr.mxu0 0.0
    %5047 = vmatpush2.msra.mxu0 0.0
    %5048 = vmatprep.subr.mxu0 0.0
    %5049 = vmatpush2.msra.mxu0 0.0
    %5050 = vmatprep.subr.mxu0 0.0
    %5051 = vmatpush2.msra.mxu0 0.0
    %5052 = vmatprep.subr.mxu0 0.0
    %5053 = vmatpush2.msra.mxu0 0.0
    %5054 = vmatprep.subr.mxu0 0.0
    %5055 = vmatpush2.msra.mxu0 0.0
    %5056 = vmatprep.subr.mxu0 0.0
    %5057 = vmatpush2.msra.mxu0 0.0
    %5058 = vmatprep.subr.mxu0 0.0
    %5059 = vmatpush2.msra.mxu0 0.0
    %5060 = vmatprep.subr.mxu0 0.0
    %5061 = vmatpush2.msra.mxu0 0.0
    %5062 = vmatprep.subr.mxu0 0.0
    %5063 = vmatpush2.msra.mxu0 0.0
    %5064 = vmatprep.mubr.f32.mxu0 0.0
    %v5065 = vand.u32 %v4910, 4294901760
    %5066 = vmatmul.mubr.f32.gmra.mxu0 %v5065
    %v5067 = vpop.f32.mrf.mxu0
    %v5068 = vadd.f32 %v4986, %v5067
    %v5069 = vpop.f32.mrf.mxu0
    %v5070 = vadd.f32 %v4988, %v5069
    %5071 = vdwg.mxu0
    %5072 = vmatprep.subr.mxu0 0.0
    %5073 = vmatpush1.msra.mxu0 0.0
    %5074 = vmatprep.subr.mxu0 0.0
    %5075 = vmatpush1.msra.mxu0 0.0
    %5076 = vmatprep.subr.mxu0 0.0
    %5077 = vmatpush1.msra.mxu0 0.0
    %5078 = vmatprep.subr.mxu0 0.0
    %5079 = vmatpush1.msra.mxu0 0.0
    %5080 = vmatprep.subr.mxu0 0.0
    %5081 = vmatpush1.msra.mxu0 0.0
    %5082 = vmatprep.subr.mxu0 0.0
    %5083 = vmatpush1.msra.mxu0 0.0
    %5084 = vmatprep.subr.mxu0 0.0
    %5085 = vmatpush1.msra.mxu0 0.0
    %5086 = vmatprep.subr.mxu0 0.0
    %5087 = vmatpush1.msra.mxu0 0.0
    %5088 = vmatprep.subr.mxu0 0.0
    %5089 = vmatpush1.msra.mxu0 0.0
    %5090 = vmatprep.subr.mxu0 0.0
    %5091 = vmatpush1.msra.mxu0 0.0
    %5092 = vmatprep.subr.mxu0 0.0
    %5093 = vmatpush1.msra.mxu0 0.0
    %5094 = vmatprep.subr.mxu0 0.0
    %5095 = vmatpush1.msra.mxu0 0.0
    %5096 = vmatprep.subr.mxu0 0.0
    %5097 = vmatpush1.msra.mxu0 0.0
    %5098 = vmatprep.subr.mxu0 0.0
    %5099 = vmatpush1.msra.mxu0 0.0
    %5100 = vmatprep.subr.mxu0 0.0
    %5101 = vmatpush1.msra.mxu0 0.0
    %v5102 = vand.u32 %v4904, 4294901760
    %v5103 = vsub.f32 %v4904, %v5102
    %5104 = vmatprep.subr.mxu0 %v5103
    %v5105 = vand.u32 %v4903, 4294901760
    %v5106 = vsub.f32 %v4903, %v5105
    %5107 = vmatpush1.msra.mxu0 %v5106
    %5108 = vmatprep.subr.mxu0 0.0
    %5109 = vmatpush2.msra.mxu0 0.0
    %5110 = vmatprep.subr.mxu0 0.0
    %5111 = vmatpush2.msra.mxu0 0.0
    %5112 = vmatprep.subr.mxu0 0.0
    %5113 = vmatpush2.msra.mxu0 0.0
    %5114 = vmatprep.subr.mxu0 0.0
    %5115 = vmatpush2.msra.mxu0 0.0
    %5116 = vmatprep.subr.mxu0 0.0
    %5117 = vmatpush2.msra.mxu0 0.0
    %5118 = vmatprep.subr.mxu0 0.0
    %5119 = vmatpush2.msra.mxu0 0.0
    %5120 = vmatprep.subr.mxu0 0.0
    %5121 = vmatpush2.msra.mxu0 0.0
    %5122 = vmatprep.subr.mxu0 0.0
    %5123 = vmatpush2.msra.mxu0 0.0
    %5124 = vmatprep.subr.mxu0 0.0
    %5125 = vmatpush2.msra.mxu0 0.0
    %5126 = vmatprep.subr.mxu0 0.0
    %5127 = vmatpush2.msra.mxu0 0.0
    %5128 = vmatprep.subr.mxu0 0.0
    %5129 = vmatpush2.msra.mxu0 0.0
    %5130 = vmatprep.subr.mxu0 0.0
    %5131 = vmatpush2.msra.mxu0 0.0
    %5132 = vmatprep.subr.mxu0 0.0
    %5133 = vmatpush2.msra.mxu0 0.0
    %5134 = vmatprep.subr.mxu0 0.0
    %5135 = vmatpush2.msra.mxu0 0.0
    %5136 = vmatprep.subr.mxu0 0.0
    %5137 = vmatpush2.msra.mxu0 0.0
    %5138 = vmatprep.subr.mxu0 0.0
    %5139 = vmatpush2.msra.mxu0 0.0
    %5140 = vmatprep.mubr.f32.mxu0 0.0
    %v5141 = vand.u32 %v4910, 4294901760
    %v5142 = vsub.f32 %v4910, %v5141
    %5143 = vmatmul.mubr.f32.gmra.mxu0 %v5142
    %v5144 = vpop.f32.mrf.mxu0
    %v5145 = vadd.f32 %v5068, %v5144
    %v5146 = vpop.f32.mrf.mxu0
    %v5147 = vadd.f32 %v5070, %v5146
    %5148 = vdwg.mxu0
    %5149 = vmatprep.subr.mxu0 0.0
    %5150 = vmatpush1.msra.mxu0 0.0
    %5151 = vmatprep.subr.mxu0 0.0
    %5152 = vmatpush1.msra.mxu0 0.0
    %5153 = vmatprep.subr.mxu0 0.0
    %5154 = vmatpush1.msra.mxu0 0.0
    %5155 = vmatprep.subr.mxu0 0.0
    %5156 = vmatpush1.msra.mxu0 0.0
    %5157 = vmatprep.subr.mxu0 0.0
    %5158 = vmatpush1.msra.mxu0 0.0
    %5159 = vmatprep.subr.mxu0 0.0
    %5160 = vmatpush1.msra.mxu0 0.0
    %5161 = vmatprep.subr.mxu0 0.0
    %5162 = vmatpush1.msra.mxu0 0.0
    %5163 = vmatprep.subr.mxu0 0.0
    %5164 = vmatpush1.msra.mxu0 0.0
    %5165 = vmatprep.subr.mxu0 0.0
    %5166 = vmatpush1.msra.mxu0 0.0
    %5167 = vmatprep.subr.mxu0 0.0
    %5168 = vmatpush1.msra.mxu0 0.0
    %5169 = vmatprep.subr.mxu0 0.0
    %5170 = vmatpush1.msra.mxu0 0.0
    %5171 = vmatprep.subr.mxu0 0.0
    %5172 = vmatpush1.msra.mxu0 0.0
    %5173 = vmatprep.subr.mxu0 0.0
    %5174 = vmatpush1.msra.mxu0 0.0
    %5175 = vmatprep.subr.mxu0 0.0
    %5176 = vmatpush1.msra.mxu0 0.0
    %5177 = vmatprep.subr.mxu0 0.0
    %5178 = vmatpush1.msra.mxu0 0.0
    %v5179 = vand.u32 %v4904, 4294901760
    %5180 = vmatprep.subr.mxu0 %v5179
    %v5181 = vand.u32 %v4903, 4294901760
    %5182 = vmatpush1.msra.mxu0 %v5181
    %5183 = vmatprep.subr.mxu0 0.0
    %5184 = vmatpush2.msra.mxu0 0.0
    %5185 = vmatprep.subr.mxu0 0.0
    %5186 = vmatpush2.msra.mxu0 0.0
    %5187 = vmatprep.subr.mxu0 0.0
    %5188 = vmatpush2.msra.mxu0 0.0
    %5189 = vmatprep.subr.mxu0 0.0
    %5190 = vmatpush2.msra.mxu0 0.0
    %5191 = vmatprep.subr.mxu0 0.0
    %5192 = vmatpush2.msra.mxu0 0.0
    %5193 = vmatprep.subr.mxu0 0.0
    %5194 = vmatpush2.msra.mxu0 0.0
    %5195 = vmatprep.subr.mxu0 0.0
    %5196 = vmatpush2.msra.mxu0 0.0
    %5197 = vmatprep.subr.mxu0 0.0
    %5198 = vmatpush2.msra.mxu0 0.0
    %5199 = vmatprep.subr.mxu0 0.0
    %5200 = vmatpush2.msra.mxu0 0.0
    %5201 = vmatprep.subr.mxu0 0.0
    %5202 = vmatpush2.msra.mxu0 0.0
    %5203 = vmatprep.subr.mxu0 0.0
    %5204 = vmatpush2.msra.mxu0 0.0
    %5205 = vmatprep.subr.mxu0 0.0
    %5206 = vmatpush2.msra.mxu0 0.0
    %5207 = vmatprep.subr.mxu0 0.0
    %5208 = vmatpush2.msra.mxu0 0.0
    %5209 = vmatprep.subr.mxu0 0.0
    %5210 = vmatpush2.msra.mxu0 0.0
    %5211 = vmatprep.subr.mxu0 0.0
    %5212 = vmatpush2.msra.mxu0 0.0
    %5213 = vmatprep.subr.mxu0 0.0
    %5214 = vmatpush2.msra.mxu0 0.0
    %5215 = vmatprep.mubr.f32.mxu0 0.0
    %v5216 = vand.u32 %v4910, 4294901760
    %v5217 = vsub.f32 %v4910, %v5216
    %v5218 = vand.u32 %v5217, 4294901760
    %5219 = vmatmul.mubr.f32.gmra.mxu0 %v5218
    %v5220 = vpop.f32.mrf.mxu0
    %v5221 = vadd.f32 %v5145, %v5220
    %v5222 = vpop.f32.mrf.mxu0
    %v5223 = vadd.f32 %v5147, %v5222
    %5224 = vdwg.mxu0
    %5225 = vmatprep.subr.mxu0 0.0
    %5226 = vmatpush1.msra.mxu0 0.0
    %5227 = vmatprep.subr.mxu0 0.0
    %5228 = vmatpush1.msra.mxu0 0.0
    %5229 = vmatprep.subr.mxu0 0.0
    %5230 = vmatpush1.msra.mxu0 0.0
    %5231 = vmatprep.subr.mxu0 0.0
    %5232 = vmatpush1.msra.mxu0 0.0
    %5233 = vmatprep.subr.mxu0 0.0
    %5234 = vmatpush1.msra.mxu0 0.0
    %5235 = vmatprep.subr.mxu0 0.0
    %5236 = vmatpush1.msra.mxu0 0.0
    %5237 = vmatprep.subr.mxu0 0.0
    %5238 = vmatpush1.msra.mxu0 0.0
    %5239 = vmatprep.subr.mxu0 0.0
    %5240 = vmatpush1.msra.mxu0 0.0
    %5241 = vmatprep.subr.mxu0 0.0
    %5242 = vmatpush1.msra.mxu0 0.0
    %5243 = vmatprep.subr.mxu0 0.0
    %5244 = vmatpush1.msra.mxu0 0.0
    %5245 = vmatprep.subr.mxu0 0.0
    %5246 = vmatpush1.msra.mxu0 0.0
    %5247 = vmatprep.subr.mxu0 0.0
    %5248 = vmatpush1.msra.mxu0 0.0
    %5249 = vmatprep.subr.mxu0 0.0
    %5250 = vmatpush1.msra.mxu0 0.0
    %5251 = vmatprep.subr.mxu0 0.0
    %5252 = vmatpush1.msra.mxu0 0.0
    %5253 = vmatprep.subr.mxu0 0.0
    %5254 = vmatpush1.msra.mxu0 0.0
    %v5255 = vand.u32 %v4904, 4294901760
    %v5256 = vsub.f32 %v4904, %v5255
    %v5257 = vand.u32 %v5256, 4294901760
    %5258 = vmatprep.subr.mxu0 %v5257
    %v5259 = vand.u32 %v4903, 4294901760
    %v5260 = vsub.f32 %v4903, %v5259
    %v5261 = vand.u32 %v5260, 4294901760
    %5262 = vmatpush1.msra.mxu0 %v5261
    %5263 = vmatprep.subr.mxu0 0.0
    %5264 = vmatpush2.msra.mxu0 0.0
    %5265 = vmatprep.subr.mxu0 0.0
    %5266 = vmatpush2.msra.mxu0 0.0
    %5267 = vmatprep.subr.mxu0 0.0
    %5268 = vmatpush2.msra.mxu0 0.0
    %5269 = vmatprep.subr.mxu0 0.0
    %5270 = vmatpush2.msra.mxu0 0.0
    %5271 = vmatprep.subr.mxu0 0.0
    %5272 = vmatpush2.msra.mxu0 0.0
    %5273 = vmatprep.subr.mxu0 0.0
    %5274 = vmatpush2.msra.mxu0 0.0
    %5275 = vmatprep.subr.mxu0 0.0
    %5276 = vmatpush2.msra.mxu0 0.0
    %5277 = vmatprep.subr.mxu0 0.0
    %5278 = vmatpush2.msra.mxu0 0.0
    %5279 = vmatprep.subr.mxu0 0.0
    %5280 = vmatpush2.msra.mxu0 0.0
    %5281 = vmatprep.subr.mxu0 0.0
    %5282 = vmatpush2.msra.mxu0 0.0
    %5283 = vmatprep.subr.mxu0 0.0
    %5284 = vmatpush2.msra.mxu0 0.0
    %5285 = vmatprep.subr.mxu0 0.0
    %5286 = vmatpush2.msra.mxu0 0.0
    %5287 = vmatprep.subr.mxu0 0.0
    %5288 = vmatpush2.msra.mxu0 0.0
    %5289 = vmatprep.subr.mxu0 0.0
    %5290 = vmatpush2.msra.mxu0 0.0
    %5291 = vmatprep.subr.mxu0 0.0
    %5292 = vmatpush2.msra.mxu0 0.0
    %5293 = vmatprep.subr.mxu0 0.0
    %5294 = vmatpush2.msra.mxu0 0.0
    %5295 = vmatprep.mubr.f32.mxu0 0.0
    %v5296 = vand.u32 %v4910, 4294901760
    %5297 = vmatmul.mubr.f32.gmra.mxu0 %v5296
    %v5298 = vpop.f32.mrf.mxu0
    %v5299 = vadd.f32 %v5221, %v5298
    %v5300 = vpop.f32.mrf.mxu0
    %v5301 = vadd.f32 %v5223, %v5300
    %5302 = vdwg.mxu0
    %5303 = vmatprep.subr.mxu0 0.0
    %5304 = vmatpush1.msra.mxu0 0.0
    %5305 = vmatprep.subr.mxu0 0.0
    %5306 = vmatpush1.msra.mxu0 0.0
    %5307 = vmatprep.subr.mxu0 0.0
    %5308 = vmatpush1.msra.mxu0 0.0
    %5309 = vmatprep.subr.mxu0 0.0
    %5310 = vmatpush1.msra.mxu0 0.0
    %5311 = vmatprep.subr.mxu0 0.0
    %5312 = vmatpush1.msra.mxu0 0.0
    %5313 = vmatprep.subr.mxu0 0.0
    %5314 = vmatpush1.msra.mxu0 0.0
    %5315 = vmatprep.subr.mxu0 0.0
    %5316 = vmatpush1.msra.mxu0 0.0
    %5317 = vmatprep.subr.mxu0 0.0
    %5318 = vmatpush1.msra.mxu0 0.0
    %5319 = vmatprep.subr.mxu0 0.0
    %5320 = vmatpush1.msra.mxu0 0.0
    %5321 = vmatprep.subr.mxu0 0.0
    %5322 = vmatpush1.msra.mxu0 0.0
    %5323 = vmatprep.subr.mxu0 0.0
    %5324 = vmatpush1.msra.mxu0 0.0
    %5325 = vmatprep.subr.mxu0 0.0
    %5326 = vmatpush1.msra.mxu0 0.0
    %5327 = vmatprep.subr.mxu0 0.0
    %5328 = vmatpush1.msra.mxu0 0.0
    %5329 = vmatprep.subr.mxu0 0.0
    %5330 = vmatpush1.msra.mxu0 0.0
    %5331 = vmatprep.subr.mxu0 0.0
    %5332 = vmatpush1.msra.mxu0 0.0
    %v5333 = vand.u32 %v4904, 4294901760
    %5334 = vmatprep.subr.mxu0 %v5333
    %v5335 = vand.u32 %v4903, 4294901760
    %5336 = vmatpush1.msra.mxu0 %v5335
    %5337 = vmatprep.subr.mxu0 0.0
    %5338 = vmatpush2.msra.mxu0 0.0
    %5339 = vmatprep.subr.mxu0 0.0
    %5340 = vmatpush2.msra.mxu0 0.0
    %5341 = vmatprep.subr.mxu0 0.0
    %5342 = vmatpush2.msra.mxu0 0.0
    %5343 = vmatprep.subr.mxu0 0.0
    %5344 = vmatpush2.msra.mxu0 0.0
    %5345 = vmatprep.subr.mxu0 0.0
    %5346 = vmatpush2.msra.mxu0 0.0
    %5347 = vmatprep.subr.mxu0 0.0
    %5348 = vmatpush2.msra.mxu0 0.0
    %5349 = vmatprep.subr.mxu0 0.0
    %5350 = vmatpush2.msra.mxu0 0.0
    %5351 = vmatprep.subr.mxu0 0.0
    %5352 = vmatpush2.msra.mxu0 0.0
    %5353 = vmatprep.subr.mxu0 0.0
    %5354 = vmatpush2.msra.mxu0 0.0
    %5355 = vmatprep.subr.mxu0 0.0
    %5356 = vmatpush2.msra.mxu0 0.0
    %5357 = vmatprep.subr.mxu0 0.0
    %5358 = vmatpush2.msra.mxu0 0.0
    %5359 = vmatprep.subr.mxu0 0.0
    %5360 = vmatpush2.msra.mxu0 0.0
    %5361 = vmatprep.subr.mxu0 0.0
    %5362 = vmatpush2.msra.mxu0 0.0
    %5363 = vmatprep.subr.mxu0 0.0
    %5364 = vmatpush2.msra.mxu0 0.0
    %5365 = vmatprep.subr.mxu0 0.0
    %5366 = vmatpush2.msra.mxu0 0.0
    %5367 = vmatprep.subr.mxu0 0.0
    %5368 = vmatpush2.msra.mxu0 0.0
    %5369 = vmatprep.mubr.f32.mxu0 0.0
    %v5370 = vand.u32 %v4910, 4294901760
    %5371 = vmatmul.mubr.f32.gmra.mxu0 %v5370
    %v5372 = vpop.f32.mrf.mxu0
    %v5373 = vadd.f32 %v5299, %v5372
    %v5374 = vpop.f32.mrf.mxu0
    %v5375 = vadd.f32 %v5301, %v5374
    %5376 = vdwg.mxu0
    %5377 = vmatprep.subr.mxu0 0.0
    %5378 = vmatpush1.msra.mxu0 0.0
    %5379 = vmatprep.subr.mxu0 0.0
    %5380 = vmatpush1.msra.mxu0 0.0
    %5381 = vmatprep.subr.mxu0 0.0
    %5382 = vmatpush1.msra.mxu0 0.0
    %5383 = vmatprep.subr.mxu0 0.0
    %5384 = vmatpush1.msra.mxu0 0.0
    %5385 = vmatprep.subr.mxu0 0.0
    %5386 = vmatpush1.msra.mxu0 0.0
    %5387 = vmatprep.subr.mxu0 0.0
    %5388 = vmatpush1.msra.mxu0 0.0
    %5389 = vmatprep.subr.mxu0 0.0
    %5390 = vmatpush1.msra.mxu0 0.0
    %5391 = vmatprep.subr.mxu0 0.0
    %5392 = vmatpush1.msra.mxu0 0.0
    %5393 = vmatprep.subr.mxu0 0.0
    %5394 = vmatpush1.msra.mxu0 0.0
    %5395 = vmatprep.subr.mxu0 0.0
    %5396 = vmatpush1.msra.mxu0 0.0
    %5397 = vmatprep.subr.mxu0 0.0
    %5398 = vmatpush1.msra.mxu0 0.0
    %5399 = vmatprep.subr.mxu0 0.0
    %5400 = vmatpush1.msra.mxu0 0.0
    %5401 = vmatprep.subr.mxu0 0.0
    %5402 = vmatpush1.msra.mxu0 0.0
    %5403 = vmatprep.subr.mxu0 0.0
    %5404 = vmatpush1.msra.mxu0 0.0
    %5405 = vmatprep.subr.mxu0 0.0
    %5406 = vmatpush1.msra.mxu0 0.0
    %v5407 = vand.u32 %v4906, 4294901760
    %5408 = vmatprep.subr.mxu0 %v5407
    %v5409 = vand.u32 %v4905, 4294901760
    %5410 = vmatpush1.msra.mxu0 %v5409
    %5411 = vmatprep.subr.mxu0 0.0
    %5412 = vmatpush2.msra.mxu0 0.0
    %5413 = vmatprep.subr.mxu0 0.0
    %5414 = vmatpush2.msra.mxu0 0.0
    %5415 = vmatprep.subr.mxu0 0.0
    %5416 = vmatpush2.msra.mxu0 0.0
    %5417 = vmatprep.subr.mxu0 0.0
    %5418 = vmatpush2.msra.mxu0 0.0
    %5419 = vmatprep.subr.mxu0 0.0
    %5420 = vmatpush2.msra.mxu0 0.0
    %5421 = vmatprep.subr.mxu0 0.0
    %5422 = vmatpush2.msra.mxu0 0.0
    %5423 = vmatprep.subr.mxu0 0.0
    %5424 = vmatpush2.msra.mxu0 0.0
    %5425 = vmatprep.subr.mxu0 0.0
    %5426 = vmatpush2.msra.mxu0 0.0
    %5427 = vmatprep.subr.mxu0 0.0
    %5428 = vmatpush2.msra.mxu0 0.0
    %5429 = vmatprep.subr.mxu0 0.0
    %5430 = vmatpush2.msra.mxu0 0.0
    %5431 = vmatprep.subr.mxu0 0.0
    %5432 = vmatpush2.msra.mxu0 0.0
    %5433 = vmatprep.subr.mxu0 0.0
    %5434 = vmatpush2.msra.mxu0 0.0
    %5435 = vmatprep.subr.mxu0 0.0
    %5436 = vmatpush2.msra.mxu0 0.0
    %5437 = vmatprep.subr.mxu0 0.0
    %5438 = vmatpush2.msra.mxu0 0.0
    %5439 = vmatprep.subr.mxu0 0.0
    %5440 = vmatpush2.msra.mxu0 0.0
    %5441 = vmatprep.subr.mxu0 0.0
    %5442 = vmatpush2.msra.mxu0 0.0
    %5443 = vmatprep.mubr.f32.mxu0 0.0
    %v5444 = vand.u32 %v4910, 4294901760
    %v5445 = vsub.f32 %v4910, %v5444
    %v5446 = vand.u32 %v5445, 4294901760
    %v5447 = vsub.f32 %v5445, %v5446
    %v5448 = vand.u32 %v5447, 4294901760
    %5449 = vmatmul.mubr.f32.gmra.mxu0 %v5448
    %v5450 = vpop.f32.mrf.mxu0
    %v5451 = vadd.f32 0.0, %v5450
    %v5452 = vpop.f32.mrf.mxu0
    %v5453 = vadd.f32 0.0, %v5452
    %5454 = vdwg.mxu0
    %5455 = vmatprep.subr.mxu0 0.0
    %5456 = vmatpush1.msra.mxu0 0.0
    %5457 = vmatprep.subr.mxu0 0.0
    %5458 = vmatpush1.msra.mxu0 0.0
    %5459 = vmatprep.subr.mxu0 0.0
    %5460 = vmatpush1.msra.mxu0 0.0
    %5461 = vmatprep.subr.mxu0 0.0
    %5462 = vmatpush1.msra.mxu0 0.0
    %5463 = vmatprep.subr.mxu0 0.0
    %5464 = vmatpush1.msra.mxu0 0.0
    %5465 = vmatprep.subr.mxu0 0.0
    %5466 = vmatpush1.msra.mxu0 0.0
    %5467 = vmatprep.subr.mxu0 0.0
    %5468 = vmatpush1.msra.mxu0 0.0
    %5469 = vmatprep.subr.mxu0 0.0
    %5470 = vmatpush1.msra.mxu0 0.0
    %5471 = vmatprep.subr.mxu0 0.0
    %5472 = vmatpush1.msra.mxu0 0.0
    %5473 = vmatprep.subr.mxu0 0.0
    %5474 = vmatpush1.msra.mxu0 0.0
    %5475 = vmatprep.subr.mxu0 0.0
    %5476 = vmatpush1.msra.mxu0 0.0
    %5477 = vmatprep.subr.mxu0 0.0
    %5478 = vmatpush1.msra.mxu0 0.0
    %5479 = vmatprep.subr.mxu0 0.0
    %5480 = vmatpush1.msra.mxu0 0.0
    %5481 = vmatprep.subr.mxu0 0.0
    %5482 = vmatpush1.msra.mxu0 0.0
    %5483 = vmatprep.subr.mxu0 0.0
    %5484 = vmatpush1.msra.mxu0 0.0
    %v5485 = vand.u32 %v4906, 4294901760
    %v5486 = vsub.f32 %v4906, %v5485
    %v5487 = vand.u32 %v5486, 4294901760
    %v5488 = vsub.f32 %v5486, %v5487
    %v5489 = vand.u32 %v5488, 4294901760
    %5490 = vmatprep.subr.mxu0 %v5489
    %v5491 = vand.u32 %v4905, 4294901760
    %v5492 = vsub.f32 %v4905, %v5491
    %v5493 = vand.u32 %v5492, 4294901760
    %v5494 = vsub.f32 %v5492, %v5493
    %v5495 = vand.u32 %v5494, 4294901760
    %5496 = vmatpush1.msra.mxu0 %v5495
    %5497 = vmatprep.subr.mxu0 0.0
    %5498 = vmatpush2.msra.mxu0 0.0
    %5499 = vmatprep.subr.mxu0 0.0
    %5500 = vmatpush2.msra.mxu0 0.0
    %5501 = vmatprep.subr.mxu0 0.0
    %5502 = vmatpush2.msra.mxu0 0.0
    %5503 = vmatprep.subr.mxu0 0.0
    %5504 = vmatpush2.msra.mxu0 0.0
    %5505 = vmatprep.subr.mxu0 0.0
    %5506 = vmatpush2.msra.mxu0 0.0
    %5507 = vmatprep.subr.mxu0 0.0
    %5508 = vmatpush2.msra.mxu0 0.0
    %5509 = vmatprep.subr.mxu0 0.0
    %5510 = vmatpush2.msra.mxu0 0.0
    %5511 = vmatprep.subr.mxu0 0.0
    %5512 = vmatpush2.msra.mxu0 0.0
    %5513 = vmatprep.subr.mxu0 0.0
    %5514 = vmatpush2.msra.mxu0 0.0
    %5515 = vmatprep.subr.mxu0 0.0
    %5516 = vmatpush2.msra.mxu0 0.0
    %5517 = vmatprep.subr.mxu0 0.0
    %5518 = vmatpush2.msra.mxu0 0.0
    %5519 = vmatprep.subr.mxu0 0.0
    %5520 = vmatpush2.msra.mxu0 0.0
    %5521 = vmatprep.subr.mxu0 0.0
    %5522 = vmatpush2.msra.mxu0 0.0
    %5523 = vmatprep.subr.mxu0 0.0
    %5524 = vmatpush2.msra.mxu0 0.0
    %5525 = vmatprep.subr.mxu0 0.0
    %5526 = vmatpush2.msra.mxu0 0.0
    %5527 = vmatprep.subr.mxu0 0.0
    %5528 = vmatpush2.msra.mxu0 0.0
    %5529 = vmatprep.mubr.f32.mxu0 0.0
    %v5530 = vand.u32 %v4910, 4294901760
    %5531 = vmatmul.mubr.f32.gmra.mxu0 %v5530
    %v5532 = vpop.f32.mrf.mxu0
    %v5533 = vadd.f32 %v5451, %v5532
    %v5534 = vpop.f32.mrf.mxu0
    %v5535 = vadd.f32 %v5453, %v5534
    %5536 = vdwg.mxu0
    %5537 = vmatprep.subr.mxu0 0.0
    %5538 = vmatpush1.msra.mxu0 0.0
    %5539 = vmatprep.subr.mxu0 0.0
    %5540 = vmatpush1.msra.mxu0 0.0
    %5541 = vmatprep.subr.mxu0 0.0
    %5542 = vmatpush1.msra.mxu0 0.0
    %5543 = vmatprep.subr.mxu0 0.0
    %5544 = vmatpush1.msra.mxu0 0.0
    %5545 = vmatprep.subr.mxu0 0.0
    %5546 = vmatpush1.msra.mxu0 0.0
    %5547 = vmatprep.subr.mxu0 0.0
    %5548 = vmatpush1.msra.mxu0 0.0
    %5549 = vmatprep.subr.mxu0 0.0
    %5550 = vmatpush1.msra.mxu0 0.0
    %5551 = vmatprep.subr.mxu0 0.0
    %5552 = vmatpush1.msra.mxu0 0.0
    %5553 = vmatprep.subr.mxu0 0.0
    %5554 = vmatpush1.msra.mxu0 0.0
    %5555 = vmatprep.subr.mxu0 0.0
    %5556 = vmatpush1.msra.mxu0 0.0
    %5557 = vmatprep.subr.mxu0 0.0
    %5558 = vmatpush1.msra.mxu0 0.0
    %5559 = vmatprep.subr.mxu0 0.0
    %5560 = vmatpush1.msra.mxu0 0.0
    %5561 = vmatprep.subr.mxu0 0.0
    %5562 = vmatpush1.msra.mxu0 0.0
    %5563 = vmatprep.subr.mxu0 0.0
    %5564 = vmatpush1.msra.mxu0 0.0
    %5565 = vmatprep.subr.mxu0 0.0
    %5566 = vmatpush1.msra.mxu0 0.0
    %v5567 = vand.u32 %v4906, 4294901760
    %v5568 = vsub.f32 %v4906, %v5567
    %5569 = vmatprep.subr.mxu0 %v5568
    %v5570 = vand.u32 %v4905, 4294901760
    %v5571 = vsub.f32 %v4905, %v5570
    %5572 = vmatpush1.msra.mxu0 %v5571
    %5573 = vmatprep.subr.mxu0 0.0
    %5574 = vmatpush2.msra.mxu0 0.0
    %5575 = vmatprep.subr.mxu0 0.0
    %5576 = vmatpush2.msra.mxu0 0.0
    %5577 = vmatprep.subr.mxu0 0.0
    %5578 = vmatpush2.msra.mxu0 0.0
    %5579 = vmatprep.subr.mxu0 0.0
    %5580 = vmatpush2.msra.mxu0 0.0
    %5581 = vmatprep.subr.mxu0 0.0
    %5582 = vmatpush2.msra.mxu0 0.0
    %5583 = vmatprep.subr.mxu0 0.0
    %5584 = vmatpush2.msra.mxu0 0.0
    %5585 = vmatprep.subr.mxu0 0.0
    %5586 = vmatpush2.msra.mxu0 0.0
    %5587 = vmatprep.subr.mxu0 0.0
    %5588 = vmatpush2.msra.mxu0 0.0
    %5589 = vmatprep.subr.mxu0 0.0
    %5590 = vmatpush2.msra.mxu0 0.0
    %5591 = vmatprep.subr.mxu0 0.0
    %5592 = vmatpush2.msra.mxu0 0.0
    %5593 = vmatprep.subr.mxu0 0.0
    %5594 = vmatpush2.msra.mxu0 0.0
    %5595 = vmatprep.subr.mxu0 0.0
    %5596 = vmatpush2.msra.mxu0 0.0
    %5597 = vmatprep.subr.mxu0 0.0
    %5598 = vmatpush2.msra.mxu0 0.0
    %5599 = vmatprep.subr.mxu0 0.0
    %5600 = vmatpush2.msra.mxu0 0.0
    %5601 = vmatprep.subr.mxu0 0.0
    %5602 = vmatpush2.msra.mxu0 0.0
    %5603 = vmatprep.subr.mxu0 0.0
    %5604 = vmatpush2.msra.mxu0 0.0
    %5605 = vmatprep.mubr.f32.mxu0 0.0
    %v5606 = vand.u32 %v4910, 4294901760
    %v5607 = vsub.f32 %v4910, %v5606
    %5608 = vmatmul.mubr.f32.gmra.mxu0 %v5607
    %v5609 = vpop.f32.mrf.mxu0
    %v5610 = vadd.f32 %v5533, %v5609
    %v5611 = vpop.f32.mrf.mxu0
    %v5612 = vadd.f32 %v5535, %v5611
    %5613 = vdwg.mxu0
    %5614 = vmatprep.subr.mxu0 0.0
    %5615 = vmatpush1.msra.mxu0 0.0
    %5616 = vmatprep.subr.mxu0 0.0
    %5617 = vmatpush1.msra.mxu0 0.0
    %5618 = vmatprep.subr.mxu0 0.0
    %5619 = vmatpush1.msra.mxu0 0.0
    %5620 = vmatprep.subr.mxu0 0.0
    %5621 = vmatpush1.msra.mxu0 0.0
    %5622 = vmatprep.subr.mxu0 0.0
    %5623 = vmatpush1.msra.mxu0 0.0
    %5624 = vmatprep.subr.mxu0 0.0
    %5625 = vmatpush1.msra.mxu0 0.0
    %5626 = vmatprep.subr.mxu0 0.0
    %5627 = vmatpush1.msra.mxu0 0.0
    %5628 = vmatprep.subr.mxu0 0.0
    %5629 = vmatpush1.msra.mxu0 0.0
    %5630 = vmatprep.subr.mxu0 0.0
    %5631 = vmatpush1.msra.mxu0 0.0
    %5632 = vmatprep.subr.mxu0 0.0
    %5633 = vmatpush1.msra.mxu0 0.0
    %5634 = vmatprep.subr.mxu0 0.0
    %5635 = vmatpush1.msra.mxu0 0.0
    %5636 = vmatprep.subr.mxu0 0.0
    %5637 = vmatpush1.msra.mxu0 0.0
    %5638 = vmatprep.subr.mxu0 0.0
    %5639 = vmatpush1.msra.mxu0 0.0
    %5640 = vmatprep.subr.mxu0 0.0
    %5641 = vmatpush1.msra.mxu0 0.0
    %5642 = vmatprep.subr.mxu0 0.0
    %5643 = vmatpush1.msra.mxu0 0.0
    %v5644 = vand.u32 %v4906, 4294901760
    %5645 = vmatprep.subr.mxu0 %v5644
    %v5646 = vand.u32 %v4905, 4294901760
    %5647 = vmatpush1.msra.mxu0 %v5646
    %5648 = vmatprep.subr.mxu0 0.0
    %5649 = vmatpush2.msra.mxu0 0.0
    %5650 = vmatprep.subr.mxu0 0.0
    %5651 = vmatpush2.msra.mxu0 0.0
    %5652 = vmatprep.subr.mxu0 0.0
    %5653 = vmatpush2.msra.mxu0 0.0
    %5654 = vmatprep.subr.mxu0 0.0
    %5655 = vmatpush2.msra.mxu0 0.0
    %5656 = vmatprep.subr.mxu0 0.0
    %5657 = vmatpush2.msra.mxu0 0.0
    %5658 = vmatprep.subr.mxu0 0.0
    %5659 = vmatpush2.msra.mxu0 0.0
    %5660 = vmatprep.subr.mxu0 0.0
    %5661 = vmatpush2.msra.mxu0 0.0
    %5662 = vmatprep.subr.mxu0 0.0
    %5663 = vmatpush2.msra.mxu0 0.0
    %5664 = vmatprep.subr.mxu0 0.0
    %5665 = vmatpush2.msra.mxu0 0.0
    %5666 = vmatprep.subr.mxu0 0.0
    %5667 = vmatpush2.msra.mxu0 0.0
    %5668 = vmatprep.subr.mxu0 0.0
    %5669 = vmatpush2.msra.mxu0 0.0
    %5670 = vmatprep.subr.mxu0 0.0
    %5671 = vmatpush2.msra.mxu0 0.0
    %5672 = vmatprep.subr.mxu0 0.0
    %5673 = vmatpush2.msra.mxu0 0.0
    %5674 = vmatprep.subr.mxu0 0.0
    %5675 = vmatpush2.msra.mxu0 0.0
    %5676 = vmatprep.subr.mxu0 0.0
    %5677 = vmatpush2.msra.mxu0 0.0
    %5678 = vmatprep.subr.mxu0 0.0
    %5679 = vmatpush2.msra.mxu0 0.0
    %5680 = vmatprep.mubr.f32.mxu0 0.0
    %v5681 = vand.u32 %v4910, 4294901760
    %v5682 = vsub.f32 %v4910, %v5681
    %v5683 = vand.u32 %v5682, 4294901760
    %5684 = vmatmul.mubr.f32.gmra.mxu0 %v5683
    %v5685 = vpop.f32.mrf.mxu0
    %v5686 = vadd.f32 %v5610, %v5685
    %v5687 = vpop.f32.mrf.mxu0
    %v5688 = vadd.f32 %v5612, %v5687
    %5689 = vdwg.mxu0
    %5690 = vmatprep.subr.mxu0 0.0
    %5691 = vmatpush1.msra.mxu0 0.0
    %5692 = vmatprep.subr.mxu0 0.0
    %5693 = vmatpush1.msra.mxu0 0.0
    %5694 = vmatprep.subr.mxu0 0.0
    %5695 = vmatpush1.msra.mxu0 0.0
    %5696 = vmatprep.subr.mxu0 0.0
    %5697 = vmatpush1.msra.mxu0 0.0
    %5698 = vmatprep.subr.mxu0 0.0
    %5699 = vmatpush1.msra.mxu0 0.0
    %5700 = vmatprep.subr.mxu0 0.0
    %5701 = vmatpush1.msra.mxu0 0.0
    %5702 = vmatprep.subr.mxu0 0.0
    %5703 = vmatpush1.msra.mxu0 0.0
    %5704 = vmatprep.subr.mxu0 0.0
    %5705 = vmatpush1.msra.mxu0 0.0
    %5706 = vmatprep.subr.mxu0 0.0
    %5707 = vmatpush1.msra.mxu0 0.0
    %5708 = vmatprep.subr.mxu0 0.0
    %5709 = vmatpush1.msra.mxu0 0.0
    %5710 = vmatprep.subr.mxu0 0.0
    %5711 = vmatpush1.msra.mxu0 0.0
    %5712 = vmatprep.subr.mxu0 0.0
    %5713 = vmatpush1.msra.mxu0 0.0
    %5714 = vmatprep.subr.mxu0 0.0
    %5715 = vmatpush1.msra.mxu0 0.0
    %5716 = vmatprep.subr.mxu0 0.0
    %5717 = vmatpush1.msra.mxu0 0.0
    %5718 = vmatprep.subr.mxu0 0.0
    %5719 = vmatpush1.msra.mxu0 0.0
    %v5720 = vand.u32 %v4906, 4294901760
    %v5721 = vsub.f32 %v4906, %v5720
    %v5722 = vand.u32 %v5721, 4294901760
    %5723 = vmatprep.subr.mxu0 %v5722
    %v5724 = vand.u32 %v4905, 4294901760
    %v5725 = vsub.f32 %v4905, %v5724
    %v5726 = vand.u32 %v5725, 4294901760
    %5727 = vmatpush1.msra.mxu0 %v5726
    %5728 = vmatprep.subr.mxu0 0.0
    %5729 = vmatpush2.msra.mxu0 0.0
    %5730 = vmatprep.subr.mxu0 0.0
    %5731 = vmatpush2.msra.mxu0 0.0
    %5732 = vmatprep.subr.mxu0 0.0
    %5733 = vmatpush2.msra.mxu0 0.0
    %5734 = vmatprep.subr.mxu0 0.0
    %5735 = vmatpush2.msra.mxu0 0.0
    %5736 = vmatprep.subr.mxu0 0.0
    %5737 = vmatpush2.msra.mxu0 0.0
    %5738 = vmatprep.subr.mxu0 0.0
    %5739 = vmatpush2.msra.mxu0 0.0
    %5740 = vmatprep.subr.mxu0 0.0
    %5741 = vmatpush2.msra.mxu0 0.0
    %5742 = vmatprep.subr.mxu0 0.0
    %5743 = vmatpush2.msra.mxu0 0.0
    %5744 = vmatprep.subr.mxu0 0.0
    %5745 = vmatpush2.msra.mxu0 0.0
    %5746 = vmatprep.subr.mxu0 0.0
    %5747 = vmatpush2.msra.mxu0 0.0
    %5748 = vmatprep.subr.mxu0 0.0
    %5749 = vmatpush2.msra.mxu0 0.0
    %5750 = vmatprep.subr.mxu0 0.0
    %5751 = vmatpush2.msra.mxu0 0.0
    %5752 = vmatprep.subr.mxu0 0.0
    %5753 = vmatpush2.msra.mxu0 0.0
    %5754 = vmatprep.subr.mxu0 0.0
    %5755 = vmatpush2.msra.mxu0 0.0
    %5756 = vmatprep.subr.mxu0 0.0
    %5757 = vmatpush2.msra.mxu0 0.0
    %5758 = vmatprep.subr.mxu0 0.0
    %5759 = vmatpush2.msra.mxu0 0.0
    %5760 = vmatprep.mubr.f32.mxu0 0.0
    %v5761 = vand.u32 %v4910, 4294901760
    %5762 = vmatmul.mubr.f32.gmra.mxu0 %v5761
    %v5763 = vpop.f32.mrf.mxu0
    %v5764 = vadd.f32 %v5686, %v5763
    %v5765 = vpop.f32.mrf.mxu0
    %v5766 = vadd.f32 %v5688, %v5765
    %5767 = vdwg.mxu0
    %5768 = vmatprep.subr.mxu0 0.0
    %5769 = vmatpush1.msra.mxu0 0.0
    %5770 = vmatprep.subr.mxu0 0.0
    %5771 = vmatpush1.msra.mxu0 0.0
    %5772 = vmatprep.subr.mxu0 0.0
    %5773 = vmatpush1.msra.mxu0 0.0
    %5774 = vmatprep.subr.mxu0 0.0
    %5775 = vmatpush1.msra.mxu0 0.0
    %5776 = vmatprep.subr.mxu0 0.0
    %5777 = vmatpush1.msra.mxu0 0.0
    %5778 = vmatprep.subr.mxu0 0.0
    %5779 = vmatpush1.msra.mxu0 0.0
    %5780 = vmatprep.subr.mxu0 0.0
    %5781 = vmatpush1.msra.mxu0 0.0
    %5782 = vmatprep.subr.mxu0 0.0
    %5783 = vmatpush1.msra.mxu0 0.0
    %5784 = vmatprep.subr.mxu0 0.0
    %5785 = vmatpush1.msra.mxu0 0.0
    %5786 = vmatprep.subr.mxu0 0.0
    %5787 = vmatpush1.msra.mxu0 0.0
    %5788 = vmatprep.subr.mxu0 0.0
    %5789 = vmatpush1.msra.mxu0 0.0
    %5790 = vmatprep.subr.mxu0 0.0
    %5791 = vmatpush1.msra.mxu0 0.0
    %5792 = vmatprep.subr.mxu0 0.0
    %5793 = vmatpush1.msra.mxu0 0.0
    %5794 = vmatprep.subr.mxu0 0.0
    %5795 = vmatpush1.msra.mxu0 0.0
    %5796 = vmatprep.subr.mxu0 0.0
    %5797 = vmatpush1.msra.mxu0 0.0
    %v5798 = vand.u32 %v4906, 4294901760
    %5799 = vmatprep.subr.mxu0 %v5798
    %v5800 = vand.u32 %v4905, 4294901760
    %5801 = vmatpush1.msra.mxu0 %v5800
    %5802 = vmatprep.subr.mxu0 0.0
    %5803 = vmatpush2.msra.mxu0 0.0
    %5804 = vmatprep.subr.mxu0 0.0
    %5805 = vmatpush2.msra.mxu0 0.0
    %5806 = vmatprep.subr.mxu0 0.0
    %5807 = vmatpush2.msra.mxu0 0.0
    %5808 = vmatprep.subr.mxu0 0.0
    %5809 = vmatpush2.msra.mxu0 0.0
    %5810 = vmatprep.subr.mxu0 0.0
    %5811 = vmatpush2.msra.mxu0 0.0
    %5812 = vmatprep.subr.mxu0 0.0
    %5813 = vmatpush2.msra.mxu0 0.0
    %5814 = vmatprep.subr.mxu0 0.0
    %5815 = vmatpush2.msra.mxu0 0.0
    %5816 = vmatprep.subr.mxu0 0.0
    %5817 = vmatpush2.msra.mxu0 0.0
    %5818 = vmatprep.subr.mxu0 0.0
    %5819 = vmatpush2.msra.mxu0 0.0
    %5820 = vmatprep.subr.mxu0 0.0
    %5821 = vmatpush2.msra.mxu0 0.0
    %5822 = vmatprep.subr.mxu0 0.0
    %5823 = vmatpush2.msra.mxu0 0.0
    %5824 = vmatprep.subr.mxu0 0.0
    %5825 = vmatpush2.msra.mxu0 0.0
    %5826 = vmatprep.subr.mxu0 0.0
    %5827 = vmatpush2.msra.mxu0 0.0
    %5828 = vmatprep.subr.mxu0 0.0
    %5829 = vmatpush2.msra.mxu0 0.0
    %5830 = vmatprep.subr.mxu0 0.0
    %5831 = vmatpush2.msra.mxu0 0.0
    %5832 = vmatprep.subr.mxu0 0.0
    %5833 = vmatpush2.msra.mxu0 0.0
    %5834 = vmatprep.mubr.f32.mxu0 0.0
    %v5835 = vand.u32 %v4910, 4294901760
    %5836 = vmatmul.mubr.f32.gmra.mxu0 %v5835
    %v5837 = vpop.f32.mrf.mxu0
    %v5838 = vadd.f32 %v5764, %v5837
    %v5839 = vpop.f32.mrf.mxu0
    %v5840 = vadd.f32 %v5766, %v5839
    %5841 = vdwg.mxu0
    %5842 = vmatprep.subr.mxu0 0.0
    %5843 = vmatpush1.msra.mxu0 0.0
    %5844 = vmatprep.subr.mxu0 0.0
    %5845 = vmatpush1.msra.mxu0 0.0
    %5846 = vmatprep.subr.mxu0 0.0
    %5847 = vmatpush1.msra.mxu0 0.0
    %5848 = vmatprep.subr.mxu0 0.0
    %5849 = vmatpush1.msra.mxu0 0.0
    %5850 = vmatprep.subr.mxu0 0.0
    %5851 = vmatpush1.msra.mxu0 0.0
    %5852 = vmatprep.subr.mxu0 0.0
    %5853 = vmatpush1.msra.mxu0 0.0
    %5854 = vmatprep.subr.mxu0 0.0
    %5855 = vmatpush1.msra.mxu0 0.0
    %5856 = vmatprep.subr.mxu0 0.0
    %5857 = vmatpush1.msra.mxu0 0.0
    %5858 = vmatprep.subr.mxu0 0.0
    %5859 = vmatpush1.msra.mxu0 0.0
    %5860 = vmatprep.subr.mxu0 0.0
    %5861 = vmatpush1.msra.mxu0 0.0
    %5862 = vmatprep.subr.mxu0 0.0
    %5863 = vmatpush1.msra.mxu0 0.0
    %5864 = vmatprep.subr.mxu0 0.0
    %5865 = vmatpush1.msra.mxu0 0.0
    %5866 = vmatprep.subr.mxu0 0.0
    %5867 = vmatpush1.msra.mxu0 0.0
    %5868 = vmatprep.subr.mxu0 0.0
    %5869 = vmatpush1.msra.mxu0 0.0
    %5870 = vmatprep.subr.mxu0 0.0
    %5871 = vmatpush1.msra.mxu0 0.0
    %5872 = vmatprep.subr.mxu0 0.0
    %v5873 = vand.u32 %v4907, 4294901760
    %5874 = vmatpush1.msra.mxu0 %v5873
    %5875 = vmatprep.subr.mxu0 0.0
    %5876 = vmatpush2.msra.mxu0 0.0
    %5877 = vmatprep.subr.mxu0 0.0
    %5878 = vmatpush2.msra.mxu0 0.0
    %5879 = vmatprep.subr.mxu0 0.0
    %5880 = vmatpush2.msra.mxu0 0.0
    %5881 = vmatprep.subr.mxu0 0.0
    %5882 = vmatpush2.msra.mxu0 0.0
    %5883 = vmatprep.subr.mxu0 0.0
    %5884 = vmatpush2.msra.mxu0 0.0
    %5885 = vmatprep.subr.mxu0 0.0
    %5886 = vmatpush2.msra.mxu0 0.0
    %5887 = vmatprep.subr.mxu0 0.0
    %5888 = vmatpush2.msra.mxu0 0.0
    %5889 = vmatprep.subr.mxu0 0.0
    %5890 = vmatpush2.msra.mxu0 0.0
    %5891 = vmatprep.subr.mxu0 0.0
    %5892 = vmatpush2.msra.mxu0 0.0
    %5893 = vmatprep.subr.mxu0 0.0
    %5894 = vmatpush2.msra.mxu0 0.0
    %5895 = vmatprep.subr.mxu0 0.0
    %5896 = vmatpush2.msra.mxu0 0.0
    %5897 = vmatprep.subr.mxu0 0.0
    %5898 = vmatpush2.msra.mxu0 0.0
    %5899 = vmatprep.subr.mxu0 0.0
    %5900 = vmatpush2.msra.mxu0 0.0
    %5901 = vmatprep.subr.mxu0 0.0
    %5902 = vmatpush2.msra.mxu0 0.0
    %5903 = vmatprep.subr.mxu0 0.0
    %5904 = vmatpush2.msra.mxu0 0.0
    %5905 = vmatprep.subr.mxu0 0.0
    %5906 = vmatpush2.msra.mxu0 0.0
    %5907 = vmatprep.mubr.f32.mxu0 0.0
    %v5908 = vand.u32 %v4910, 4294901760
    %v5909 = vsub.f32 %v4910, %v5908
    %v5910 = vand.u32 %v5909, 4294901760
    %v5911 = vsub.f32 %v5909, %v5910
    %v5912 = vand.u32 %v5911, 4294901760
    %5913 = vmatmul.mubr.f32.gmra.mxu0 %v5912
    %v5914 = vpop.f32.mrf.mxu0
    %v5915 = vadd.f32 0.0, %v5914
    %v5916 = vpop.f32.mrf.mxu0
    %5917 = vdwg.mxu0
    %5918 = vmatprep.subr.mxu0 0.0
    %5919 = vmatpush1.msra.mxu0 0.0
    %5920 = vmatprep.subr.mxu0 0.0
    %5921 = vmatpush1.msra.mxu0 0.0
    %5922 = vmatprep.subr.mxu0 0.0
    %5923 = vmatpush1.msra.mxu0 0.0
    %5924 = vmatprep.subr.mxu0 0.0
    %5925 = vmatpush1.msra.mxu0 0.0
    %5926 = vmatprep.subr.mxu0 0.0
    %5927 = vmatpush1.msra.mxu0 0.0
    %5928 = vmatprep.subr.mxu0 0.0
    %5929 = vmatpush1.msra.mxu0 0.0
    %5930 = vmatprep.subr.mxu0 0.0
    %5931 = vmatpush1.msra.mxu0 0.0
    %5932 = vmatprep.subr.mxu0 0.0
    %5933 = vmatpush1.msra.mxu0 0.0
    %5934 = vmatprep.subr.mxu0 0.0
    %5935 = vmatpush1.msra.mxu0 0.0
    %5936 = vmatprep.subr.mxu0 0.0
    %5937 = vmatpush1.msra.mxu0 0.0
    %5938 = vmatprep.subr.mxu0 0.0
    %5939 = vmatpush1.msra.mxu0 0.0
    %5940 = vmatprep.subr.mxu0 0.0
    %5941 = vmatpush1.msra.mxu0 0.0
    %5942 = vmatprep.subr.mxu0 0.0
    %5943 = vmatpush1.msra.mxu0 0.0
    %5944 = vmatprep.subr.mxu0 0.0
    %5945 = vmatpush1.msra.mxu0 0.0
    %5946 = vmatprep.subr.mxu0 0.0
    %5947 = vmatpush1.msra.mxu0 0.0
    %5948 = vmatprep.subr.mxu0 0.0
    %v5949 = vand.u32 %v4907, 4294901760
    %v5950 = vsub.f32 %v4907, %v5949
    %v5951 = vand.u32 %v5950, 4294901760
    %v5952 = vsub.f32 %v5950, %v5951
    %v5953 = vand.u32 %v5952, 4294901760
    %5954 = vmatpush1.msra.mxu0 %v5953
    %5955 = vmatprep.subr.mxu0 0.0
    %5956 = vmatpush2.msra.mxu0 0.0
    %5957 = vmatprep.subr.mxu0 0.0
    %5958 = vmatpush2.msra.mxu0 0.0
    %5959 = vmatprep.subr.mxu0 0.0
    %5960 = vmatpush2.msra.mxu0 0.0
    %5961 = vmatprep.subr.mxu0 0.0
    %5962 = vmatpush2.msra.mxu0 0.0
    %5963 = vmatprep.subr.mxu0 0.0
    %5964 = vmatpush2.msra.mxu0 0.0
    %5965 = vmatprep.subr.mxu0 0.0
    %5966 = vmatpush2.msra.mxu0 0.0
    %5967 = vmatprep.subr.mxu0 0.0
    %5968 = vmatpush2.msra.mxu0 0.0
    %5969 = vmatprep.subr.mxu0 0.0
    %5970 = vmatpush2.msra.mxu0 0.0
    %5971 = vmatprep.subr.mxu0 0.0
    %5972 = vmatpush2.msra.mxu0 0.0
    %5973 = vmatprep.subr.mxu0 0.0
    %5974 = vmatpush2.msra.mxu0 0.0
    %5975 = vmatprep.subr.mxu0 0.0
    %5976 = vmatpush2.msra.mxu0 0.0
    %5977 = vmatprep.subr.mxu0 0.0
    %5978 = vmatpush2.msra.mxu0 0.0
    %5979 = vmatprep.subr.mxu0 0.0
    %5980 = vmatpush2.msra.mxu0 0.0
    %5981 = vmatprep.subr.mxu0 0.0
    %5982 = vmatpush2.msra.mxu0 0.0
    %5983 = vmatprep.subr.mxu0 0.0
    %5984 = vmatpush2.msra.mxu0 0.0
    %5985 = vmatprep.subr.mxu0 0.0
    %5986 = vmatpush2.msra.mxu0 0.0
    %5987 = vmatprep.mubr.f32.mxu0 0.0
    %v5988 = vand.u32 %v4910, 4294901760
    %5989 = vmatmul.mubr.f32.gmra.mxu0 %v5988
    %v5990 = vpop.f32.mrf.mxu0
    %v5991 = vadd.f32 %v5915, %v5990
    %v5992 = vpop.f32.mrf.mxu0
    %5993 = vdwg.mxu0
    %5994 = vmatprep.subr.mxu0 0.0
    %5995 = vmatpush1.msra.mxu0 0.0
    %5996 = vmatprep.subr.mxu0 0.0
    %5997 = vmatpush1.msra.mxu0 0.0
    %5998 = vmatprep.subr.mxu0 0.0
    %5999 = vmatpush1.msra.mxu0 0.0
    %6000 = vmatprep.subr.mxu0 0.0
    %6001 = vmatpush1.msra.mxu0 0.0
    %6002 = vmatprep.subr.mxu0 0.0
    %6003 = vmatpush1.msra.mxu0 0.0
    %6004 = vmatprep.subr.mxu0 0.0
    %6005 = vmatpush1.msra.mxu0 0.0
    %6006 = vmatprep.subr.mxu0 0.0
    %6007 = vmatpush1.msra.mxu0 0.0
    %6008 = vmatprep.subr.mxu0 0.0
    %6009 = vmatpush1.msra.mxu0 0.0
    %6010 = vmatprep.subr.mxu0 0.0
    %6011 = vmatpush1.msra.mxu0 0.0
    %6012 = vmatprep.subr.mxu0 0.0
    %6013 = vmatpush1.msra.mxu0 0.0
    %6014 = vmatprep.subr.mxu0 0.0
    %6015 = vmatpush1.msra.mxu0 0.0
    %6016 = vmatprep.subr.mxu0 0.0
    %6017 = vmatpush1.msra.mxu0 0.0
    %6018 = vmatprep.subr.mxu0 0.0
    %6019 = vmatpush1.msra.mxu0 0.0
    %6020 = vmatprep.subr.mxu0 0.0
    %6021 = vmatpush1.msra.mxu0 0.0
    %6022 = vmatprep.subr.mxu0 0.0
    %6023 = vmatpush1.msra.mxu0 0.0
    %6024 = vmatprep.subr.mxu0 0.0
    %v6025 = vand.u32 %v4907, 4294901760
    %v6026 = vsub.f32 %v4907, %v6025
    %6027 = vmatpush1.msra.mxu0 %v6026
    %6028 = vmatprep.subr.mxu0 0.0
    %6029 = vmatpush2.msra.mxu0 0.0
    %6030 = vmatprep.subr.mxu0 0.0
    %6031 = vmatpush2.msra.mxu0 0.0
    %6032 = vmatprep.subr.mxu0 0.0
    %6033 = vmatpush2.msra.mxu0 0.0
    %6034 = vmatprep.subr.mxu0 0.0
    %6035 = vmatpush2.msra.mxu0 0.0
    %6036 = vmatprep.subr.mxu0 0.0
    %6037 = vmatpush2.msra.mxu0 0.0
    %6038 = vmatprep.subr.mxu0 0.0
    %6039 = vmatpush2.msra.mxu0 0.0
    %6040 = vmatprep.subr.mxu0 0.0
    %6041 = vmatpush2.msra.mxu0 0.0
    %6042 = vmatprep.subr.mxu0 0.0
    %6043 = vmatpush2.msra.mxu0 0.0
    %6044 = vmatprep.subr.mxu0 0.0
    %6045 = vmatpush2.msra.mxu0 0.0
    %6046 = vmatprep.subr.mxu0 0.0
    %6047 = vmatpush2.msra.mxu0 0.0
    %6048 = vmatprep.subr.mxu0 0.0
    %6049 = vmatpush2.msra.mxu0 0.0
    %6050 = vmatprep.subr.mxu0 0.0
    %6051 = vmatpush2.msra.mxu0 0.0
    %6052 = vmatprep.subr.mxu0 0.0
    %6053 = vmatpush2.msra.mxu0 0.0
    %6054 = vmatprep.subr.mxu0 0.0
    %6055 = vmatpush2.msra.mxu0 0.0
    %6056 = vmatprep.subr.mxu0 0.0
    %6057 = vmatpush2.msra.mxu0 0.0
    %6058 = vmatprep.subr.mxu0 0.0
    %6059 = vmatpush2.msra.mxu0 0.0
    %6060 = vmatprep.mubr.f32.mxu0 0.0
    %v6061 = vand.u32 %v4910, 4294901760
    %v6062 = vsub.f32 %v4910, %v6061
    %6063 = vmatmul.mubr.f32.gmra.mxu0 %v6062
    %v6064 = vpop.f32.mrf.mxu0
    %v6065 = vadd.f32 %v5991, %v6064
    %v6066 = vpop.f32.mrf.mxu0
    %6067 = vdwg.mxu0
    %6068 = vmatprep.subr.mxu0 0.0
    %6069 = vmatpush1.msra.mxu0 0.0
    %6070 = vmatprep.subr.mxu0 0.0
    %6071 = vmatpush1.msra.mxu0 0.0
    %6072 = vmatprep.subr.mxu0 0.0
    %6073 = vmatpush1.msra.mxu0 0.0
    %6074 = vmatprep.subr.mxu0 0.0
    %6075 = vmatpush1.msra.mxu0 0.0
    %6076 = vmatprep.subr.mxu0 0.0
    %6077 = vmatpush1.msra.mxu0 0.0
    %6078 = vmatprep.subr.mxu0 0.0
    %6079 = vmatpush1.msra.mxu0 0.0
    %6080 = vmatprep.subr.mxu0 0.0
    %6081 = vmatpush1.msra.mxu0 0.0
    %6082 = vmatprep.subr.mxu0 0.0
    %6083 = vmatpush1.msra.mxu0 0.0
    %6084 = vmatprep.subr.mxu0 0.0
    %6085 = vmatpush1.msra.mxu0 0.0
    %6086 = vmatprep.subr.mxu0 0.0
    %6087 = vmatpush1.msra.mxu0 0.0
    %6088 = vmatprep.subr.mxu0 0.0
    %6089 = vmatpush1.msra.mxu0 0.0
    %6090 = vmatprep.subr.mxu0 0.0
    %6091 = vmatpush1.msra.mxu0 0.0
    %6092 = vmatprep.subr.mxu0 0.0
    %6093 = vmatpush1.msra.mxu0 0.0
    %6094 = vmatprep.subr.mxu0 0.0
    %6095 = vmatpush1.msra.mxu0 0.0
    %6096 = vmatprep.subr.mxu0 0.0
    %6097 = vmatpush1.msra.mxu0 0.0
    %6098 = vmatprep.subr.mxu0 0.0
    %v6099 = vand.u32 %v4907, 4294901760
    %6100 = vmatpush1.msra.mxu0 %v6099
    %6101 = vmatprep.subr.mxu0 0.0
    %6102 = vmatpush2.msra.mxu0 0.0
    %6103 = vmatprep.subr.mxu0 0.0
    %6104 = vmatpush2.msra.mxu0 0.0
    %6105 = vmatprep.subr.mxu0 0.0
    %6106 = vmatpush2.msra.mxu0 0.0
    %6107 = vmatprep.subr.mxu0 0.0
    %6108 = vmatpush2.msra.mxu0 0.0
    %6109 = vmatprep.subr.mxu0 0.0
    %6110 = vmatpush2.msra.mxu0 0.0
    %6111 = vmatprep.subr.mxu0 0.0
    %6112 = vmatpush2.msra.mxu0 0.0
    %6113 = vmatprep.subr.mxu0 0.0
    %6114 = vmatpush2.msra.mxu0 0.0
    %6115 = vmatprep.subr.mxu0 0.0
    %6116 = vmatpush2.msra.mxu0 0.0
    %6117 = vmatprep.subr.mxu0 0.0
    %6118 = vmatpush2.msra.mxu0 0.0
    %6119 = vmatprep.subr.mxu0 0.0
    %6120 = vmatpush2.msra.mxu0 0.0
    %6121 = vmatprep.subr.mxu0 0.0
    %6122 = vmatpush2.msra.mxu0 0.0
    %6123 = vmatprep.subr.mxu0 0.0
    %6124 = vmatpush2.msra.mxu0 0.0
    %6125 = vmatprep.subr.mxu0 0.0
    %6126 = vmatpush2.msra.mxu0 0.0
    %6127 = vmatprep.subr.mxu0 0.0
    %6128 = vmatpush2.msra.mxu0 0.0
    %6129 = vmatprep.subr.mxu0 0.0
    %6130 = vmatpush2.msra.mxu0 0.0
    %6131 = vmatprep.subr.mxu0 0.0
    %6132 = vmatpush2.msra.mxu0 0.0
    %6133 = vmatprep.mubr.f32.mxu0 0.0
    %v6134 = vand.u32 %v4910, 4294901760
    %v6135 = vsub.f32 %v4910, %v6134
    %v6136 = vand.u32 %v6135, 4294901760
    %6137 = vmatmul.mubr.f32.gmra.mxu0 %v6136
    %v6138 = vpop.f32.mrf.mxu0
    %v6139 = vadd.f32 %v6065, %v6138
    %v6140 = vpop.f32.mrf.mxu0
    %6141 = vdwg.mxu0
    %6142 = vmatprep.subr.mxu0 0.0
    %6143 = vmatpush1.msra.mxu0 0.0
    %6144 = vmatprep.subr.mxu0 0.0
    %6145 = vmatpush1.msra.mxu0 0.0
    %6146 = vmatprep.subr.mxu0 0.0
    %6147 = vmatpush1.msra.mxu0 0.0
    %6148 = vmatprep.subr.mxu0 0.0
    %6149 = vmatpush1.msra.mxu0 0.0
    %6150 = vmatprep.subr.mxu0 0.0
    %6151 = vmatpush1.msra.mxu0 0.0
    %6152 = vmatprep.subr.mxu0 0.0
    %6153 = vmatpush1.msra.mxu0 0.0
    %6154 = vmatprep.subr.mxu0 0.0
    %6155 = vmatpush1.msra.mxu0 0.0
    %6156 = vmatprep.subr.mxu0 0.0
    %6157 = vmatpush1.msra.mxu0 0.0
    %6158 = vmatprep.subr.mxu0 0.0
    %6159 = vmatpush1.msra.mxu0 0.0
    %6160 = vmatprep.subr.mxu0 0.0
    %6161 = vmatpush1.msra.mxu0 0.0
    %6162 = vmatprep.subr.mxu0 0.0
    %6163 = vmatpush1.msra.mxu0 0.0
    %6164 = vmatprep.subr.mxu0 0.0
    %6165 = vmatpush1.msra.mxu0 0.0
    %6166 = vmatprep.subr.mxu0 0.0
    %6167 = vmatpush1.msra.mxu0 0.0
    %6168 = vmatprep.subr.mxu0 0.0
    %6169 = vmatpush1.msra.mxu0 0.0
    %6170 = vmatprep.subr.mxu0 0.0
    %6171 = vmatpush1.msra.mxu0 0.0
    %6172 = vmatprep.subr.mxu0 0.0
    %v6173 = vand.u32 %v4907, 4294901760
    %v6174 = vsub.f32 %v4907, %v6173
    %v6175 = vand.u32 %v6174, 4294901760
    %6176 = vmatpush1.msra.mxu0 %v6175
    %6177 = vmatprep.subr.mxu0 0.0
    %6178 = vmatpush2.msra.mxu0 0.0
    %6179 = vmatprep.subr.mxu0 0.0
    %6180 = vmatpush2.msra.mxu0 0.0
    %6181 = vmatprep.subr.mxu0 0.0
    %6182 = vmatpush2.msra.mxu0 0.0
    %6183 = vmatprep.subr.mxu0 0.0
    %6184 = vmatpush2.msra.mxu0 0.0
    %6185 = vmatprep.subr.mxu0 0.0
    %6186 = vmatpush2.msra.mxu0 0.0
    %6187 = vmatprep.subr.mxu0 0.0
    %6188 = vmatpush2.msra.mxu0 0.0
    %6189 = vmatprep.subr.mxu0 0.0
    %6190 = vmatpush2.msra.mxu0 0.0
    %6191 = vmatprep.subr.mxu0 0.0
    %6192 = vmatpush2.msra.mxu0 0.0
    %6193 = vmatprep.subr.mxu0 0.0
    %6194 = vmatpush2.msra.mxu0 0.0
    %6195 = vmatprep.subr.mxu0 0.0
    %6196 = vmatpush2.msra.mxu0 0.0
    %6197 = vmatprep.subr.mxu0 0.0
    %6198 = vmatpush2.msra.mxu0 0.0
    %6199 = vmatprep.subr.mxu0 0.0
    %6200 = vmatpush2.msra.mxu0 0.0
    %6201 = vmatprep.subr.mxu0 0.0
    %6202 = vmatpush2.msra.mxu0 0.0
    %6203 = vmatprep.subr.mxu0 0.0
    %6204 = vmatpush2.msra.mxu0 0.0
    %6205 = vmatprep.subr.mxu0 0.0
    %6206 = vmatpush2.msra.mxu0 0.0
    %6207 = vmatprep.subr.mxu0 0.0
    %6208 = vmatpush2.msra.mxu0 0.0
    %6209 = vmatprep.mubr.f32.mxu0 0.0
    %v6210 = vand.u32 %v4910, 4294901760
    %6211 = vmatmul.mubr.f32.gmra.mxu0 %v6210
    %v6212 = vpop.f32.mrf.mxu0
    %v6213 = vadd.f32 %v6139, %v6212
    %v6214 = vpop.f32.mrf.mxu0
    %6215 = vdwg.mxu0
    %6216 = vmatprep.subr.mxu0 0.0
    %6217 = vmatpush1.msra.mxu0 0.0
    %6218 = vmatprep.subr.mxu0 0.0
    %6219 = vmatpush1.msra.mxu0 0.0
    %6220 = vmatprep.subr.mxu0 0.0
    %6221 = vmatpush1.msra.mxu0 0.0
    %6222 = vmatprep.subr.mxu0 0.0
    %6223 = vmatpush1.msra.mxu0 0.0
    %6224 = vmatprep.subr.mxu0 0.0
    %6225 = vmatpush1.msra.mxu0 0.0
    %6226 = vmatprep.subr.mxu0 0.0
    %6227 = vmatpush1.msra.mxu0 0.0
    %6228 = vmatprep.subr.mxu0 0.0
    %6229 = vmatpush1.msra.mxu0 0.0
    %6230 = vmatprep.subr.mxu0 0.0
    %6231 = vmatpush1.msra.mxu0 0.0
    %6232 = vmatprep.subr.mxu0 0.0
    %6233 = vmatpush1.msra.mxu0 0.0
    %6234 = vmatprep.subr.mxu0 0.0
    %6235 = vmatpush1.msra.mxu0 0.0
    %6236 = vmatprep.subr.mxu0 0.0
    %6237 = vmatpush1.msra.mxu0 0.0
    %6238 = vmatprep.subr.mxu0 0.0
    %6239 = vmatpush1.msra.mxu0 0.0
    %6240 = vmatprep.subr.mxu0 0.0
    %6241 = vmatpush1.msra.mxu0 0.0
    %6242 = vmatprep.subr.mxu0 0.0
    %6243 = vmatpush1.msra.mxu0 0.0
    %6244 = vmatprep.subr.mxu0 0.0
    %6245 = vmatpush1.msra.mxu0 0.0
    %6246 = vmatprep.subr.mxu0 0.0
    %v6247 = vand.u32 %v4907, 4294901760
    %6248 = vmatpush1.msra.mxu0 %v6247
    %6249 = vmatprep.subr.mxu0 0.0
    %6250 = vmatpush2.msra.mxu0 0.0
    %6251 = vmatprep.subr.mxu0 0.0
    %6252 = vmatpush2.msra.mxu0 0.0
    %6253 = vmatprep.subr.mxu0 0.0
    %6254 = vmatpush2.msra.mxu0 0.0
    %6255 = vmatprep.subr.mxu0 0.0
    %6256 = vmatpush2.msra.mxu0 0.0
    %6257 = vmatprep.subr.mxu0 0.0
    %6258 = vmatpush2.msra.mxu0 0.0
    %6259 = vmatprep.subr.mxu0 0.0
    %6260 = vmatpush2.msra.mxu0 0.0
    %6261 = vmatprep.subr.mxu0 0.0
    %6262 = vmatpush2.msra.mxu0 0.0
    %6263 = vmatprep.subr.mxu0 0.0
    %6264 = vmatpush2.msra.mxu0 0.0
    %6265 = vmatprep.subr.mxu0 0.0
    %6266 = vmatpush2.msra.mxu0 0.0
    %6267 = vmatprep.subr.mxu0 0.0
    %6268 = vmatpush2.msra.mxu0 0.0
    %6269 = vmatprep.subr.mxu0 0.0
    %6270 = vmatpush2.msra.mxu0 0.0
    %6271 = vmatprep.subr.mxu0 0.0
    %6272 = vmatpush2.msra.mxu0 0.0
    %6273 = vmatprep.subr.mxu0 0.0
    %6274 = vmatpush2.msra.mxu0 0.0
    %6275 = vmatprep.subr.mxu0 0.0
    %6276 = vmatpush2.msra.mxu0 0.0
    %6277 = vmatprep.subr.mxu0 0.0
    %6278 = vmatpush2.msra.mxu0 0.0
    %6279 = vmatprep.subr.mxu0 0.0
    %6280 = vmatpush2.msra.mxu0 0.0
    %6281 = vmatprep.mubr.f32.mxu0 0.0
    %v6282 = vand.u32 %v4910, 4294901760
    %6283 = vmatmul.mubr.f32.gmra.mxu0 %v6282
    %v6284 = vpop.f32.mrf.mxu0
    %v6285 = vadd.f32 %v6213, %v6284
    %v6286 = vpop.f32.mrf.mxu0
    %6287 = vdwg.mxu0
    %v6288 = vsub.f32 %v22, %v23
    %v6290 = vlaneseq
    %v6291 = vshrl.u32 %v6290, 7
    %v6292 = vsub.s32 0, %v6291
    %v6293 = vrot.slane %v6288, %v6292
    %v6294 = vlaneseq
    %v6295 = vshrl.u32 %v6294, 7
    %v6296 = vsub.s32 1, %v6295
    %v6297 = vrot.slane %v6288, %v6296
    %v6298 = vlaneseq
    %v6299 = vshrl.u32 %v6298, 7
    %v6300 = vsub.s32 2, %v6299
    %v6301 = vrot.slane %v6288, %v6300
    %v6302 = vlaneseq
    %v6303 = vshrl.u32 %v6302, 7
    %v6304 = vsub.s32 3, %v6303
    %v6305 = vrot.slane %v6288, %v6304
    %v6306 = vlaneseq
    %v6307 = vshrl.u32 %v6306, 7
    %v6308 = vsub.s32 4, %v6307
    %v6309 = vrot.slane %v6288, %v6308
    %v6315 = vmul.f32 %v5373, %v6293
    %v6316 = vmul.f32 %v5375, %v6297
    %v6317 = vmul.f32 %v5838, %v6301
    %v6318 = vmul.f32 %v5840, %v6305
    %v6319 = vmul.f32 %v6285, %v6309
    %v6325 = vcombine.low %v6315, %v6316
    %v6326 = vcombine.low %v6317, %v6318
    %v6328 = vunpack.c.l.s4 1966171168
    %v6329 = vunpack.c.0.s8 %v6328
    %v6330 = vlaneseq
    %v6331 = vshrl.u32 %v6330, 7
    %v6332 = vsub.s32 %v6329, %v6331
    %v6333 = vrot.slane %v6325, %v6332
    %v6335 = vunpack.c.l.s4 1966171168
    %v6336 = vunpack.c.0.s8 %v6335
    %v6337 = vlaneseq
    %v6338 = vshrl.u32 %v6337, 7
    %v6339 = vsub.s32 %v6336, %v6338
    %v6340 = vrot.slane %v6326, %v6339
    %v6342 = vunpack.c.l.s4 1966171168
    %v6343 = vunpack.c.0.s8 %v6342
    %v6344 = vlaneseq
    %v6345 = vshrl.u32 %v6344, 7
    %v6346 = vsub.s32 %v6343, %v6345
    %v6347 = vrot.slane %v6319, %v6346
    %v6348 = vcombine.low %v6333, %v6340
    %v6350 = vunpack.c.l.s4 1966171168
    %v6351 = vunpack.c.0.s8 %v6350
    %v6352 = vlaneseq
    %v6353 = vshrl.u32 %v6352, 7
    %v6354 = vsub.s32 %v6351, %v6353
    %v6355 = vrot.slane %v6348, %v6354
    %v6357 = vunpack.c.l.s4 1966171168
    %v6358 = vunpack.c.0.s8 %v6357
    %v6359 = vlaneseq
    %v6360 = vshrl.u32 %v6359, 7
    %v6361 = vsub.s32 %v6358, %v6360
    %v6362 = vrot.slane %v6347, %v6361
    %v6363 = vcombine.low %v6355, %v6362
    %v6365 = vadd.f32 %v23, %v6363
    %v6366 = vlaneseq
    %vm6367 = vcmp.ge.s32.totalorder %v6366, 0
    %vm6368 = vcmp.lt.s32.totalorder %v6366, 640
    %vm6369 = vmand %vm6367, %vm6368
    %6370 = vst.msk [vmem:[#allocation3] sm:$0x1f] %vm6369, %v6365
    // Predicated region
    $region22: #{tpu_custom_call.1} parent=1 // pred_check
      _
    $region23: #{tpu_custom_call.1} parent=1 // pred_check_branch
      %6372 = sbr.rel (0) target = $region25
    $region24: #{tpu_custom_call.1} parent=1 // pred_region
      %s6374 = ssub.s32 80, 80
      %6375 = vsyncadd [#allocation4], %s6374
      %s6377 = sshll.u32 [#allocation3], 4
      %s6378 = int_to_ptr.vmem [resolvable:$true] %s6377
      %6380 = dma.vmem_to_hbm [thread:$0]  %s6378, 80, %s5, [#allocation4]
    $region25: #{tpu_custom_call.1} parent=1 // pred_fallthru
      _
    // Predicated region
    $region26: #{tpu_custom_call.1} parent=1 // pred_check
      _
    $region27: #{tpu_custom_call.1} parent=1 // pred_check_branch
      %6382 = sbr.rel (0) target = $region29
    $region28: #{tpu_custom_call.1} parent=1 // pred_region
      %6383 = dma.done [#allocation4], 80
    $region29: #{tpu_custom_call.1} parent=1 // pred_fallthru
      _
    %6384 = vsyncpa [#allocation4], 1

</llo_original>
